<compile_context>
chip_gen: v7x
topology: tpu7x:2x2x1
jax: 0.10.0
libtpu: 0.0.40
codegen_flags: <defaults>
</compile_context>

<pallas_src>
import functools

import jax
import jax.numpy as jnp
from jax import lax
from jax.experimental import pallas as pl
from jax.experimental.pallas import tpu as pltpu


# -----------------------------------------------------------------------------
# Pallas kernel
# -----------------------------------------------------------------------------
def deepsets_lstm_kernel(
    x_ref,         # (T, BT, Dp)      f32
    len_ref,       # (BT, Hp)         i32  (set lengths, broadcast over H)
    w_in_ref,      # (Dp, 8Hp)        [wih_fwd | wih_bwd], gate order [i,f,g,o]
    b_in_ref,      # (1, 8Hp)         (b_ih + b_hh folded, both directions)
    whh_f_ref,     # (Hp, 4Hp)
    whh_b_ref,     # (Hp, 4Hp)
    w1f_ref,       # (Hp, Hp)         rho Linear, rows for fwd half
    w1b_ref,       # (Hp, Hp)         rho Linear, rows for bwd half
    b1_ref,        # (1, Hp)
    bn_scale_ref,  # (1, Hp)          gamma * rsqrt(running_var + eps)
    bn_shift_ref,  # (1, Hp)          beta - running_mean * scale
    ln_g_ref,      # (1, Hp)
    ln_b_ref,      # (1, Hp)
    w2_ref,        # (Hp, 1)
    b2_ref,        # (1, 1)
    out_ref,       # (BT, 1)
    gf_ref,        # scratch (T, BT, 4Hp)  fwd input-gate preactivations
    gb_ref,        # scratch (T, BT, 4Hp)  bwd input-gate preactivations
    *,
    h_real,        # un-padded hidden_dim (for LayerNorm statistics)
):
    T, BT, Dp = x_ref.shape
    Hp = whh_f_ref.shape[0]
    G = 4 * Hp

    # --- 1. Hoisted input projection: one big MXU matmul for both directions,
    #        all timesteps, biases folded in.  Staged into VMEM scratch.
    x2d = x_ref[...].reshape(T * BT, Dp)
    gin = jnp.dot(x2d, w_in_ref[...], preferred_element_type=jnp.float32) + b_in_ref[...]
    gf_ref[...] = gin[:, :G].reshape(T, BT, G)
    gb_ref[...] = gin[:, G:].reshape(T, BT, G)

    len_bh = len_ref[...]                          # (BT, Hp) int32
    zeros = jnp.zeros((BT, Hp), jnp.float32)

    def cell(g_in, h, c, whh_ref):
        gates = g_in + jnp.dot(h, whh_ref[...], preferred_element_type=jnp.float32)
        i = jax.nn.sigmoid(gates[:, 0:Hp])
        f = jax.nn.sigmoid(gates[:, Hp:2 * Hp])
        g = jnp.tanh(gates[:, 2 * Hp:3 * Hp])
        o = jax.nn.sigmoid(gates[:, 3 * Hp:4 * Hp])
        c_new = f * c + i * g
        h_new = o * jnp.tanh(c_new)
        return h_new, c_new

    # --- 2. Fused fwd/bwd recurrence: step s runs t=s (fwd) and t=T-1-s (bwd).
    #        Fully unrolled so the LLO scheduler overlaps the two directions.
    def body(s, carry):
        hf, cf, af, hb, cb, ab = carry
        tb = T - 1 - s
        hf, cf = cell(gf_ref[s], hf, cf, whh_f_ref)
        hb, cb = cell(gb_ref[tb], hb, cb, whh_b_ref)
        # masked sum over the set dimension (valid iff t < length)
        af = af + jnp.where(s < len_bh, hf, 0.0)
        ab = ab + jnp.where(tb < len_bh, hb, 0.0)
        return hf, cf, af, hb, cb, ab

    _, _, acc_f, _, _, acc_b = lax.fori_loop(
        0, T, body, (zeros, zeros, zeros, zeros, zeros, zeros), unroll=True)

    # --- 3. rho Linear(2H->H) without concat, then ReLU.
    h1 = (jnp.dot(acc_f, w1f_ref[...], preferred_element_type=jnp.float32)
          + jnp.dot(acc_b, w1b_ref[...], preferred_element_type=jnp.float32)
          + b1_ref[...])
    h1 = jnp.maximum(h1, 0.0)

    # --- 4. BatchNorm1d (eval mode, folded scale/shift).
    bn = h1 * bn_scale_ref[...] + bn_shift_ref[...]

    # --- 5. LayerNorm over the REAL (un-padded) hidden features only.
    fmask = (lax.broadcasted_iota(jnp.int32, (1, Hp), 1) < h_real).astype(jnp.float32)
    inv_h = jnp.float32(1.0 / h_real)
    mu = jnp.sum(bn * fmask, axis=-1, keepdims=True) * inv_h
    cen = (bn - mu) * fmask
    var = jnp.sum(cen * cen, axis=-1, keepdims=True) * inv_h
    ln = cen * lax.rsqrt(var + jnp.float32(1e-5)) * ln_g_ref[...] + ln_b_ref[...]

    # --- 6. fc: Linear(H -> 1).  Dropout is identity in eval mode.
    # TODO(synk): training-mode BatchNorm (batch stats) and Dropout are not modeled.
    out_ref[...] = jnp.dot(ln, w2_ref[...], preferred_element_type=jnp.float32) + b2_ref[...]


# -----------------------------------------------------------------------------
# Wrapper: padding, weight folding, batch grid
# -----------------------------------------------------------------------------
def _round_up(n, m):
    return ((n + m - 1) // m) * m


def _pad_to(a, shape):
    return jnp.pad(a, [(0, s - d) for d, s in zip(a.shape, shape)])


def _pad_gate_cols(w, h, h_p):
    """Pad the last dim (4*h, PyTorch gate order [i,f,g,o]) per-gate to 4*h_p."""
    lead = w.shape[:-1]
    w4 = w.reshape(*lead, 4, h)
    w4 = jnp.pad(w4, [(0, 0)] * len(lead) + [(0, 0), (0, h_p - h)])
    return w4.reshape(*lead, 4 * h_p)


@jax.jit
def deepsets_lstm_forward(x_btd, mask_bt, params):
    """x_btd: (B, T, D) f32, mask_bt: (B, T) f32/bool. Returns (B, 1) logits."""
    x_btd = jnp.asarray(x_btd, jnp.float32)
    mask_bt = jnp.asarray(mask_bt, jnp.float32)
    B, T, D = x_btd.shape
    H = params["whh_f"].shape[0]

    LANE, SUB = 128, 8
    D_p = _round_up(D, LANE)
    H_p = _round_up(H, LANE)
    if B <= LANE:
        B_p = _round_up(B, SUB)
        B_tile = B_p
    else:
        B_tile = LANE
        B_p = _round_up(B, B_tile)
    n_b = B_p // B_tile

    # ---- activations ----
    x_tbd = jnp.transpose(x_btd, (1, 0, 2))                        # time-major
    x_tbd = jnp.pad(x_tbd, ((0, 0), (0, B_p - B), (0, D_p - D)))   # (T, B_p, D_p)

    # TODO(synk): the mask is reduced to per-row lengths (prefix mask), which is the
    # standard padded-set case; arbitrary "hole" masks are not represented.
    lengths = jnp.sum(mask_bt, axis=1).astype(jnp.int32)           # (B,)
    lengths = jnp.pad(lengths, (0, B_p - B))
    len_bh = jnp.broadcast_to(lengths[:, None], (B_p, H_p)).astype(jnp.int32)

    # ---- LSTM weights: per-gate padding, biases folded into input projection ----
    def pad_ih(w):  # (D, 4H) -> (D_p, 4H_p)
        return _pad_to(_pad_gate_cols(w, H, H_p), (D_p, 4 * H_p))

    def pad_hh(w):  # (H, 4H) -> (H_p, 4H_p)
        return _pad_to(_pad_gate_cols(w, H, H_p), (H_p, 4 * H_p))

    w_in = jnp.concatenate([pad_ih(params["wih_f"]), pad_ih(params["wih_b"])], axis=1)
    b_in = jnp.concatenate([_pad_gate_cols(params["b_f"], H, H_p),
                            _pad_gate_cols(params["b_b"], H, H_p)], axis=1)
    whh_f = pad_hh(params["whh_f"])
    whh_b = pad_hh(params["whh_b"])

    # ---- rho / head ----
    w1 = params["w1"]
    w1_f = _pad_to(w1[:H], (H_p, H_p))
    w1_b = _pad_to(w1[H:], (H_p, H_p))
    b1 = _pad_to(params["b1"], (1, H_p))

    eps = 1e-5
    bn_scale = params["bn_g"] * lax.rsqrt(params["bn_v"] + eps)
    bn_shift = params["bn_b"] - params["bn_m"] * bn_scale
    bn_scale = _pad_to(bn_scale, (1, H_p))
    bn_shift = _pad_to(bn_shift, (1, H_p))
    ln_g = _pad_to(params["ln_g"], (1, H_p))
    ln_b = _pad_to(params["ln_b"], (1, H_p))
    w2 = _pad_to(params["w2"], (H_p, 1))
    b2 = params["b2"]

    kernel = functools.partial(deepsets_lstm_kernel, h_real=H)

    def full(shape):
        return pl.BlockSpec(shape, lambda b, _n=len(shape): (0,) * _n)

    grid_spec = pltpu.PrefetchScalarGridSpec(
        num_scalar_prefetch=0,
        grid=(n_b,),
        in_specs=[
            pl.BlockSpec((T, B_tile, D_p), lambda b: (0, b, 0)),   # x
            pl.BlockSpec((B_tile, H_p), lambda b: (b, 0)),         # lengths
            full((D_p, 8 * H_p)),    # w_in
            full((1, 8 * H_p)),      # b_in
            full((H_p, 4 * H_p)),    # whh_f
            full((H_p, 4 * H_p)),    # whh_b
            full((H_p, H_p)),        # w1_f
            full((H_p, H_p)),        # w1_b
            full((1, H_p)),          # b1
            full((1, H_p)),          # bn_scale
            full((1, H_p)),          # bn_shift
            full((1, H_p)),          # ln_g
            full((1, H_p)),          # ln_b
            full((H_p, 1)),          # w2
            full((1, 1)),            # b2
        ],
        out_specs=pl.BlockSpec((B_tile, 1), lambda b: (b, 0)),
        scratch_shapes=[
            pltpu.VMEM((T, B_tile, 4 * H_p), jnp.float32),   # fwd input gates
            pltpu.VMEM((T, B_tile, 4 * H_p), jnp.float32),   # bwd input gates
        ],
    )

    out = pl.pallas_call(
        kernel,
        out_shape=jax.ShapeDtypeStruct((B_p, 1), jnp.float32),
        grid_spec=grid_spec,
        compiler_params=pltpu.CompilerParams(
            dimension_semantics=("parallel",),
        ),
    )(x_tbd, len_bh, w_in, b_in, whh_f, whh_b, w1_f, w1_b, b1,
      bn_scale, bn_shift, ln_g, ln_b, w2, b2)

    return out[:B]


# -----------------------------------------------------------------------------
# Pure-JAX reference (mirrors the PyTorch forward, eval mode)
# -----------------------------------------------------------------------------
def reference_forward(x_btd, mask_bt, params):
    B, T, D = x_btd.shape
    H = params["whh_f"].shape[0]

    def run_dir(wih, whh, b, reverse):
        xs = jnp.transpose(x_btd, (1, 0, 2))
        if reverse:
            xs = xs[::-1]

        def step(carry, xt):
            h, c = carry
            gates = xt @ wih + h @ whh + b
            i = jax.nn.sigmoid(gates[:, 0:H])
            f = jax.nn.sigmoid(gates[:, H:2 * H])
            g = jnp.tanh(gates[:, 2 * H:3 * H])
            o = jax.nn.sigmoid(gates[:, 3 * H:4 * H])
            c = f * c + i * g
            h = o * jnp.tanh(c)
            return (h, c), h

        init = (jnp.zeros((B, H), jnp.float32), jnp.zeros((B, H), jnp.float32))
        _, hs = lax.scan(step, init, xs)
        if reverse:
            hs = hs[::-1]
        return hs  # (T, B, H)

    hf = run_dir(params["wih_f"], params["whh_f"], params["b_f"], reverse=False)
    hb = run_dir(params["wih_b"], params["whh_b"], params["b_b"], reverse=True)
    lstm_out = jnp.concatenate([hf, hb], axis=-1)               # (T, B, 2H)
    lstm_out = lstm_out * jnp.transpose(mask_bt)[:, :, None]
    x_agg = jnp.sum(lstm_out, axis=0)                           # (B, 2H)

    h1 = jnp.maximum(x_agg @ params["w1"] + params["b1"], 0.0)
    eps = 1e-5
    bn = (h1 - params["bn_m"]) / jnp.sqrt(params["bn_v"] + eps) * params["bn_g"] + params["bn_b"]
    mu = jnp.mean(bn, axis=-1, keepdims=True)
    var = jnp.mean((bn - mu) ** 2, axis=-1, keepdims=True)
    ln = (bn - mu) / jnp.sqrt(var + eps) * params["ln_g"] + params["ln_b"]
    return ln @ params["w2"] + params["b2"]


# -----------------------------------------------------------------------------
# Main
# -----------------------------------------------------------------------------
if __name__ == "__main__":
    B, T, D, H = 4, 8, 16, 32  # batch, max_set_size, input_dim, hidden_dim

    key = jax.random.PRNGKey(0)
    keys = jax.random.split(key, 20)

    def init(k, shape, scale=0.1):
        return (scale * jax.random.normal(k, shape)).astype(jnp.float32)

    params = {
        # LSTM forward direction (b = b_ih + b_hh folded)
        "wih_f": init(keys[0], (D, 4 * H)),
        "whh_f": init(keys[1], (H, 4 * H)),
        "b_f":   init(keys[2], (1, 4 * H)),
        # LSTM reverse direction
        "wih_b": init(keys[3], (D, 4 * H)),
        "whh_b": init(keys[4], (H, 4 * H)),
        "b_b":   init(keys[5], (1, 4 * H)),
        # rho: Linear(2H -> H)
        "w1": init(keys[6], (2 * H, H)),
        "b1": init(keys[7], (1, H)),
        # BatchNorm1d (eval): gamma, beta, running_mean, running_var (>0)
        "bn_g": 1.0 + init(keys[8], (1, H)),
        "bn_b": init(keys[9], (1, H)),
        "bn_m": init(keys[10], (1, H)),
        "bn_v": 0.5 + jnp.abs(init(keys[11], (1, H))),
        # LayerNorm
        "ln_g": 1.0 + init(keys[12], (1, H)),
        "ln_b": init(keys[13], (1, H)),
        # fc: Linear(H -> 1)
        "w2": init(keys[14], (H, 1)),
        "b2": init(keys[15], (1, 1)),
    }

    x = jax.random.normal(keys[16], (B, T, D), dtype=jnp.float32)
    lengths = jnp.array([8, 5, 3, 1], dtype=jnp.int32)
    mask = (jnp.arange(T)[None, :] < lengths[:, None]).astype(jnp.float32)  # (B, T)

    out = deepsets_lstm_forward(x, mask, params)
    out = jax.block_until_ready(out)

    ref = reference_forward(x, mask, params)
    assert out.shape == (B, 1), out.shape
    assert jnp.allclose(out, ref, atol=1e-4, rtol=1e-4), (out, ref)

    print("KERNEL_OK")
</pallas_src>

<mosaic_0001>
module attributes {stable_mosaic.version = 11 : i64} {
  func.func @deepsets_lstm_kernel(%arg0: i32, %arg1: memref<8x8x128xf32, #tpu.memory_space<vmem>>, %arg2: memref<8x128xi32, #tpu.memory_space<vmem>>, %arg3: memref<128x1024xf32, #tpu.memory_space<vmem>>, %arg4: memref<1x1024xf32, #tpu.memory_space<vmem>>, %arg5: memref<128x512xf32, #tpu.memory_space<vmem>>, %arg6: memref<128x512xf32, #tpu.memory_space<vmem>>, %arg7: memref<128x128xf32, #tpu.memory_space<vmem>>, %arg8: memref<128x128xf32, #tpu.memory_space<vmem>>, %arg9: memref<1x128xf32, #tpu.memory_space<vmem>>, %arg10: memref<1x128xf32, #tpu.memory_space<vmem>>, %arg11: memref<1x128xf32, #tpu.memory_space<vmem>>, %arg12: memref<1x128xf32, #tpu.memory_space<vmem>>, %arg13: memref<1x128xf32, #tpu.memory_space<vmem>>, %arg14: memref<128x1xf32, #tpu.memory_space<vmem>>, %arg15: memref<1x1xf32, #tpu.memory_space<vmem>>, %arg16: memref<8x1xf32, #tpu.memory_space<vmem>>, %arg17: memref<8x8x512xf32, #tpu.memory_space<vmem>>, %arg18: memref<8x8x512xf32, #tpu.memory_space<vmem>>) attributes {dimension_semantics = [#tpu.dimension_semantics<parallel>], iteration_bounds = array<i64: 1>, scalar_prefetch = 0 : i64, scratch_operands = 2 : i64, tpu.core_type = #tpu.core_type<tc>, window_params = [{transform_indices = @transform_0, window_bounds = array<i64: 8, 8, 128>}, {transform_indices = @transform_1, window_bounds = array<i64: 8, 128>}, {pipeline_mode = #tpu.pipeline_mode<synchronous>, transform_indices = @transform_2, window_bounds = array<i64: 128, 1024>}, {pipeline_mode = #tpu.pipeline_mode<synchronous>, transform_indices = @transform_3, window_bounds = array<i64: 1, 1024>}, {pipeline_mode = #tpu.pipeline_mode<synchronous>, transform_indices = @transform_4, window_bounds = array<i64: 128, 512>}, {pipeline_mode = #tpu.pipeline_mode<synchronous>, transform_indices = @transform_5, window_bounds = array<i64: 128, 512>}, {pipeline_mode = #tpu.pipeline_mode<synchronous>, transform_indices = @transform_6, window_bounds = array<i64: 128, 128>}, {pipeline_mode = #tpu.pipeline_mode<synchronous>, transform_indices = @transform_7, window_bounds = array<i64: 128, 128>}, {pipeline_mode = #tpu.pipeline_mode<synchronous>, transform_indices = @transform_8, window_bounds = array<i64: 1, 128>}, {pipeline_mode = #tpu.pipeline_mode<synchronous>, transform_indices = @transform_9, window_bounds = array<i64: 1, 128>}, {pipeline_mode = #tpu.pipeline_mode<synchronous>, transform_indices = @transform_10, window_bounds = array<i64: 1, 128>}, {pipeline_mode = #tpu.pipeline_mode<synchronous>, transform_indices = @transform_11, window_bounds = array<i64: 1, 128>}, {pipeline_mode = #tpu.pipeline_mode<synchronous>, transform_indices = @transform_12, window_bounds = array<i64: 1, 128>}, {pipeline_mode = #tpu.pipeline_mode<synchronous>, transform_indices = @transform_13, window_bounds = array<i64: 128, 1>}, {pipeline_mode = #tpu.pipeline_mode<synchronous>, transform_indices = @transform_14, window_bounds = array<i64: 1, 1>}, {transform_indices = @transform_15, window_bounds = array<i64: 8, 1>}]} {
    %c0 = arith.constant 0 : index
    %c0_0 = arith.constant 0 : index
    %c0_1 = arith.constant 0 : index
    %0 = vector.load %arg1[%c0, %c0_0, %c0_1] : memref<8x8x128xf32, #tpu.memory_space<vmem>>, vector<8x8x128xf32>
    %1 = vector.shape_cast %0 : vector<8x8x128xf32> to vector<64x128xf32>
    %c0_2 = arith.constant 0 : index
    %c0_3 = arith.constant 0 : index
    %2 = vector.load %arg3[%c0_2, %c0_3] : memref<128x1024xf32, #tpu.memory_space<vmem>>, vector<128x1024xf32>
    %cst = arith.constant dense<0.000000e+00> : vector<64x1024xf32>
    %3 = tpu.matmul %1, %2, %cst {dimension_numbers = #tpu.dot_dimension_numbers<[1], [0], [0], [1], [0, 0, 1, 1], [], []>} : vector<64x128xf32>, vector<128x1024xf32>, vector<64x1024xf32> -> vector<64x1024xf32>
    %c0_4 = arith.constant 0 : index
    %c0_5 = arith.constant 0 : index
    %4 = vector.load %arg4[%c0_4, %c0_5] : memref<1x1024xf32, #tpu.memory_space<vmem>>, vector<1x1024xf32>
    %5 = vector.broadcast %4 : vector<1x1024xf32> to vector<64x1024xf32>
    %6 = arith.addf %3, %5 : vector<64x1024xf32>
    %7 = vector.extract_strided_slice %6 {offsets = [0, 0], sizes = [64, 512], strides = [1, 1]} : vector<64x1024xf32> to vector<64x512xf32>
    %8 = vector.shape_cast %7 : vector<64x512xf32> to vector<8x8x512xf32>
    %c0_6 = arith.constant 0 : index
    %c0_7 = arith.constant 0 : index
    %c0_8 = arith.constant 0 : index
    %9 = vector.load %arg17[%c0_6, %c0_7, %c0_8] : memref<8x8x512xf32, #tpu.memory_space<vmem>>, vector<8x8x512xf32>
    tpu.vector_store %arg17[%c0_6, %c0_7, %c0_8], %8 {strides = array<i32>} : memref<8x8x512xf32, #tpu.memory_space<vmem>>, vector<8x8x512xf32>,
    %10 = vector.extract_strided_slice %6 {offsets = [0, 512], sizes = [64, 512], strides = [1, 1]} : vector<64x1024xf32> to vector<64x512xf32>
    %11 = vector.shape_cast %10 : vector<64x512xf32> to vector<8x8x512xf32>
    %c0_9 = arith.constant 0 : index
    %c0_10 = arith.constant 0 : index
    %c0_11 = arith.constant 0 : index
    %12 = vector.load %arg18[%c0_9, %c0_10, %c0_11] : memref<8x8x512xf32, #tpu.memory_space<vmem>>, vector<8x8x512xf32>
    tpu.vector_store %arg18[%c0_9, %c0_10, %c0_11], %11 {strides = array<i32>} : memref<8x8x512xf32, #tpu.memory_space<vmem>>, vector<8x8x512xf32>,
    %c0_12 = arith.constant 0 : index
    %c0_13 = arith.constant 0 : index
    %13 = vector.load %arg2[%c0_12, %c0_13] : memref<8x128xi32, #tpu.memory_space<vmem>>, vector<8x128xi32>
    %cst_14 = arith.constant 0.000000e+00 : f32
    %14 = vector.broadcast %cst_14 : f32 to vector<8x128xf32>
    %c0_i32 = arith.constant 0 : i32
    %c7_i32 = arith.constant 7 : i32
    %15 = arith.subi %c7_i32, %c0_i32 : i32
    %16 = arith.index_cast %c0_i32 : i32 to index
    %c0_15 = arith.constant 0 : index
    %c0_16 = arith.constant 0 : index
    %17 = vector.load %arg17[%16, %c0_15, %c0_16] : memref<8x8x512xf32, #tpu.memory_space<vmem>>, vector<1x8x512xf32>
    %18 = vector.shape_cast %17 : vector<1x8x512xf32> to vector<8x512xf32>
    %c0_17 = arith.constant 0 : index
    %c0_18 = arith.constant 0 : index
    %19 = vector.load %arg5[%c0_17, %c0_18] : memref<128x512xf32, #tpu.memory_space<vmem>>, vector<128x512xf32>
    %cst_19 = arith.constant dense<0.000000e+00> : vector<8x512xf32>
    %20 = tpu.matmul %14, %19, %cst_19 {dimension_numbers = #tpu.dot_dimension_numbers<[1], [0], [0], [1], [0, 0, 1, 1], [], []>} : vector<8x128xf32>, vector<128x512xf32>, vector<8x512xf32> -> vector<8x512xf32>
    %21 = arith.addf %18, %20 : vector<8x512xf32>
    %22 = vector.extract_strided_slice %21 {offsets = [0, 0], sizes = [8, 128], strides = [1, 1]} : vector<8x512xf32> to vector<8x128xf32>
    %23 = arith.negf %22 : vector<8x128xf32>
    %24 = math.exp %23 : vector<8x128xf32>
    %cst_20 = arith.constant 1.000000e+00 : f32
    %25 = vector.broadcast %cst_20 : f32 to vector<8x128xf32>
    %26 = arith.addf %25, %24 : vector<8x128xf32>
    %27 = arith.divf %25, %26 : vector<8x128xf32>
    %28 = vector.extract_strided_slice %21 {offsets = [0, 128], sizes = [8, 128], strides = [1, 1]} : vector<8x512xf32> to vector<8x128xf32>
    %29 = arith.negf %28 : vector<8x128xf32>
    %30 = math.exp %29 : vector<8x128xf32>
    %cst_21 = arith.constant 1.000000e+00 : f32
    %31 = vector.broadcast %cst_21 : f32 to vector<8x128xf32>
    %32 = arith.addf %31, %30 : vector<8x128xf32>
    %33 = arith.divf %31, %32 : vector<8x128xf32>
    %34 = vector.extract_strided_slice %21 {offsets = [0, 256], sizes = [8, 128], strides = [1, 1]} : vector<8x512xf32> to vector<8x128xf32>
    %35 = math.tanh %34 : vector<8x128xf32>
    %36 = vector.extract_strided_slice %21 {offsets = [0, 384], sizes = [8, 128], strides = [1, 1]} : vector<8x512xf32> to vector<8x128xf32>
    %37 = arith.negf %36 : vector<8x128xf32>
    %38 = math.exp %37 : vector<8x128xf32>
    %cst_22 = arith.constant 1.000000e+00 : f32
    %39 = vector.broadcast %cst_22 : f32 to vector<8x128xf32>
    %40 = arith.addf %39, %38 : vector<8x128xf32>
    %41 = arith.divf %39, %40 : vector<8x128xf32>
    %42 = arith.mulf %33, %14 : vector<8x128xf32>
    %43 = arith.mulf %27, %35 : vector<8x128xf32>
    %44 = arith.addf %42, %43 : vector<8x128xf32>
    %45 = math.tanh %44 : vector<8x128xf32>
    %46 = arith.mulf %41, %45 : vector<8x128xf32>
    %47 = arith.index_cast %15 : i32 to index
    %c0_23 = arith.constant 0 : index
    %c0_24 = arith.constant 0 : index
    %48 = vector.load %arg18[%47, %c0_23, %c0_24] : memref<8x8x512xf32, #tpu.memory_space<vmem>>, vector<1x8x512xf32>
    %49 = vector.shape_cast %48 : vector<1x8x512xf32> to vector<8x512xf32>
    %c0_25 = arith.constant 0 : index
    %c0_26 = arith.constant 0 : index
    %50 = vector.load %arg6[%c0_25, %c0_26] : memref<128x512xf32, #tpu.memory_space<vmem>>, vector<128x512xf32>
    %cst_27 = arith.constant dense<0.000000e+00> : vector<8x512xf32>
    %51 = tpu.matmul %14, %50, %cst_27 {dimension_numbers = #tpu.dot_dimension_numbers<[1], [0], [0], [1], [0, 0, 1, 1], [], []>} : vector<8x128xf32>, vector<128x512xf32>, vector<8x512xf32> -> vector<8x512xf32>
    %52 = arith.addf %49, %51 : vector<8x512xf32>
    %53 = vector.extract_strided_slice %52 {offsets = [0, 0], sizes = [8, 128], strides = [1, 1]} : vector<8x512xf32> to vector<8x128xf32>
    %54 = arith.negf %53 : vector<8x128xf32>
    %55 = math.exp %54 : vector<8x128xf32>
    %cst_28 = arith.constant 1.000000e+00 : f32
    %56 = vector.broadcast %cst_28 : f32 to vector<8x128xf32>
    %57 = arith.addf %56, %55 : vector<8x128xf32>
    %58 = arith.divf %56, %57 : vector<8x128xf32>
    %59 = vector.extract_strided_slice %52 {offsets = [0, 128], sizes = [8, 128], strides = [1, 1]} : vector<8x512xf32> to vector<8x128xf32>
    %60 = arith.negf %59 : vector<8x128xf32>
    %61 = math.exp %60 : vector<8x128xf32>
    %cst_29 = arith.constant 1.000000e+00 : f32
    %62 = vector.broadcast %cst_29 : f32 to vector<8x128xf32>
    %63 = arith.addf %62, %61 : vector<8x128xf32>
    %64 = arith.divf %62, %63 : vector<8x128xf32>
    %65 = vector.extract_strided_slice %52 {offsets = [0, 256], sizes = [8, 128], strides = [1, 1]} : vector<8x512xf32> to vector<8x128xf32>
    %66 = math.tanh %65 : vector<8x128xf32>
    %67 = vector.extract_strided_slice %52 {offsets = [0, 384], sizes = [8, 128], strides = [1, 1]} : vector<8x512xf32> to vector<8x128xf32>
    %68 = arith.negf %67 : vector<8x128xf32>
    %69 = math.exp %68 : vector<8x128xf32>
    %cst_30 = arith.constant 1.000000e+00 : f32
    %70 = vector.broadcast %cst_30 : f32 to vector<8x128xf32>
    %71 = arith.addf %70, %69 : vector<8x128xf32>
    %72 = arith.divf %70, %71 : vector<8x128xf32>
    %73 = arith.mulf %64, %14 : vector<8x128xf32>
    %74 = arith.mulf %58, %66 : vector<8x128xf32>
    %75 = arith.addf %73, %74 : vector<8x128xf32>
    %76 = math.tanh %75 : vector<8x128xf32>
    %77 = arith.mulf %72, %76 : vector<8x128xf32>
    %78 = vector.broadcast %c0_i32 : i32 to vector<8x128xi32>
    %79 = arith.cmpi slt, %78, %13 : vector<8x128xi32>
    %cst_31 = arith.constant 0.000000e+00 : f32
    %80 = vector.broadcast %cst_31 : f32 to vector<8x128xf32>
    %81 = arith.select %79, %46, %80 : vector<8x128xi1>, vector<8x128xf32>
    %82 = arith.addf %14, %81 : vector<8x128xf32>
    %83 = vector.broadcast %15 : i32 to vector<8x128xi32>
    %84 = arith.cmpi slt, %83, %13 : vector<8x128xi32>
    %cst_32 = arith.constant 0.000000e+00 : f32
    %85 = vector.broadcast %cst_32 : f32 to vector<8x128xf32>
    %86 = arith.select %84, %77, %85 : vector<8x128xi1>, vector<8x128xf32>
    %87 = arith.addf %14, %86 : vector<8x128xf32>
    %c1_i32 = arith.constant 1 : i32
    %c7_i32_33 = arith.constant 7 : i32
    %88 = arith.subi %c7_i32_33, %c1_i32 : i32
    %89 = arith.index_cast %c1_i32 : i32 to index
    %c0_34 = arith.constant 0 : index
    %c0_35 = arith.constant 0 : index
    %90 = vector.load %arg17[%89, %c0_34, %c0_35] : memref<8x8x512xf32, #tpu.memory_space<vmem>>, vector<1x8x512xf32>
    %91 = vector.shape_cast %90 : vector<1x8x512xf32> to vector<8x512xf32>
    %c0_36 = arith.constant 0 : index
    %c0_37 = arith.constant 0 : index
    %92 = vector.load %arg5[%c0_36, %c0_37] : memref<128x512xf32, #tpu.memory_space<vmem>>, vector<128x512xf32>
    %cst_38 = arith.constant dense<0.000000e+00> : vector<8x512xf32>
    %93 = tpu.matmul %46, %92, %cst_38 {dimension_numbers = #tpu.dot_dimension_numbers<[1], [0], [0], [1], [0, 0, 1, 1], [], []>} : vector<8x128xf32>, vector<128x512xf32>, vector<8x512xf32> -> vector<8x512xf32>
    %94 = arith.addf %91, %93 : vector<8x512xf32>
    %95 = vector.extract_strided_slice %94 {offsets = [0, 0], sizes = [8, 128], strides = [1, 1]} : vector<8x512xf32> to vector<8x128xf32>
    %96 = arith.negf %95 : vector<8x128xf32>
    %97 = math.exp %96 : vector<8x128xf32>
    %cst_39 = arith.constant 1.000000e+00 : f32
    %98 = vector.broadcast %cst_39 : f32 to vector<8x128xf32>
    %99 = arith.addf %98, %97 : vector<8x128xf32>
    %100 = arith.divf %98, %99 : vector<8x128xf32>
    %101 = vector.extract_strided_slice %94 {offsets = [0, 128], sizes = [8, 128], strides = [1, 1]} : vector<8x512xf32> to vector<8x128xf32>
    %102 = arith.negf %101 : vector<8x128xf32>
    %103 = math.exp %102 : vector<8x128xf32>
    %cst_40 = arith.constant 1.000000e+00 : f32
    %104 = vector.broadcast %cst_40 : f32 to vector<8x128xf32>
    %105 = arith.addf %104, %103 : vector<8x128xf32>
    %106 = arith.divf %104, %105 : vector<8x128xf32>
    %107 = vector.extract_strided_slice %94 {offsets = [0, 256], sizes = [8, 128], strides = [1, 1]} : vector<8x512xf32> to vector<8x128xf32>
    %108 = math.tanh %107 : vector<8x128xf32>
    %109 = vector.extract_strided_slice %94 {offsets = [0, 384], sizes = [8, 128], strides = [1, 1]} : vector<8x512xf32> to vector<8x128xf32>
    %110 = arith.negf %109 : vector<8x128xf32>
    %111 = math.exp %110 : vector<8x128xf32>
    %cst_41 = arith.constant 1.000000e+00 : f32
    %112 = vector.broadcast %cst_41 : f32 to vector<8x128xf32>
    %113 = arith.addf %112, %111 : vector<8x128xf32>
    %114 = arith.divf %112, %113 : vector<8x128xf32>
    %115 = arith.mulf %106, %44 : vector<8x128xf32>
    %116 = arith.mulf %100, %108 : vector<8x128xf32>
    %117 = arith.addf %115, %116 : vector<8x128xf32>
    %118 = math.tanh %117 : vector<8x128xf32>
    %119 = arith.mulf %114, %118 : vector<8x128xf32>
    %120 = arith.index_cast %88 : i32 to index
    %c0_42 = arith.constant 0 : index
    %c0_43 = arith.constant 0 : index
    %121 = vector.load %arg18[%120, %c0_42, %c0_43] : memref<8x8x512xf32, #tpu.memory_space<vmem>>, vector<1x8x512xf32>
    %122 = vector.shape_cast %121 : vector<1x8x512xf32> to vector<8x512xf32>
    %c0_44 = arith.constant 0 : index
    %c0_45 = arith.constant 0 : index
    %123 = vector.load %arg6[%c0_44, %c0_45] : memref<128x512xf32, #tpu.memory_space<vmem>>, vector<128x512xf32>
    %cst_46 = arith.constant dense<0.000000e+00> : vector<8x512xf32>
    %124 = tpu.matmul %77, %123, %cst_46 {dimension_numbers = #tpu.dot_dimension_numbers<[1], [0], [0], [1], [0, 0, 1, 1], [], []>} : vector<8x128xf32>, vector<128x512xf32>, vector<8x512xf32> -> vector<8x512xf32>
    %125 = arith.addf %122, %124 : vector<8x512xf32>
    %126 = vector.extract_strided_slice %125 {offsets = [0, 0], sizes = [8, 128], strides = [1, 1]} : vector<8x512xf32> to vector<8x128xf32>
    %127 = arith.negf %126 : vector<8x128xf32>
    %128 = math.exp %127 : vector<8x128xf32>
    %cst_47 = arith.constant 1.000000e+00 : f32
    %129 = vector.broadcast %cst_47 : f32 to vector<8x128xf32>
    %130 = arith.addf %129, %128 : vector<8x128xf32>
    %131 = arith.divf %129, %130 : vector<8x128xf32>
    %132 = vector.extract_strided_slice %125 {offsets = [0, 128], sizes = [8, 128], strides = [1, 1]} : vector<8x512xf32> to vector<8x128xf32>
    %133 = arith.negf %132 : vector<8x128xf32>
    %134 = math.exp %133 : vector<8x128xf32>
    %cst_48 = arith.constant 1.000000e+00 : f32
    %135 = vector.broadcast %cst_48 : f32 to vector<8x128xf32>
    %136 = arith.addf %135, %134 : vector<8x128xf32>
    %137 = arith.divf %135, %136 : vector<8x128xf32>
    %138 = vector.extract_strided_slice %125 {offsets = [0, 256], sizes = [8, 128], strides = [1, 1]} : vector<8x512xf32> to vector<8x128xf32>
    %139 = math.tanh %138 : vector<8x128xf32>
    %140 = vector.extract_strided_slice %125 {offsets = [0, 384], sizes = [8, 128], strides = [1, 1]} : vector<8x512xf32> to vector<8x128xf32>
    %141 = arith.negf %140 : vector<8x128xf32>
    %142 = math.exp %141 : vector<8x128xf32>
    %cst_49 = arith.constant 1.000000e+00 : f32
    %143 = vector.broadcast %cst_49 : f32 to vector<8x128xf32>
    %144 = arith.addf %143, %142 : vector<8x128xf32>
    %145 = arith.divf %143, %144 : vector<8x128xf32>
    %146 = arith.mulf %137, %75 : vector<8x128xf32>
    %147 = arith.mulf %131, %139 : vector<8x128xf32>
    %148 = arith.addf %146, %147 : vector<8x128xf32>
    %149 = math.tanh %148 : vector<8x128xf32>
    %150 = arith.mulf %145, %149 : vector<8x128xf32>
    %151 = vector.broadcast %c1_i32 : i32 to vector<8x128xi32>
    %152 = arith.cmpi slt, %151, %13 : vector<8x128xi32>
    %cst_50 = arith.constant 0.000000e+00 : f32
    %153 = vector.broadcast %cst_50 : f32 to vector<8x128xf32>
    %154 = arith.select %152, %119, %153 : vector<8x128xi1>, vector<8x128xf32>
    %155 = arith.addf %82, %154 : vector<8x128xf32>
    %156 = vector.broadcast %88 : i32 to vector<8x128xi32>
    %157 = arith.cmpi slt, %156, %13 : vector<8x128xi32>
    %cst_51 = arith.constant 0.000000e+00 : f32
    %158 = vector.broadcast %cst_51 : f32 to vector<8x128xf32>
    %159 = arith.select %157, %150, %158 : vector<8x128xi1>, vector<8x128xf32>
    %160 = arith.addf %87, %159 : vector<8x128xf32>
    %c2_i32 = arith.constant 2 : i32
    %c7_i32_52 = arith.constant 7 : i32
    %161 = arith.subi %c7_i32_52, %c2_i32 : i32
    %162 = arith.index_cast %c2_i32 : i32 to index
    %c0_53 = arith.constant 0 : index
    %c0_54 = arith.constant 0 : index
    %163 = vector.load %arg17[%162, %c0_53, %c0_54] : memref<8x8x512xf32, #tpu.memory_space<vmem>>, vector<1x8x512xf32>
    %164 = vector.shape_cast %163 : vector<1x8x512xf32> to vector<8x512xf32>
    %c0_55 = arith.constant 0 : index
    %c0_56 = arith.constant 0 : index
    %165 = vector.load %arg5[%c0_55, %c0_56] : memref<128x512xf32, #tpu.memory_space<vmem>>, vector<128x512xf32>
    %cst_57 = arith.constant dense<0.000000e+00> : vector<8x512xf32>
    %166 = tpu.matmul %119, %165, %cst_57 {dimension_numbers = #tpu.dot_dimension_numbers<[1], [0], [0], [1], [0, 0, 1, 1], [], []>} : vector<8x128xf32>, vector<128x512xf32>, vector<8x512xf32> -> vector<8x512xf32>
    %167 = arith.addf %164, %166 : vector<8x512xf32>
    %168 = vector.extract_strided_slice %167 {offsets = [0, 0], sizes = [8, 128], strides = [1, 1]} : vector<8x512xf32> to vector<8x128xf32>
    %169 = arith.negf %168 : vector<8x128xf32>
    %170 = math.exp %169 : vector<8x128xf32>
    %cst_58 = arith.constant 1.000000e+00 : f32
    %171 = vector.broadcast %cst_58 : f32 to vector<8x128xf32>
    %172 = arith.addf %171, %170 : vector<8x128xf32>
    %173 = arith.divf %171, %172 : vector<8x128xf32>
    %174 = vector.extract_strided_slice %167 {offsets = [0, 128], sizes = [8, 128], strides = [1, 1]} : vector<8x512xf32> to vector<8x128xf32>
    %175 = arith.negf %174 : vector<8x128xf32>
    %176 = math.exp %175 : vector<8x128xf32>
    %cst_59 = arith.constant 1.000000e+00 : f32
    %177 = vector.broadcast %cst_59 : f32 to vector<8x128xf32>
    %178 = arith.addf %177, %176 : vector<8x128xf32>
    %179 = arith.divf %177, %178 : vector<8x128xf32>
    %180 = vector.extract_strided_slice %167 {offsets = [0, 256], sizes = [8, 128], strides = [1, 1]} : vector<8x512xf32> to vector<8x128xf32>
    %181 = math.tanh %180 : vector<8x128xf32>
    %182 = vector.extract_strided_slice %167 {offsets = [0, 384], sizes = [8, 128], strides = [1, 1]} : vector<8x512xf32> to vector<8x128xf32>
    %183 = arith.negf %182 : vector<8x128xf32>
    %184 = math.exp %183 : vector<8x128xf32>
    %cst_60 = arith.constant 1.000000e+00 : f32
    %185 = vector.broadcast %cst_60 : f32 to vector<8x128xf32>
    %186 = arith.addf %185, %184 : vector<8x128xf32>
    %187 = arith.divf %185, %186 : vector<8x128xf32>
    %188 = arith.mulf %179, %117 : vector<8x128xf32>
    %189 = arith.mulf %173, %181 : vector<8x128xf32>
    %190 = arith.addf %188, %189 : vector<8x128xf32>
    %191 = math.tanh %190 : vector<8x128xf32>
    %192 = arith.mulf %187, %191 : vector<8x128xf32>
    %193 = arith.index_cast %161 : i32 to index
    %c0_61 = arith.constant 0 : index
    %c0_62 = arith.constant 0 : index
    %194 = vector.load %arg18[%193, %c0_61, %c0_62] : memref<8x8x512xf32, #tpu.memory_space<vmem>>, vector<1x8x512xf32>
    %195 = vector.shape_cast %194 : vector<1x8x512xf32> to vector<8x512xf32>
    %c0_63 = arith.constant 0 : index
    %c0_64 = arith.constant 0 : index
    %196 = vector.load %arg6[%c0_63, %c0_64] : memref<128x512xf32, #tpu.memory_space<vmem>>, vector<128x512xf32>
    %cst_65 = arith.constant dense<0.000000e+00> : vector<8x512xf32>
    %197 = tpu.matmul %150, %196, %cst_65 {dimension_numbers = #tpu.dot_dimension_numbers<[1], [0], [0], [1], [0, 0, 1, 1], [], []>} : vector<8x128xf32>, vector<128x512xf32>, vector<8x512xf32> -> vector<8x512xf32>
    %198 = arith.addf %195, %197 : vector<8x512xf32>
    %199 = vector.extract_strided_slice %198 {offsets = [0, 0], sizes = [8, 128], strides = [1, 1]} : vector<8x512xf32> to vector<8x128xf32>
    %200 = arith.negf %199 : vector<8x128xf32>
    %201 = math.exp %200 : vector<8x128xf32>
    %cst_66 = arith.constant 1.000000e+00 : f32
    %202 = vector.broadcast %cst_66 : f32 to vector<8x128xf32>
    %203 = arith.addf %202, %201 : vector<8x128xf32>
    %204 = arith.divf %202, %203 : vector<8x128xf32>
    %205 = vector.extract_strided_slice %198 {offsets = [0, 128], sizes = [8, 128], strides = [1, 1]} : vector<8x512xf32> to vector<8x128xf32>
    %206 = arith.negf %205 : vector<8x128xf32>
    %207 = math.exp %206 : vector<8x128xf32>
    %cst_67 = arith.constant 1.000000e+00 : f32
    %208 = vector.broadcast %cst_67 : f32 to vector<8x128xf32>
    %209 = arith.addf %208, %207 : vector<8x128xf32>
    %210 = arith.divf %208, %209 : vector<8x128xf32>
    %211 = vector.extract_strided_slice %198 {offsets = [0, 256], sizes = [8, 128], strides = [1, 1]} : vector<8x512xf32> to vector<8x128xf32>
    %212 = math.tanh %211 : vector<8x128xf32>
    %213 = vector.extract_strided_slice %198 {offsets = [0, 384], sizes = [8, 128], strides = [1, 1]} : vector<8x512xf32> to vector<8x128xf32>
    %214 = arith.negf %213 : vector<8x128xf32>
    %215 = math.exp %214 : vector<8x128xf32>
    %cst_68 = arith.constant 1.000000e+00 : f32
    %216 = vector.broadcast %cst_68 : f32 to vector<8x128xf32>
    %217 = arith.addf %216, %215 : vector<8x128xf32>
    %218 = arith.divf %216, %217 : vector<8x128xf32>
    %219 = arith.mulf %210, %148 : vector<8x128xf32>
    %220 = arith.mulf %204, %212 : vector<8x128xf32>
    %221 = arith.addf %219, %220 : vector<8x128xf32>
    %222 = math.tanh %221 : vector<8x128xf32>
    %223 = arith.mulf %218, %222 : vector<8x128xf32>
    %224 = vector.broadcast %c2_i32 : i32 to vector<8x128xi32>
    %225 = arith.cmpi slt, %224, %13 : vector<8x128xi32>
    %cst_69 = arith.constant 0.000000e+00 : f32
    %226 = vector.broadcast %cst_69 : f32 to vector<8x128xf32>
    %227 = arith.select %225, %192, %226 : vector<8x128xi1>, vector<8x128xf32>
    %228 = arith.addf %155, %227 : vector<8x128xf32>
    %229 = vector.broadcast %161 : i32 to vector<8x128xi32>
    %230 = arith.cmpi slt, %229, %13 : vector<8x128xi32>
    %cst_70 = arith.constant 0.000000e+00 : f32
    %231 = vector.broadcast %cst_70 : f32 to vector<8x128xf32>
    %232 = arith.select %230, %223, %231 : vector<8x128xi1>, vector<8x128xf32>
    %233 = arith.addf %160, %232 : vector<8x128xf32>
    %c3_i32 = arith.constant 3 : i32
    %c7_i32_71 = arith.constant 7 : i32
    %234 = arith.subi %c7_i32_71, %c3_i32 : i32
    %235 = arith.index_cast %c3_i32 : i32 to index
    %c0_72 = arith.constant 0 : index
    %c0_73 = arith.constant 0 : index
    %236 = vector.load %arg17[%235, %c0_72, %c0_73] : memref<8x8x512xf32, #tpu.memory_space<vmem>>, vector<1x8x512xf32>
    %237 = vector.shape_cast %236 : vector<1x8x512xf32> to vector<8x512xf32>
    %c0_74 = arith.constant 0 : index
    %c0_75 = arith.constant 0 : index
    %238 = vector.load %arg5[%c0_74, %c0_75] : memref<128x512xf32, #tpu.memory_space<vmem>>, vector<128x512xf32>
    %cst_76 = arith.constant dense<0.000000e+00> : vector<8x512xf32>
    %239 = tpu.matmul %192, %238, %cst_76 {dimension_numbers = #tpu.dot_dimension_numbers<[1], [0], [0], [1], [0, 0, 1, 1], [], []>} : vector<8x128xf32>, vector<128x512xf32>, vector<8x512xf32> -> vector<8x512xf32>
    %240 = arith.addf %237, %239 : vector<8x512xf32>
    %241 = vector.extract_strided_slice %240 {offsets = [0, 0], sizes = [8, 128], strides = [1, 1]} : vector<8x512xf32> to vector<8x128xf32>
    %242 = arith.negf %241 : vector<8x128xf32>
    %243 = math.exp %242 : vector<8x128xf32>
    %cst_77 = arith.constant 1.000000e+00 : f32
    %244 = vector.broadcast %cst_77 : f32 to vector<8x128xf32>
    %245 = arith.addf %244, %243 : vector<8x128xf32>
    %246 = arith.divf %244, %245 : vector<8x128xf32>
    %247 = vector.extract_strided_slice %240 {offsets = [0, 128], sizes = [8, 128], strides = [1, 1]} : vector<8x512xf32> to vector<8x128xf32>
    %248 = arith.negf %247 : vector<8x128xf32>
    %249 = math.exp %248 : vector<8x128xf32>
    %cst_78 = arith.constant 1.000000e+00 : f32
    %250 = vector.broadcast %cst_78 : f32 to vector<8x128xf32>
    %251 = arith.addf %250, %249 : vector<8x128xf32>
    %252 = arith.divf %250, %251 : vector<8x128xf32>
    %253 = vector.extract_strided_slice %240 {offsets = [0, 256], sizes = [8, 128], strides = [1, 1]} : vector<8x512xf32> to vector<8x128xf32>
    %254 = math.tanh %253 : vector<8x128xf32>
    %255 = vector.extract_strided_slice %240 {offsets = [0, 384], sizes = [8, 128], strides = [1, 1]} : vector<8x512xf32> to vector<8x128xf32>
    %256 = arith.negf %255 : vector<8x128xf32>
    %257 = math.exp %256 : vector<8x128xf32>
    %cst_79 = arith.constant 1.000000e+00 : f32
    %258 = vector.broadcast %cst_79 : f32 to vector<8x128xf32>
    %259 = arith.addf %258, %257 : vector<8x128xf32>
    %260 = arith.divf %258, %259 : vector<8x128xf32>
    %261 = arith.mulf %252, %190 : vector<8x128xf32>
    %262 = arith.mulf %246, %254 : vector<8x128xf32>
    %263 = arith.addf %261, %262 : vector<8x128xf32>
    %264 = math.tanh %263 : vector<8x128xf32>
    %265 = arith.mulf %260, %264 : vector<8x128xf32>
    %266 = arith.index_cast %234 : i32 to index
    %c0_80 = arith.constant 0 : index
    %c0_81 = arith.constant 0 : index
    %267 = vector.load %arg18[%266, %c0_80, %c0_81] : memref<8x8x512xf32, #tpu.memory_space<vmem>>, vector<1x8x512xf32>
    %268 = vector.shape_cast %267 : vector<1x8x512xf32> to vector<8x512xf32>
    %c0_82 = arith.constant 0 : index
    %c0_83 = arith.constant 0 : index
    %269 = vector.load %arg6[%c0_82, %c0_83] : memref<128x512xf32, #tpu.memory_space<vmem>>, vector<128x512xf32>
    %cst_84 = arith.constant dense<0.000000e+00> : vector<8x512xf32>
    %270 = tpu.matmul %223, %269, %cst_84 {dimension_numbers = #tpu.dot_dimension_numbers<[1], [0], [0], [1], [0, 0, 1, 1], [], []>} : vector<8x128xf32>, vector<128x512xf32>, vector<8x512xf32> -> vector<8x512xf32>
    %271 = arith.addf %268, %270 : vector<8x512xf32>
    %272 = vector.extract_strided_slice %271 {offsets = [0, 0], sizes = [8, 128], strides = [1, 1]} : vector<8x512xf32> to vector<8x128xf32>
    %273 = arith.negf %272 : vector<8x128xf32>
    %274 = math.exp %273 : vector<8x128xf32>
    %cst_85 = arith.constant 1.000000e+00 : f32
    %275 = vector.broadcast %cst_85 : f32 to vector<8x128xf32>
    %276 = arith.addf %275, %274 : vector<8x128xf32>
    %277 = arith.divf %275, %276 : vector<8x128xf32>
    %278 = vector.extract_strided_slice %271 {offsets = [0, 128], sizes = [8, 128], strides = [1, 1]} : vector<8x512xf32> to vector<8x128xf32>
    %279 = arith.negf %278 : vector<8x128xf32>
    %280 = math.exp %279 : vector<8x128xf32>
    %cst_86 = arith.constant 1.000000e+00 : f32
    %281 = vector.broadcast %cst_86 : f32 to vector<8x128xf32>
    %282 = arith.addf %281, %280 : vector<8x128xf32>
    %283 = arith.divf %281, %282 : vector<8x128xf32>
    %284 = vector.extract_strided_slice %271 {offsets = [0, 256], sizes = [8, 128], strides = [1, 1]} : vector<8x512xf32> to vector<8x128xf32>
    %285 = math.tanh %284 : vector<8x128xf32>
    %286 = vector.extract_strided_slice %271 {offsets = [0, 384], sizes = [8, 128], strides = [1, 1]} : vector<8x512xf32> to vector<8x128xf32>
    %287 = arith.negf %286 : vector<8x128xf32>
    %288 = math.exp %287 : vector<8x128xf32>
    %cst_87 = arith.constant 1.000000e+00 : f32
    %289 = vector.broadcast %cst_87 : f32 to vector<8x128xf32>
    %290 = arith.addf %289, %288 : vector<8x128xf32>
    %291 = arith.divf %289, %290 : vector<8x128xf32>
    %292 = arith.mulf %283, %221 : vector<8x128xf32>
    %293 = arith.mulf %277, %285 : vector<8x128xf32>
    %294 = arith.addf %292, %293 : vector<8x128xf32>
    %295 = math.tanh %294 : vector<8x128xf32>
    %296 = arith.mulf %291, %295 : vector<8x128xf32>
    %297 = vector.broadcast %c3_i32 : i32 to vector<8x128xi32>
    %298 = arith.cmpi slt, %297, %13 : vector<8x128xi32>
    %cst_88 = arith.constant 0.000000e+00 : f32
    %299 = vector.broadcast %cst_88 : f32 to vector<8x128xf32>
    %300 = arith.select %298, %265, %299 : vector<8x128xi1>, vector<8x128xf32>
    %301 = arith.addf %228, %300 : vector<8x128xf32>
    %302 = vector.broadcast %234 : i32 to vector<8x128xi32>
    %303 = arith.cmpi slt, %302, %13 : vector<8x128xi32>
    %cst_89 = arith.constant 0.000000e+00 : f32
    %304 = vector.broadcast %cst_89 : f32 to vector<8x128xf32>
    %305 = arith.select %303, %296, %304 : vector<8x128xi1>, vector<8x128xf32>
    %306 = arith.addf %233, %305 : vector<8x128xf32>
    %c4_i32 = arith.constant 4 : i32
    %c7_i32_90 = arith.constant 7 : i32
    %307 = arith.subi %c7_i32_90, %c4_i32 : i32
    %308 = arith.index_cast %c4_i32 : i32 to index
    %c0_91 = arith.constant 0 : index
    %c0_92 = arith.constant 0 : index
    %309 = vector.load %arg17[%308, %c0_91, %c0_92] : memref<8x8x512xf32, #tpu.memory_space<vmem>>, vector<1x8x512xf32>
    %310 = vector.shape_cast %309 : vector<1x8x512xf32> to vector<8x512xf32>
    %c0_93 = arith.constant 0 : index
    %c0_94 = arith.constant 0 : index
    %311 = vector.load %arg5[%c0_93, %c0_94] : memref<128x512xf32, #tpu.memory_space<vmem>>, vector<128x512xf32>
    %cst_95 = arith.constant dense<0.000000e+00> : vector<8x512xf32>
    %312 = tpu.matmul %265, %311, %cst_95 {dimension_numbers = #tpu.dot_dimension_numbers<[1], [0], [0], [1], [0, 0, 1, 1], [], []>} : vector<8x128xf32>, vector<128x512xf32>, vector<8x512xf32> -> vector<8x512xf32>
    %313 = arith.addf %310, %312 : vector<8x512xf32>
    %314 = vector.extract_strided_slice %313 {offsets = [0, 0], sizes = [8, 128], strides = [1, 1]} : vector<8x512xf32> to vector<8x128xf32>
    %315 = arith.negf %314 : vector<8x128xf32>
    %316 = math.exp %315 : vector<8x128xf32>
    %cst_96 = arith.constant 1.000000e+00 : f32
    %317 = vector.broadcast %cst_96 : f32 to vector<8x128xf32>
    %318 = arith.addf %317, %316 : vector<8x128xf32>
    %319 = arith.divf %317, %318 : vector<8x128xf32>
    %320 = vector.extract_strided_slice %313 {offsets = [0, 128], sizes = [8, 128], strides = [1, 1]} : vector<8x512xf32> to vector<8x128xf32>
    %321 = arith.negf %320 : vector<8x128xf32>
    %322 = math.exp %321 : vector<8x128xf32>
    %cst_97 = arith.constant 1.000000e+00 : f32
    %323 = vector.broadcast %cst_97 : f32 to vector<8x128xf32>
    %324 = arith.addf %323, %322 : vector<8x128xf32>
    %325 = arith.divf %323, %324 : vector<8x128xf32>
    %326 = vector.extract_strided_slice %313 {offsets = [0, 256], sizes = [8, 128], strides = [1, 1]} : vector<8x512xf32> to vector<8x128xf32>
    %327 = math.tanh %326 : vector<8x128xf32>
    %328 = vector.extract_strided_slice %313 {offsets = [0, 384], sizes = [8, 128], strides = [1, 1]} : vector<8x512xf32> to vector<8x128xf32>
    %329 = arith.negf %328 : vector<8x128xf32>
    %330 = math.exp %329 : vector<8x128xf32>
    %cst_98 = arith.constant 1.000000e+00 : f32
    %331 = vector.broadcast %cst_98 : f32 to vector<8x128xf32>
    %332 = arith.addf %331, %330 : vector<8x128xf32>
    %333 = arith.divf %331, %332 : vector<8x128xf32>
    %334 = arith.mulf %325, %263 : vector<8x128xf32>
    %335 = arith.mulf %319, %327 : vector<8x128xf32>
    %336 = arith.addf %334, %335 : vector<8x128xf32>
    %337 = math.tanh %336 : vector<8x128xf32>
    %338 = arith.mulf %333, %337 : vector<8x128xf32>
    %339 = arith.index_cast %307 : i32 to index
    %c0_99 = arith.constant 0 : index
    %c0_100 = arith.constant 0 : index
    %340 = vector.load %arg18[%339, %c0_99, %c0_100] : memref<8x8x512xf32, #tpu.memory_space<vmem>>, vector<1x8x512xf32>
    %341 = vector.shape_cast %340 : vector<1x8x512xf32> to vector<8x512xf32>
    %c0_101 = arith.constant 0 : index
    %c0_102 = arith.constant 0 : index
    %342 = vector.load %arg6[%c0_101, %c0_102] : memref<128x512xf32, #tpu.memory_space<vmem>>, vector<128x512xf32>
    %cst_103 = arith.constant dense<0.000000e+00> : vector<8x512xf32>
    %343 = tpu.matmul %296, %342, %cst_103 {dimension_numbers = #tpu.dot_dimension_numbers<[1], [0], [0], [1], [0, 0, 1, 1], [], []>} : vector<8x128xf32>, vector<128x512xf32>, vector<8x512xf32> -> vector<8x512xf32>
    %344 = arith.addf %341, %343 : vector<8x512xf32>
    %345 = vector.extract_strided_slice %344 {offsets = [0, 0], sizes = [8, 128], strides = [1, 1]} : vector<8x512xf32> to vector<8x128xf32>
    %346 = arith.negf %345 : vector<8x128xf32>
    %347 = math.exp %346 : vector<8x128xf32>
    %cst_104 = arith.constant 1.000000e+00 : f32
    %348 = vector.broadcast %cst_104 : f32 to vector<8x128xf32>
    %349 = arith.addf %348, %347 : vector<8x128xf32>
    %350 = arith.divf %348, %349 : vector<8x128xf32>
    %351 = vector.extract_strided_slice %344 {offsets = [0, 128], sizes = [8, 128], strides = [1, 1]} : vector<8x512xf32> to vector<8x128xf32>
    %352 = arith.negf %351 : vector<8x128xf32>
    %353 = math.exp %352 : vector<8x128xf32>
    %cst_105 = arith.constant 1.000000e+00 : f32
    %354 = vector.broadcast %cst_105 : f32 to vector<8x128xf32>
    %355 = arith.addf %354, %353 : vector<8x128xf32>
    %356 = arith.divf %354, %355 : vector<8x128xf32>
    %357 = vector.extract_strided_slice %344 {offsets = [0, 256], sizes = [8, 128], strides = [1, 1]} : vector<8x512xf32> to vector<8x128xf32>
    %358 = math.tanh %357 : vector<8x128xf32>
    %359 = vector.extract_strided_slice %344 {offsets = [0, 384], sizes = [8, 128], strides = [1, 1]} : vector<8x512xf32> to vector<8x128xf32>
    %360 = arith.negf %359 : vector<8x128xf32>
    %361 = math.exp %360 : vector<8x128xf32>
    %cst_106 = arith.constant 1.000000e+00 : f32
    %362 = vector.broadcast %cst_106 : f32 to vector<8x128xf32>
    %363 = arith.addf %362, %361 : vector<8x128xf32>
    %364 = arith.divf %362, %363 : vector<8x128xf32>
    %365 = arith.mulf %356, %294 : vector<8x128xf32>
    %366 = arith.mulf %350, %358 : vector<8x128xf32>
    %367 = arith.addf %365, %366 : vector<8x128xf32>
    %368 = math.tanh %367 : vector<8x128xf32>
    %369 = arith.mulf %364, %368 : vector<8x128xf32>
    %370 = vector.broadcast %c4_i32 : i32 to vector<8x128xi32>
    %371 = arith.cmpi slt, %370, %13 : vector<8x128xi32>
    %cst_107 = arith.constant 0.000000e+00 : f32
    %372 = vector.broadcast %cst_107 : f32 to vector<8x128xf32>
    %373 = arith.select %371, %338, %372 : vector<8x128xi1>, vector<8x128xf32>
    %374 = arith.addf %301, %373 : vector<8x128xf32>
    %375 = vector.broadcast %307 : i32 to vector<8x128xi32>
    %376 = arith.cmpi slt, %375, %13 : vector<8x128xi32>
    %cst_108 = arith.constant 0.000000e+00 : f32
    %377 = vector.broadcast %cst_108 : f32 to vector<8x128xf32>
    %378 = arith.select %376, %369, %377 : vector<8x128xi1>, vector<8x128xf32>
    %379 = arith.addf %306, %378 : vector<8x128xf32>
    %c5_i32 = arith.constant 5 : i32
    %c7_i32_109 = arith.constant 7 : i32
    %380 = arith.subi %c7_i32_109, %c5_i32 : i32
    %381 = arith.index_cast %c5_i32 : i32 to index
    %c0_110 = arith.constant 0 : index
    %c0_111 = arith.constant 0 : index
    %382 = vector.load %arg17[%381, %c0_110, %c0_111] : memref<8x8x512xf32, #tpu.memory_space<vmem>>, vector<1x8x512xf32>
    %383 = vector.shape_cast %382 : vector<1x8x512xf32> to vector<8x512xf32>
    %c0_112 = arith.constant 0 : index
    %c0_113 = arith.constant 0 : index
    %384 = vector.load %arg5[%c0_112, %c0_113] : memref<128x512xf32, #tpu.memory_space<vmem>>, vector<128x512xf32>
    %cst_114 = arith.constant dense<0.000000e+00> : vector<8x512xf32>
    %385 = tpu.matmul %338, %384, %cst_114 {dimension_numbers = #tpu.dot_dimension_numbers<[1], [0], [0], [1], [0, 0, 1, 1], [], []>} : vector<8x128xf32>, vector<128x512xf32>, vector<8x512xf32> -> vector<8x512xf32>
    %386 = arith.addf %383, %385 : vector<8x512xf32>
    %387 = vector.extract_strided_slice %386 {offsets = [0, 0], sizes = [8, 128], strides = [1, 1]} : vector<8x512xf32> to vector<8x128xf32>
    %388 = arith.negf %387 : vector<8x128xf32>
    %389 = math.exp %388 : vector<8x128xf32>
    %cst_115 = arith.constant 1.000000e+00 : f32
    %390 = vector.broadcast %cst_115 : f32 to vector<8x128xf32>
    %391 = arith.addf %390, %389 : vector<8x128xf32>
    %392 = arith.divf %390, %391 : vector<8x128xf32>
    %393 = vector.extract_strided_slice %386 {offsets = [0, 128], sizes = [8, 128], strides = [1, 1]} : vector<8x512xf32> to vector<8x128xf32>
    %394 = arith.negf %393 : vector<8x128xf32>
    %395 = math.exp %394 : vector<8x128xf32>
    %cst_116 = arith.constant 1.000000e+00 : f32
    %396 = vector.broadcast %cst_116 : f32 to vector<8x128xf32>
    %397 = arith.addf %396, %395 : vector<8x128xf32>
    %398 = arith.divf %396, %397 : vector<8x128xf32>
    %399 = vector.extract_strided_slice %386 {offsets = [0, 256], sizes = [8, 128], strides = [1, 1]} : vector<8x512xf32> to vector<8x128xf32>
    %400 = math.tanh %399 : vector<8x128xf32>
    %401 = vector.extract_strided_slice %386 {offsets = [0, 384], sizes = [8, 128], strides = [1, 1]} : vector<8x512xf32> to vector<8x128xf32>
    %402 = arith.negf %401 : vector<8x128xf32>
    %403 = math.exp %402 : vector<8x128xf32>
    %cst_117 = arith.constant 1.000000e+00 : f32
    %404 = vector.broadcast %cst_117 : f32 to vector<8x128xf32>
    %405 = arith.addf %404, %403 : vector<8x128xf32>
    %406 = arith.divf %404, %405 : vector<8x128xf32>
    %407 = arith.mulf %398, %336 : vector<8x128xf32>
    %408 = arith.mulf %392, %400 : vector<8x128xf32>
    %409 = arith.addf %407, %408 : vector<8x128xf32>
    %410 = math.tanh %409 : vector<8x128xf32>
    %411 = arith.mulf %406, %410 : vector<8x128xf32>
    %412 = arith.index_cast %380 : i32 to index
    %c0_118 = arith.constant 0 : index
    %c0_119 = arith.constant 0 : index
    %413 = vector.load %arg18[%412, %c0_118, %c0_119] : memref<8x8x512xf32, #tpu.memory_space<vmem>>, vector<1x8x512xf32>
    %414 = vector.shape_cast %413 : vector<1x8x512xf32> to vector<8x512xf32>
    %c0_120 = arith.constant 0 : index
    %c0_121 = arith.constant 0 : index
    %415 = vector.load %arg6[%c0_120, %c0_121] : memref<128x512xf32, #tpu.memory_space<vmem>>, vector<128x512xf32>
    %cst_122 = arith.constant dense<0.000000e+00> : vector<8x512xf32>
    %416 = tpu.matmul %369, %415, %cst_122 {dimension_numbers = #tpu.dot_dimension_numbers<[1], [0], [0], [1], [0, 0, 1, 1], [], []>} : vector<8x128xf32>, vector<128x512xf32>, vector<8x512xf32> -> vector<8x512xf32>
    %417 = arith.addf %414, %416 : vector<8x512xf32>
    %418 = vector.extract_strided_slice %417 {offsets = [0, 0], sizes = [8, 128], strides = [1, 1]} : vector<8x512xf32> to vector<8x128xf32>
    %419 = arith.negf %418 : vector<8x128xf32>
    %420 = math.exp %419 : vector<8x128xf32>
    %cst_123 = arith.constant 1.000000e+00 : f32
    %421 = vector.broadcast %cst_123 : f32 to vector<8x128xf32>
    %422 = arith.addf %421, %420 : vector<8x128xf32>
    %423 = arith.divf %421, %422 : vector<8x128xf32>
    %424 = vector.extract_strided_slice %417 {offsets = [0, 128], sizes = [8, 128], strides = [1, 1]} : vector<8x512xf32> to vector<8x128xf32>
    %425 = arith.negf %424 : vector<8x128xf32>
    %426 = math.exp %425 : vector<8x128xf32>
    %cst_124 = arith.constant 1.000000e+00 : f32
    %427 = vector.broadcast %cst_124 : f32 to vector<8x128xf32>
    %428 = arith.addf %427, %426 : vector<8x128xf32>
    %429 = arith.divf %427, %428 : vector<8x128xf32>
    %430 = vector.extract_strided_slice %417 {offsets = [0, 256], sizes = [8, 128], strides = [1, 1]} : vector<8x512xf32> to vector<8x128xf32>
    %431 = math.tanh %430 : vector<8x128xf32>
    %432 = vector.extract_strided_slice %417 {offsets = [0, 384], sizes = [8, 128], strides = [1, 1]} : vector<8x512xf32> to vector<8x128xf32>
    %433 = arith.negf %432 : vector<8x128xf32>
    %434 = math.exp %433 : vector<8x128xf32>
    %cst_125 = arith.constant 1.000000e+00 : f32
    %435 = vector.broadcast %cst_125 : f32 to vector<8x128xf32>
    %436 = arith.addf %435, %434 : vector<8x128xf32>
    %437 = arith.divf %435, %436 : vector<8x128xf32>
    %438 = arith.mulf %429, %367 : vector<8x128xf32>
    %439 = arith.mulf %423, %431 : vector<8x128xf32>
    %440 = arith.addf %438, %439 : vector<8x128xf32>
    %441 = math.tanh %440 : vector<8x128xf32>
    %442 = arith.mulf %437, %441 : vector<8x128xf32>
    %443 = vector.broadcast %c5_i32 : i32 to vector<8x128xi32>
    %444 = arith.cmpi slt, %443, %13 : vector<8x128xi32>
    %cst_126 = arith.constant 0.000000e+00 : f32
    %445 = vector.broadcast %cst_126 : f32 to vector<8x128xf32>
    %446 = arith.select %444, %411, %445 : vector<8x128xi1>, vector<8x128xf32>
    %447 = arith.addf %374, %446 : vector<8x128xf32>
    %448 = vector.broadcast %380 : i32 to vector<8x128xi32>
    %449 = arith.cmpi slt, %448, %13 : vector<8x128xi32>
    %cst_127 = arith.constant 0.000000e+00 : f32
    %450 = vector.broadcast %cst_127 : f32 to vector<8x128xf32>
    %451 = arith.select %449, %442, %450 : vector<8x128xi1>, vector<8x128xf32>
    %452 = arith.addf %379, %451 : vector<8x128xf32>
    %c6_i32 = arith.constant 6 : i32
    %c7_i32_128 = arith.constant 7 : i32
    %453 = arith.subi %c7_i32_128, %c6_i32 : i32
    %454 = arith.index_cast %c6_i32 : i32 to index
    %c0_129 = arith.constant 0 : index
    %c0_130 = arith.constant 0 : index
    %455 = vector.load %arg17[%454, %c0_129, %c0_130] : memref<8x8x512xf32, #tpu.memory_space<vmem>>, vector<1x8x512xf32>
    %456 = vector.shape_cast %455 : vector<1x8x512xf32> to vector<8x512xf32>
    %c0_131 = arith.constant 0 : index
    %c0_132 = arith.constant 0 : index
    %457 = vector.load %arg5[%c0_131, %c0_132] : memref<128x512xf32, #tpu.memory_space<vmem>>, vector<128x512xf32>
    %cst_133 = arith.constant dense<0.000000e+00> : vector<8x512xf32>
    %458 = tpu.matmul %411, %457, %cst_133 {dimension_numbers = #tpu.dot_dimension_numbers<[1], [0], [0], [1], [0, 0, 1, 1], [], []>} : vector<8x128xf32>, vector<128x512xf32>, vector<8x512xf32> -> vector<8x512xf32>
    %459 = arith.addf %456, %458 : vector<8x512xf32>
    %460 = vector.extract_strided_slice %459 {offsets = [0, 0], sizes = [8, 128], strides = [1, 1]} : vector<8x512xf32> to vector<8x128xf32>
    %461 = arith.negf %460 : vector<8x128xf32>
    %462 = math.exp %461 : vector<8x128xf32>
    %cst_134 = arith.constant 1.000000e+00 : f32
    %463 = vector.broadcast %cst_134 : f32 to vector<8x128xf32>
    %464 = arith.addf %463, %462 : vector<8x128xf32>
    %465 = arith.divf %463, %464 : vector<8x128xf32>
    %466 = vector.extract_strided_slice %459 {offsets = [0, 128], sizes = [8, 128], strides = [1, 1]} : vector<8x512xf32> to vector<8x128xf32>
    %467 = arith.negf %466 : vector<8x128xf32>
    %468 = math.exp %467 : vector<8x128xf32>
    %cst_135 = arith.constant 1.000000e+00 : f32
    %469 = vector.broadcast %cst_135 : f32 to vector<8x128xf32>
    %470 = arith.addf %469, %468 : vector<8x128xf32>
    %471 = arith.divf %469, %470 : vector<8x128xf32>
    %472 = vector.extract_strided_slice %459 {offsets = [0, 256], sizes = [8, 128], strides = [1, 1]} : vector<8x512xf32> to vector<8x128xf32>
    %473 = math.tanh %472 : vector<8x128xf32>
    %474 = vector.extract_strided_slice %459 {offsets = [0, 384], sizes = [8, 128], strides = [1, 1]} : vector<8x512xf32> to vector<8x128xf32>
    %475 = arith.negf %474 : vector<8x128xf32>
    %476 = math.exp %475 : vector<8x128xf32>
    %cst_136 = arith.constant 1.000000e+00 : f32
    %477 = vector.broadcast %cst_136 : f32 to vector<8x128xf32>
    %478 = arith.addf %477, %476 : vector<8x128xf32>
    %479 = arith.divf %477, %478 : vector<8x128xf32>
    %480 = arith.mulf %471, %409 : vector<8x128xf32>
    %481 = arith.mulf %465, %473 : vector<8x128xf32>
    %482 = arith.addf %480, %481 : vector<8x128xf32>
    %483 = math.tanh %482 : vector<8x128xf32>
    %484 = arith.mulf %479, %483 : vector<8x128xf32>
    %485 = arith.index_cast %453 : i32 to index
    %c0_137 = arith.constant 0 : index
    %c0_138 = arith.constant 0 : index
    %486 = vector.load %arg18[%485, %c0_137, %c0_138] : memref<8x8x512xf32, #tpu.memory_space<vmem>>, vector<1x8x512xf32>
    %487 = vector.shape_cast %486 : vector<1x8x512xf32> to vector<8x512xf32>
    %c0_139 = arith.constant 0 : index
    %c0_140 = arith.constant 0 : index
    %488 = vector.load %arg6[%c0_139, %c0_140] : memref<128x512xf32, #tpu.memory_space<vmem>>, vector<128x512xf32>
    %cst_141 = arith.constant dense<0.000000e+00> : vector<8x512xf32>
    %489 = tpu.matmul %442, %488, %cst_141 {dimension_numbers = #tpu.dot_dimension_numbers<[1], [0], [0], [1], [0, 0, 1, 1], [], []>} : vector<8x128xf32>, vector<128x512xf32>, vector<8x512xf32> -> vector<8x512xf32>
    %490 = arith.addf %487, %489 : vector<8x512xf32>
    %491 = vector.extract_strided_slice %490 {offsets = [0, 0], sizes = [8, 128], strides = [1, 1]} : vector<8x512xf32> to vector<8x128xf32>
    %492 = arith.negf %491 : vector<8x128xf32>
    %493 = math.exp %492 : vector<8x128xf32>
    %cst_142 = arith.constant 1.000000e+00 : f32
    %494 = vector.broadcast %cst_142 : f32 to vector<8x128xf32>
    %495 = arith.addf %494, %493 : vector<8x128xf32>
    %496 = arith.divf %494, %495 : vector<8x128xf32>
    %497 = vector.extract_strided_slice %490 {offsets = [0, 128], sizes = [8, 128], strides = [1, 1]} : vector<8x512xf32> to vector<8x128xf32>
    %498 = arith.negf %497 : vector<8x128xf32>
    %499 = math.exp %498 : vector<8x128xf32>
    %cst_143 = arith.constant 1.000000e+00 : f32
    %500 = vector.broadcast %cst_143 : f32 to vector<8x128xf32>
    %501 = arith.addf %500, %499 : vector<8x128xf32>
    %502 = arith.divf %500, %501 : vector<8x128xf32>
    %503 = vector.extract_strided_slice %490 {offsets = [0, 256], sizes = [8, 128], strides = [1, 1]} : vector<8x512xf32> to vector<8x128xf32>
    %504 = math.tanh %503 : vector<8x128xf32>
    %505 = vector.extract_strided_slice %490 {offsets = [0, 384], sizes = [8, 128], strides = [1, 1]} : vector<8x512xf32> to vector<8x128xf32>
    %506 = arith.negf %505 : vector<8x128xf32>
    %507 = math.exp %506 : vector<8x128xf32>
    %cst_144 = arith.constant 1.000000e+00 : f32
    %508 = vector.broadcast %cst_144 : f32 to vector<8x128xf32>
    %509 = arith.addf %508, %507 : vector<8x128xf32>
    %510 = arith.divf %508, %509 : vector<8x128xf32>
    %511 = arith.mulf %502, %440 : vector<8x128xf32>
    %512 = arith.mulf %496, %504 : vector<8x128xf32>
    %513 = arith.addf %511, %512 : vector<8x128xf32>
    %514 = math.tanh %513 : vector<8x128xf32>
    %515 = arith.mulf %510, %514 : vector<8x128xf32>
    %516 = vector.broadcast %c6_i32 : i32 to vector<8x128xi32>
    %517 = arith.cmpi slt, %516, %13 : vector<8x128xi32>
    %cst_145 = arith.constant 0.000000e+00 : f32
    %518 = vector.broadcast %cst_145 : f32 to vector<8x128xf32>
    %519 = arith.select %517, %484, %518 : vector<8x128xi1>, vector<8x128xf32>
    %520 = arith.addf %447, %519 : vector<8x128xf32>
    %521 = vector.broadcast %453 : i32 to vector<8x128xi32>
    %522 = arith.cmpi slt, %521, %13 : vector<8x128xi32>
    %cst_146 = arith.constant 0.000000e+00 : f32
    %523 = vector.broadcast %cst_146 : f32 to vector<8x128xf32>
    %524 = arith.select %522, %515, %523 : vector<8x128xi1>, vector<8x128xf32>
    %525 = arith.addf %452, %524 : vector<8x128xf32>
    %c7_i32_147 = arith.constant 7 : i32
    %c7_i32_148 = arith.constant 7 : i32
    %526 = arith.subi %c7_i32_148, %c7_i32_147 : i32
    %527 = arith.index_cast %c7_i32_147 : i32 to index
    %c0_149 = arith.constant 0 : index
    %c0_150 = arith.constant 0 : index
    %528 = vector.load %arg17[%527, %c0_149, %c0_150] : memref<8x8x512xf32, #tpu.memory_space<vmem>>, vector<1x8x512xf32>
    %529 = vector.shape_cast %528 : vector<1x8x512xf32> to vector<8x512xf32>
    %c0_151 = arith.constant 0 : index
    %c0_152 = arith.constant 0 : index
    %530 = vector.load %arg5[%c0_151, %c0_152] : memref<128x512xf32, #tpu.memory_space<vmem>>, vector<128x512xf32>
    %cst_153 = arith.constant dense<0.000000e+00> : vector<8x512xf32>
    %531 = tpu.matmul %484, %530, %cst_153 {dimension_numbers = #tpu.dot_dimension_numbers<[1], [0], [0], [1], [0, 0, 1, 1], [], []>} : vector<8x128xf32>, vector<128x512xf32>, vector<8x512xf32> -> vector<8x512xf32>
    %532 = arith.addf %529, %531 : vector<8x512xf32>
    %533 = vector.extract_strided_slice %532 {offsets = [0, 0], sizes = [8, 128], strides = [1, 1]} : vector<8x512xf32> to vector<8x128xf32>
    %534 = arith.negf %533 : vector<8x128xf32>
    %535 = math.exp %534 : vector<8x128xf32>
    %cst_154 = arith.constant 1.000000e+00 : f32
    %536 = vector.broadcast %cst_154 : f32 to vector<8x128xf32>
    %537 = arith.addf %536, %535 : vector<8x128xf32>
    %538 = arith.divf %536, %537 : vector<8x128xf32>
    %539 = vector.extract_strided_slice %532 {offsets = [0, 128], sizes = [8, 128], strides = [1, 1]} : vector<8x512xf32> to vector<8x128xf32>
    %540 = arith.negf %539 : vector<8x128xf32>
    %541 = math.exp %540 : vector<8x128xf32>
    %cst_155 = arith.constant 1.000000e+00 : f32
    %542 = vector.broadcast %cst_155 : f32 to vector<8x128xf32>
    %543 = arith.addf %542, %541 : vector<8x128xf32>
    %544 = arith.divf %542, %543 : vector<8x128xf32>
    %545 = vector.extract_strided_slice %532 {offsets = [0, 256], sizes = [8, 128], strides = [1, 1]} : vector<8x512xf32> to vector<8x128xf32>
    %546 = math.tanh %545 : vector<8x128xf32>
    %547 = vector.extract_strided_slice %532 {offsets = [0, 384], sizes = [8, 128], strides = [1, 1]} : vector<8x512xf32> to vector<8x128xf32>
    %548 = arith.negf %547 : vector<8x128xf32>
    %549 = math.exp %548 : vector<8x128xf32>
    %cst_156 = arith.constant 1.000000e+00 : f32
    %550 = vector.broadcast %cst_156 : f32 to vector<8x128xf32>
    %551 = arith.addf %550, %549 : vector<8x128xf32>
    %552 = arith.divf %550, %551 : vector<8x128xf32>
    %553 = arith.mulf %544, %482 : vector<8x128xf32>
    %554 = arith.mulf %538, %546 : vector<8x128xf32>
    %555 = arith.addf %553, %554 : vector<8x128xf32>
    %556 = math.tanh %555 : vector<8x128xf32>
    %557 = arith.mulf %552, %556 : vector<8x128xf32>
    %558 = arith.index_cast %526 : i32 to index
    %c0_157 = arith.constant 0 : index
    %c0_158 = arith.constant 0 : index
    %559 = vector.load %arg18[%558, %c0_157, %c0_158] : memref<8x8x512xf32, #tpu.memory_space<vmem>>, vector<1x8x512xf32>
    %560 = vector.shape_cast %559 : vector<1x8x512xf32> to vector<8x512xf32>
    %c0_159 = arith.constant 0 : index
    %c0_160 = arith.constant 0 : index
    %561 = vector.load %arg6[%c0_159, %c0_160] : memref<128x512xf32, #tpu.memory_space<vmem>>, vector<128x512xf32>
    %cst_161 = arith.constant dense<0.000000e+00> : vector<8x512xf32>
    %562 = tpu.matmul %515, %561, %cst_161 {dimension_numbers = #tpu.dot_dimension_numbers<[1], [0], [0], [1], [0, 0, 1, 1], [], []>} : vector<8x128xf32>, vector<128x512xf32>, vector<8x512xf32> -> vector<8x512xf32>
    %563 = arith.addf %560, %562 : vector<8x512xf32>
    %564 = vector.extract_strided_slice %563 {offsets = [0, 0], sizes = [8, 128], strides = [1, 1]} : vector<8x512xf32> to vector<8x128xf32>
    %565 = arith.negf %564 : vector<8x128xf32>
    %566 = math.exp %565 : vector<8x128xf32>
    %cst_162 = arith.constant 1.000000e+00 : f32
    %567 = vector.broadcast %cst_162 : f32 to vector<8x128xf32>
    %568 = arith.addf %567, %566 : vector<8x128xf32>
    %569 = arith.divf %567, %568 : vector<8x128xf32>
    %570 = vector.extract_strided_slice %563 {offsets = [0, 128], sizes = [8, 128], strides = [1, 1]} : vector<8x512xf32> to vector<8x128xf32>
    %571 = arith.negf %570 : vector<8x128xf32>
    %572 = math.exp %571 : vector<8x128xf32>
    %cst_163 = arith.constant 1.000000e+00 : f32
    %573 = vector.broadcast %cst_163 : f32 to vector<8x128xf32>
    %574 = arith.addf %573, %572 : vector<8x128xf32>
    %575 = arith.divf %573, %574 : vector<8x128xf32>
    %576 = vector.extract_strided_slice %563 {offsets = [0, 256], sizes = [8, 128], strides = [1, 1]} : vector<8x512xf32> to vector<8x128xf32>
    %577 = math.tanh %576 : vector<8x128xf32>
    %578 = vector.extract_strided_slice %563 {offsets = [0, 384], sizes = [8, 128], strides = [1, 1]} : vector<8x512xf32> to vector<8x128xf32>
    %579 = arith.negf %578 : vector<8x128xf32>
    %580 = math.exp %579 : vector<8x128xf32>
    %cst_164 = arith.constant 1.000000e+00 : f32
    %581 = vector.broadcast %cst_164 : f32 to vector<8x128xf32>
    %582 = arith.addf %581, %580 : vector<8x128xf32>
    %583 = arith.divf %581, %582 : vector<8x128xf32>
    %584 = arith.mulf %575, %513 : vector<8x128xf32>
    %585 = arith.mulf %569, %577 : vector<8x128xf32>
    %586 = arith.addf %584, %585 : vector<8x128xf32>
    %587 = math.tanh %586 : vector<8x128xf32>
    %588 = arith.mulf %583, %587 : vector<8x128xf32>
    %589 = vector.broadcast %c7_i32_147 : i32 to vector<8x128xi32>
    %590 = arith.cmpi slt, %589, %13 : vector<8x128xi32>
    %cst_165 = arith.constant 0.000000e+00 : f32
    %591 = vector.broadcast %cst_165 : f32 to vector<8x128xf32>
    %592 = arith.select %590, %557, %591 : vector<8x128xi1>, vector<8x128xf32>
    %593 = arith.addf %520, %592 : vector<8x128xf32>
    %594 = vector.broadcast %526 : i32 to vector<8x128xi32>
    %595 = arith.cmpi slt, %594, %13 : vector<8x128xi32>
    %cst_166 = arith.constant 0.000000e+00 : f32
    %596 = vector.broadcast %cst_166 : f32 to vector<8x128xf32>
    %597 = arith.select %595, %588, %596 : vector<8x128xi1>, vector<8x128xf32>
    %598 = arith.addf %525, %597 : vector<8x128xf32>
    %c8_i32 = arith.constant 8 : i32
    %c0_167 = arith.constant 0 : index
    %c0_168 = arith.constant 0 : index
    %599 = vector.load %arg7[%c0_167, %c0_168] : memref<128x128xf32, #tpu.memory_space<vmem>>, vector<128x128xf32>
    %cst_169 = arith.constant dense<0.000000e+00> : vector<8x128xf32>
    %600 = tpu.matmul %593, %599, %cst_169 {dimension_numbers = #tpu.dot_dimension_numbers<[1], [0], [0], [1], [0, 0, 1, 1], [], []>} : vector<8x128xf32>, vector<128x128xf32>, vector<8x128xf32> -> vector<8x128xf32>
    %c0_170 = arith.constant 0 : index
    %c0_171 = arith.constant 0 : index
    %601 = vector.load %arg8[%c0_170, %c0_171] : memref<128x128xf32, #tpu.memory_space<vmem>>, vector<128x128xf32>
    %cst_172 = arith.constant dense<0.000000e+00> : vector<8x128xf32>
    %602 = tpu.matmul %598, %601, %cst_172 {dimension_numbers = #tpu.dot_dimension_numbers<[1], [0], [0], [1], [0, 0, 1, 1], [], []>} : vector<8x128xf32>, vector<128x128xf32>, vector<8x128xf32> -> vector<8x128xf32>
    %603 = arith.addf %600, %602 : vector<8x128xf32>
    %c0_173 = arith.constant 0 : index
    %c0_174 = arith.constant 0 : index
    %604 = vector.load %arg9[%c0_173, %c0_174] : memref<1x128xf32, #tpu.memory_space<vmem>>, vector<1x128xf32>
    %605 = vector.broadcast %604 : vector<1x128xf32> to vector<8x128xf32>
    %606 = arith.addf %603, %605 : vector<8x128xf32>
    %cst_175 = arith.constant 0.000000e+00 : f32
    %607 = vector.broadcast %cst_175 : f32 to vector<8x128xf32>
    %608 = arith.maximumf %606, %607 : vector<8x128xf32>
    %c0_176 = arith.constant 0 : index
    %c0_177 = arith.constant 0 : index
    %609 = vector.load %arg10[%c0_176, %c0_177] : memref<1x128xf32, #tpu.memory_space<vmem>>, vector<1x128xf32>
    %610 = vector.broadcast %609 : vector<1x128xf32> to vector<8x128xf32>
    %611 = arith.mulf %608, %610 : vector<8x128xf32>
    %c0_178 = arith.constant 0 : index
    %c0_179 = arith.constant 0 : index
    %612 = vector.load %arg11[%c0_178, %c0_179] : memref<1x128xf32, #tpu.memory_space<vmem>>, vector<1x128xf32>
    %613 = vector.broadcast %612 : vector<1x128xf32> to vector<8x128xf32>
    %614 = arith.addf %611, %613 : vector<8x128xf32>
    %615 = tpu.iota {dimensions = array<i32: 1>} : vector<1x128xi32>
    %c32_i32 = arith.constant 32 : i32
    %616 = vector.broadcast %c32_i32 : i32 to vector<1x128xi32>
    %617 = arith.cmpi slt, %615, %616 : vector<1x128xi32>
    %618 = arith.extui %617 : vector<1x128xi1> to vector<1x128xi32>
    %619 = arith.sitofp %618 : vector<1x128xi32> to vector<1x128xf32>
    %620 = vector.broadcast %619 : vector<1x128xf32> to vector<8x128xf32>
    %621 = arith.mulf %614, %620 : vector<8x128xf32>
    %cst_180 = arith.constant dense<0.000000e+00> : vector<8xf32>
    %622 = vector.multi_reduction <add>, %621, %cst_180 [1] : vector<8x128xf32> to vector<8xf32>
    %623 = vector.shape_cast %622 : vector<8xf32> to vector<8x1xf32>
    %cst_181 = arith.constant 3.125000e-02 : f32
    %624 = vector.broadcast %cst_181 : f32 to vector<8x1xf32>
    %625 = arith.mulf %623, %624 : vector<8x1xf32>
    %626 = vector.broadcast %625 : vector<8x1xf32> to vector<8x128xf32>
    %627 = arith.subf %614, %626 : vector<8x128xf32>
    %628 = vector.broadcast %619 : vector<1x128xf32> to vector<8x128xf32>
    %629 = arith.mulf %627, %628 : vector<8x128xf32>
    %630 = arith.mulf %629, %629 : vector<8x128xf32>
    %cst_182 = arith.constant dense<0.000000e+00> : vector<8xf32>
    %631 = vector.multi_reduction <add>, %630, %cst_182 [1] : vector<8x128xf32> to vector<8xf32>
    %632 = vector.shape_cast %631 : vector<8xf32> to vector<8x1xf32>
    %cst_183 = arith.constant 3.125000e-02 : f32
    %633 = vector.broadcast %cst_183 : f32 to vector<8x1xf32>
    %634 = arith.mulf %632, %633 : vector<8x1xf32>
    %cst_184 = arith.constant 9.99999974E-6 : f32
    %635 = vector.broadcast %cst_184 : f32 to vector<8x1xf32>
    %636 = arith.addf %634, %635 : vector<8x1xf32>
    %637 = math.rsqrt %636 : vector<8x1xf32>
    %638 = vector.broadcast %637 : vector<8x1xf32> to vector<8x128xf32>
    %639 = arith.mulf %629, %638 : vector<8x128xf32>
    %c0_185 = arith.constant 0 : index
    %c0_186 = arith.constant 0 : index
    %640 = vector.load %arg12[%c0_185, %c0_186] : memref<1x128xf32, #tpu.memory_space<vmem>>, vector<1x128xf32>
    %641 = vector.broadcast %640 : vector<1x128xf32> to vector<8x128xf32>
    %642 = arith.mulf %639, %641 : vector<8x128xf32>
    %c0_187 = arith.constant 0 : index
    %c0_188 = arith.constant 0 : index
    %643 = vector.load %arg13[%c0_187, %c0_188] : memref<1x128xf32, #tpu.memory_space<vmem>>, vector<1x128xf32>
    %644 = vector.broadcast %643 : vector<1x128xf32> to vector<8x128xf32>
    %645 = arith.addf %642, %644 : vector<8x128xf32>
    %c0_189 = arith.constant 0 : index
    %c0_190 = arith.constant 0 : index
    %646 = vector.load %arg14[%c0_189, %c0_190] : memref<128x1xf32, #tpu.memory_space<vmem>>, vector<128x1xf32>
    %cst_191 = arith.constant dense<0.000000e+00> : vector<8x1xf32>
    %647 = tpu.matmul %645, %646, %cst_191 {dimension_numbers = #tpu.dot_dimension_numbers<[1], [0], [0], [1], [0, 0, 1, 1], [], []>} : vector<8x128xf32>, vector<128x1xf32>, vector<8x1xf32> -> vector<8x1xf32>
    %c0_192 = arith.constant 0 : index
    %c0_193 = arith.constant 0 : index
    %648 = vector.load %arg15[%c0_192, %c0_193] : memref<1x1xf32, #tpu.memory_space<vmem>>, vector<1x1xf32>
    %649 = vector.broadcast %648 : vector<1x1xf32> to vector<8x1xf32>
    %650 = arith.addf %647, %649 : vector<8x1xf32>
    %c0_194 = arith.constant 0 : index
    %c0_195 = arith.constant 0 : index
    %651 = vector.load %arg16[%c0_194, %c0_195] : memref<8x1xf32, #tpu.memory_space<vmem>>, vector<8x1xf32>
    tpu.vector_store %arg16[%c0_194, %c0_195], %650 {strides = array<i32>} : memref<8x1xf32, #tpu.memory_space<vmem>>, vector<8x1xf32>,
    return
  }
  func.func @transform_0(%arg0: i32) -> (i32, i32, i32) {
    %c0_i32 = arith.constant 0 : i32
    %c0_i32_0 = arith.constant 0 : i32
    %c0_i32_1 = arith.constant 0 : i32
    return %c0_i32, %arg0, %c0_i32_0 : i32, i32, i32
  }
  func.func @transform_1(%arg0: i32) -> (i32, i32) {
    %c0_i32 = arith.constant 0 : i32
    %c0_i32_0 = arith.constant 0 : i32
    return %arg0, %c0_i32 : i32, i32
  }
  func.func @transform_2(%arg0: i32) -> (i32, i32) {
    %c0_i32 = arith.constant 0 : i32
    %c0_i32_0 = arith.constant 0 : i32
    %c0_i32_1 = arith.constant 0 : i32
    return %c0_i32, %c0_i32_0 : i32, i32
  }
  func.func @transform_3(%arg0: i32) -> (i32, i32) {
    %c0_i32 = arith.constant 0 : i32
    %c0_i32_0 = arith.constant 0 : i32
    %c0_i32_1 = arith.constant 0 : i32
    return %c0_i32, %c0_i32_0 : i32, i32
  }
  func.func @transform_4(%arg0: i32) -> (i32, i32) {
    %c0_i32 = arith.constant 0 : i32
    %c0_i32_0 = arith.constant 0 : i32
    %c0_i32_1 = arith.constant 0 : i32
    return %c0_i32, %c0_i32_0 : i32, i32
  }
  func.func @transform_5(%arg0: i32) -> (i32, i32) {
    %c0_i32 = arith.constant 0 : i32
    %c0_i32_0 = arith.constant 0 : i32
    %c0_i32_1 = arith.constant 0 : i32
    return %c0_i32, %c0_i32_0 : i32, i32
  }
  func.func @transform_6(%arg0: i32) -> (i32, i32) {
    %c0_i32 = arith.constant 0 : i32
    %c0_i32_0 = arith.constant 0 : i32
    %c0_i32_1 = arith.constant 0 : i32
    return %c0_i32, %c0_i32_0 : i32, i32
  }
  func.func @transform_7(%arg0: i32) -> (i32, i32) {
    %c0_i32 = arith.constant 0 : i32
    %c0_i32_0 = arith.constant 0 : i32
    %c0_i32_1 = arith.constant 0 : i32
    return %c0_i32, %c0_i32_0 : i32, i32
  }
  func.func @transform_8(%arg0: i32) -> (i32, i32) {
    %c0_i32 = arith.constant 0 : i32
    %c0_i32_0 = arith.constant 0 : i32
    %c0_i32_1 = arith.constant 0 : i32
    return %c0_i32, %c0_i32_0 : i32, i32
  }
  func.func @transform_9(%arg0: i32) -> (i32, i32) {
    %c0_i32 = arith.constant 0 : i32
    %c0_i32_0 = arith.constant 0 : i32
    %c0_i32_1 = arith.constant 0 : i32
    return %c0_i32, %c0_i32_0 : i32, i32
  }
  func.func @transform_10(%arg0: i32) -> (i32, i32) {
    %c0_i32 = arith.constant 0 : i32
    %c0_i32_0 = arith.constant 0 : i32
    %c0_i32_1 = arith.constant 0 : i32
    return %c0_i32, %c0_i32_0 : i32, i32
  }
  func.func @transform_11(%arg0: i32) -> (i32, i32) {
    %c0_i32 = arith.constant 0 : i32
    %c0_i32_0 = arith.constant 0 : i32
    %c0_i32_1 = arith.constant 0 : i32
    return %c0_i32, %c0_i32_0 : i32, i32
  }
  func.func @transform_12(%arg0: i32) -> (i32, i32) {
    %c0_i32 = arith.constant 0 : i32
    %c0_i32_0 = arith.constant 0 : i32
    %c0_i32_1 = arith.constant 0 : i32
    return %c0_i32, %c0_i32_0 : i32, i32
  }
  func.func @transform_13(%arg0: i32) -> (i32, i32) {
    %c0_i32 = arith.constant 0 : i32
    %c0_i32_0 = arith.constant 0 : i32
    %c0_i32_1 = arith.constant 0 : i32
    return %c0_i32, %c0_i32_0 : i32, i32
  }
  func.func @transform_14(%arg0: i32) -> (i32, i32) {
    %c0_i32 = arith.constant 0 : i32
    %c0_i32_0 = arith.constant 0 : i32
    %c0_i32_1 = arith.constant 0 : i32
    return %c0_i32, %c0_i32_0 : i32, i32
  }
  func.func @transform_15(%arg0: i32) -> (i32, i32) {
    %c0_i32 = arith.constant 0 : i32
    %c0_i32_0 = arith.constant 0 : i32
    return %arg0, %c0_i32 : i32, i32
  }
}

</mosaic_0001>

<llo_original>
// kernel: deepsets_lstm_forward.1
$region0: #{deepsets_lstm_forward.1}
  #allocation0 [shape = 'u32[]', space=smem, size = 0x4, offset = 0x4, fixed_abs, tag = 'smem constant byte address 0x4 - core index']
  #allocation1 [shape = 'u32[144,128]{1,0:T(1,128)}', space=vmem, size = 0x12000, scoped, tag = 'internal scratch']
  #allocation2 [shape = 'f32[8,8,512]{2,1,0:T(8,128)}', space=vmem, size = 0x20000, scoped, tag = 'scratch operand']
  #allocation3 [shape = 'f32[8,8,512]{2,1,0:T(8,128)}', space=vmem, size = 0x20000, scoped, tag = 'scratch operand']
  #allocation4 [shape = 'f32[1,1]{1,0:T(1,128)S(1)}', space=vmem, size = 0x200, scoped, tag = 'scoped memory for deepsets_lstm_forward.1']
  %s0 = inlined_call_operand.vmem [shape: f32[8,8,128], index: 0, kind: input, shape index: {}]
  %s1 = inlined_call_operand.vmem [shape: s32[8,128], index: 1, kind: input, shape index: {}]
  %s2 = inlined_call_operand.vmem [shape: f32[128,1024], index: 2, kind: input, shape index: {}]
  %s3 = inlined_call_operand.vmem [shape: f32[1,1024], index: 3, kind: input, shape index: {}]
  %s4 = inlined_call_operand.vmem [shape: f32[128,512], index: 4, kind: input, shape index: {}]
  %s5 = inlined_call_operand.vmem [shape: f32[128,512], index: 5, kind: input, shape index: {}]
  %s6 = inlined_call_operand.vmem [shape: f32[128,128], index: 6, kind: input, shape index: {}]
  %s7 = inlined_call_operand.vmem [shape: f32[128,128], index: 7, kind: input, shape index: {}]
  %s8 = inlined_call_operand.vmem [shape: f32[1,128], index: 8, kind: input, shape index: {}]
  %s9 = inlined_call_operand.vmem [shape: f32[1,128], index: 9, kind: input, shape index: {}]
  %s10 = inlined_call_operand.vmem [shape: f32[1,128], index: 10, kind: input, shape index: {}]
  %s11 = inlined_call_operand.vmem [shape: f32[1,128], index: 11, kind: input, shape index: {}]
  %s12 = inlined_call_operand.vmem [shape: f32[1,128], index: 12, kind: input, shape index: {}]
  %s13 = inlined_call_operand.vmem [shape: f32[128,1], index: 13, kind: input, shape index: {}]
  %s14 = inlined_call_operand.<no memory space> [shape: f32[1,1], index: 14, kind: input, shape index: {}]
  %s15 = inlined_call_operand.vmem [shape: f32[8,1], index: 15, kind: output, shape index: {}]
  %s16 = sld [smem:[#allocation0]]
  $region70: #{deepsets_lstm_forward.1} parent=0
    _
  %s18 = ssub.s32 1, %s16
  %s19 = scalar_select 0, %s18, %s16
  %v20 = vstv %s14
  %21 = vst [vmem:[#allocation4] sm:$0x1] %v20
  // Predicated region
  $region2: #{deepsets_lstm_forward.1} parent=0 // pred_check
    _
  $region3: #{deepsets_lstm_forward.1} parent=0 // pred_check_branch
    %23 = sbr.rel (0) target = $region5
  $region4: #{deepsets_lstm_forward.1} parent=0 // pred_region
    _
  $region5: #{deepsets_lstm_forward.1} parent=0 // pred_fallthru
    _
  // Predicated region
  $region6: #{deepsets_lstm_forward.1} parent=0 // pred_check
    _
  $region7: #{deepsets_lstm_forward.1} parent=0 // pred_check_branch
    %25 = sbr.rel (0) target = $region9
  $region8: #{deepsets_lstm_forward.1} parent=0 // pred_region
    _
  $region9: #{deepsets_lstm_forward.1} parent=0 // pred_fallthru
    _
  // Predicated region
  $region10: #{deepsets_lstm_forward.1} parent=0 // pred_check
    _
  $region11: #{deepsets_lstm_forward.1} parent=0 // pred_check_branch
    %27 = sbr.rel (0) target = $region13
  $region12: #{deepsets_lstm_forward.1} parent=0 // pred_region
    _
  $region13: #{deepsets_lstm_forward.1} parent=0 // pred_fallthru
    _
  // Predicated region
  $region14: #{deepsets_lstm_forward.1} parent=0 // pred_check
    _
  $region15: #{deepsets_lstm_forward.1} parent=0 // pred_check_branch
    %29 = sbr.rel (0) target = $region17
  $region16: #{deepsets_lstm_forward.1} parent=0 // pred_region
    _
  $region17: #{deepsets_lstm_forward.1} parent=0 // pred_fallthru
    _
  // Predicated region
  $region18: #{deepsets_lstm_forward.1} parent=0 // pred_check
    _
  $region19: #{deepsets_lstm_forward.1} parent=0 // pred_check_branch
    %31 = sbr.rel (0) target = $region21
  $region20: #{deepsets_lstm_forward.1} parent=0 // pred_region
    _
  $region21: #{deepsets_lstm_forward.1} parent=0 // pred_fallthru
    _
  // Predicated region
  $region22: #{deepsets_lstm_forward.1} parent=0 // pred_check
    _
  $region23: #{deepsets_lstm_forward.1} parent=0 // pred_check_branch
    %33 = sbr.rel (0) target = $region25
  $region24: #{deepsets_lstm_forward.1} parent=0 // pred_region
    _
  $region25: #{deepsets_lstm_forward.1} parent=0 // pred_fallthru
    _
  // Predicated region
  $region26: #{deepsets_lstm_forward.1} parent=0 // pred_check
    _
  $region27: #{deepsets_lstm_forward.1} parent=0 // pred_check_branch
    %35 = sbr.rel (0) target = $region29
  $region28: #{deepsets_lstm_forward.1} parent=0 // pred_region
    _
  $region29: #{deepsets_lstm_forward.1} parent=0 // pred_fallthru
    _
  // Predicated region
  $region30: #{deepsets_lstm_forward.1} parent=0 // pred_check
    _
  $region31: #{deepsets_lstm_forward.1} parent=0 // pred_check_branch
    %37 = sbr.rel (0) target = $region33
  $region32: #{deepsets_lstm_forward.1} parent=0 // pred_region
    _
  $region33: #{deepsets_lstm_forward.1} parent=0 // pred_fallthru
    _
  // Predicated region
  $region34: #{deepsets_lstm_forward.1} parent=0 // pred_check
    _
  $region35: #{deepsets_lstm_forward.1} parent=0 // pred_check_branch
    %39 = sbr.rel (0) target = $region37
  $region36: #{deepsets_lstm_forward.1} parent=0 // pred_region
    _
  $region37: #{deepsets_lstm_forward.1} parent=0 // pred_fallthru
    _
  // Predicated region
  $region38: #{deepsets_lstm_forward.1} parent=0 // pred_check
    _
  $region39: #{deepsets_lstm_forward.1} parent=0 // pred_check_branch
    %41 = sbr.rel (0) target = $region41
  $region40: #{deepsets_lstm_forward.1} parent=0 // pred_region
    _
  $region41: #{deepsets_lstm_forward.1} parent=0 // pred_fallthru
    _
  // Predicated region
  $region42: #{deepsets_lstm_forward.1} parent=0 // pred_check
    _
  $region43: #{deepsets_lstm_forward.1} parent=0 // pred_check_branch
    %43 = sbr.rel (0) target = $region45
  $region44: #{deepsets_lstm_forward.1} parent=0 // pred_region
    _
  $region45: #{deepsets_lstm_forward.1} parent=0 // pred_fallthru
    _
  // Predicated region
  $region46: #{deepsets_lstm_forward.1} parent=0 // pred_check
    _
  $region47: #{deepsets_lstm_forward.1} parent=0 // pred_check_branch
    %45 = sbr.rel (0) target = $region49
  $region48: #{deepsets_lstm_forward.1} parent=0 // pred_region
    _
  $region49: #{deepsets_lstm_forward.1} parent=0 // pred_fallthru
    _
  // Predicated region
  $region50: #{deepsets_lstm_forward.1} parent=0 // pred_check
    _
  $region51: #{deepsets_lstm_forward.1} parent=0 // pred_check_branch
    %47 = sbr.rel (0) target = $region53
  $region52: #{deepsets_lstm_forward.1} parent=0 // pred_region
    _
  $region53: #{deepsets_lstm_forward.1} parent=0 // pred_fallthru
    _
  // Predicated region
  $region54: #{deepsets_lstm_forward.1} parent=0 // pred_check
    _
  $region55: #{deepsets_lstm_forward.1} parent=0 // pred_check_branch
    %49 = sbr.rel (0) target = $region57
  $region56: #{deepsets_lstm_forward.1} parent=0 // pred_region
    _
  $region57: #{deepsets_lstm_forward.1} parent=0 // pred_fallthru
    _
  // Predicated region
  $region58: #{deepsets_lstm_forward.1} parent=0 // pred_check
    _
  $region59: #{deepsets_lstm_forward.1} parent=0 // pred_check_branch
    %51 = sbr.rel (0) target = $region61
  $region60: #{deepsets_lstm_forward.1} parent=0 // pred_region
    _
  $region61: #{deepsets_lstm_forward.1} parent=0 // pred_fallthru
    _
  %v52 = vld [vmem:[%s0] sm:$0xff]
  %v53 = vld [vmem:[%s0 + $0x8] sm:$0xff]
  %v54 = vld [vmem:[%s0 + $0x10] sm:$0xff]
  %v55 = vld [vmem:[%s0 + $0x18] sm:$0xff]
  %v56 = vld [vmem:[%s0 + $0x20] sm:$0xff]
  %v57 = vld [vmem:[%s0 + $0x28] sm:$0xff]
  %v58 = vld [vmem:[%s0 + $0x30] sm:$0xff]
  %v59 = vld [vmem:[%s0 + $0x38] sm:$0xff]
  %v60 = vld [vmem:[%s2] sm:$0xff]
  %v61 = vld [vmem:[%s2 + $0x8] sm:$0xff]
  %v62 = vld [vmem:[%s2 + $0x10] sm:$0xff]
  %v63 = vld [vmem:[%s2 + $0x18] sm:$0xff]
  %v64 = vld [vmem:[%s2 + $0x20] sm:$0xff]
  %v65 = vld [vmem:[%s2 + $0x28] sm:$0xff]
  %v66 = vld [vmem:[%s2 + $0x30] sm:$0xff]
  %v67 = vld [vmem:[%s2 + $0x38] sm:$0xff]
  %v68 = vld [vmem:[%s2 + $0x40] sm:$0xff]
  %v69 = vld [vmem:[%s2 + $0x48] sm:$0xff]
  %v70 = vld [vmem:[%s2 + $0x50] sm:$0xff]
  %v71 = vld [vmem:[%s2 + $0x58] sm:$0xff]
  %v72 = vld [vmem:[%s2 + $0x60] sm:$0xff]
  %v73 = vld [vmem:[%s2 + $0x68] sm:$0xff]
  %v74 = vld [vmem:[%s2 + $0x70] sm:$0xff]
  %v75 = vld [vmem:[%s2 + $0x78] sm:$0xff]
  %v76 = vld [vmem:[%s2 + $0x80] sm:$0xff]
  %v77 = vld [vmem:[%s2 + $0x88] sm:$0xff]
  %v78 = vld [vmem:[%s2 + $0x90] sm:$0xff]
  %v79 = vld [vmem:[%s2 + $0x98] sm:$0xff]
  %v80 = vld [vmem:[%s2 + $0xa0] sm:$0xff]
  %v81 = vld [vmem:[%s2 + $0xa8] sm:$0xff]
  %v82 = vld [vmem:[%s2 + $0xb0] sm:$0xff]
  %v83 = vld [vmem:[%s2 + $0xb8] sm:$0xff]
  %v84 = vld [vmem:[%s2 + $0xc0] sm:$0xff]
  %v85 = vld [vmem:[%s2 + $0xc8] sm:$0xff]
  %v86 = vld [vmem:[%s2 + $0xd0] sm:$0xff]
  %v87 = vld [vmem:[%s2 + $0xd8] sm:$0xff]
  %v88 = vld [vmem:[%s2 + $0xe0] sm:$0xff]
  %v89 = vld [vmem:[%s2 + $0xe8] sm:$0xff]
  %v90 = vld [vmem:[%s2 + $0xf0] sm:$0xff]
  %v91 = vld [vmem:[%s2 + $0xf8] sm:$0xff]
  %v92 = vld [vmem:[%s2 + $0x100] sm:$0xff]
  %v93 = vld [vmem:[%s2 + $0x108] sm:$0xff]
  %v94 = vld [vmem:[%s2 + $0x110] sm:$0xff]
  %v95 = vld [vmem:[%s2 + $0x118] sm:$0xff]
  %v96 = vld [vmem:[%s2 + $0x120] sm:$0xff]
  %v97 = vld [vmem:[%s2 + $0x128] sm:$0xff]
  %v98 = vld [vmem:[%s2 + $0x130] sm:$0xff]
  %v99 = vld [vmem:[%s2 + $0x138] sm:$0xff]
  %v100 = vld [vmem:[%s2 + $0x140] sm:$0xff]
  %v101 = vld [vmem:[%s2 + $0x148] sm:$0xff]
  %v102 = vld [vmem:[%s2 + $0x150] sm:$0xff]
  %v103 = vld [vmem:[%s2 + $0x158] sm:$0xff]
  %v104 = vld [vmem:[%s2 + $0x160] sm:$0xff]
  %v105 = vld [vmem:[%s2 + $0x168] sm:$0xff]
  %v106 = vld [vmem:[%s2 + $0x170] sm:$0xff]
  %v107 = vld [vmem:[%s2 + $0x178] sm:$0xff]
  %v108 = vld [vmem:[%s2 + $0x180] sm:$0xff]
  %v109 = vld [vmem:[%s2 + $0x188] sm:$0xff]
  %v110 = vld [vmem:[%s2 + $0x190] sm:$0xff]
  %v111 = vld [vmem:[%s2 + $0x198] sm:$0xff]
  %v112 = vld [vmem:[%s2 + $0x1a0] sm:$0xff]
  %v113 = vld [vmem:[%s2 + $0x1a8] sm:$0xff]
  %v114 = vld [vmem:[%s2 + $0x1b0] sm:$0xff]
  %v115 = vld [vmem:[%s2 + $0x1b8] sm:$0xff]
  %v116 = vld [vmem:[%s2 + $0x1c0] sm:$0xff]
  %v117 = vld [vmem:[%s2 + $0x1c8] sm:$0xff]
  %v118 = vld [vmem:[%s2 + $0x1d0] sm:$0xff]
  %v119 = vld [vmem:[%s2 + $0x1d8] sm:$0xff]
  %v120 = vld [vmem:[%s2 + $0x1e0] sm:$0xff]
  %v121 = vld [vmem:[%s2 + $0x1e8] sm:$0xff]
  %v122 = vld [vmem:[%s2 + $0x1f0] sm:$0xff]
  %v123 = vld [vmem:[%s2 + $0x1f8] sm:$0xff]
  %v124 = vld [vmem:[%s2 + $0x200] sm:$0xff]
  %v125 = vld [vmem:[%s2 + $0x208] sm:$0xff]
  %v126 = vld [vmem:[%s2 + $0x210] sm:$0xff]
  %v127 = vld [vmem:[%s2 + $0x218] sm:$0xff]
  %v128 = vld [vmem:[%s2 + $0x220] sm:$0xff]
  %v129 = vld [vmem:[%s2 + $0x228] sm:$0xff]
  %v130 = vld [vmem:[%s2 + $0x230] sm:$0xff]
  %v131 = vld [vmem:[%s2 + $0x238] sm:$0xff]
  %v132 = vld [vmem:[%s2 + $0x240] sm:$0xff]
  %v133 = vld [vmem:[%s2 + $0x248] sm:$0xff]
  %v134 = vld [vmem:[%s2 + $0x250] sm:$0xff]
  %v135 = vld [vmem:[%s2 + $0x258] sm:$0xff]
  %v136 = vld [vmem:[%s2 + $0x260] sm:$0xff]
  %v137 = vld [vmem:[%s2 + $0x268] sm:$0xff]
  %v138 = vld [vmem:[%s2 + $0x270] sm:$0xff]
  %v139 = vld [vmem:[%s2 + $0x278] sm:$0xff]
  %v140 = vld [vmem:[%s2 + $0x280] sm:$0xff]
  %v141 = vld [vmem:[%s2 + $0x288] sm:$0xff]
  %v142 = vld [vmem:[%s2 + $0x290] sm:$0xff]
  %v143 = vld [vmem:[%s2 + $0x298] sm:$0xff]
  %v144 = vld [vmem:[%s2 + $0x2a0] sm:$0xff]
  %v145 = vld [vmem:[%s2 + $0x2a8] sm:$0xff]
  %v146 = vld [vmem:[%s2 + $0x2b0] sm:$0xff]
  %v147 = vld [vmem:[%s2 + $0x2b8] sm:$0xff]
  %v148 = vld [vmem:[%s2 + $0x2c0] sm:$0xff]
  %v149 = vld [vmem:[%s2 + $0x2c8] sm:$0xff]
  %v150 = vld [vmem:[%s2 + $0x2d0] sm:$0xff]
  %v151 = vld [vmem:[%s2 + $0x2d8] sm:$0xff]
  %v152 = vld [vmem:[%s2 + $0x2e0] sm:$0xff]
  %v153 = vld [vmem:[%s2 + $0x2e8] sm:$0xff]
  %v154 = vld [vmem:[%s2 + $0x2f0] sm:$0xff]
  %v155 = vld [vmem:[%s2 + $0x2f8] sm:$0xff]
  %v156 = vld [vmem:[%s2 + $0x300] sm:$0xff]
  %v157 = vld [vmem:[%s2 + $0x308] sm:$0xff]
  %v158 = vld [vmem:[%s2 + $0x310] sm:$0xff]
  %v159 = vld [vmem:[%s2 + $0x318] sm:$0xff]
  %v160 = vld [vmem:[%s2 + $0x320] sm:$0xff]
  %v161 = vld [vmem:[%s2 + $0x328] sm:$0xff]
  %v162 = vld [vmem:[%s2 + $0x330] sm:$0xff]
  %v163 = vld [vmem:[%s2 + $0x338] sm:$0xff]
  %v164 = vld [vmem:[%s2 + $0x340] sm:$0xff]
  %v165 = vld [vmem:[%s2 + $0x348] sm:$0xff]
  %v166 = vld [vmem:[%s2 + $0x350] sm:$0xff]
  %v167 = vld [vmem:[%s2 + $0x358] sm:$0xff]
  %v168 = vld [vmem:[%s2 + $0x360] sm:$0xff]
  %v169 = vld [vmem:[%s2 + $0x368] sm:$0xff]
  %v170 = vld [vmem:[%s2 + $0x370] sm:$0xff]
  %v171 = vld [vmem:[%s2 + $0x378] sm:$0xff]
  %v172 = vld [vmem:[%s2 + $0x380] sm:$0xff]
  %v173 = vld [vmem:[%s2 + $0x388] sm:$0xff]
  %v174 = vld [vmem:[%s2 + $0x390] sm:$0xff]
  %v175 = vld [vmem:[%s2 + $0x398] sm:$0xff]
  %v176 = vld [vmem:[%s2 + $0x3a0] sm:$0xff]
  %v177 = vld [vmem:[%s2 + $0x3a8] sm:$0xff]
  %v178 = vld [vmem:[%s2 + $0x3b0] sm:$0xff]
  %v179 = vld [vmem:[%s2 + $0x3b8] sm:$0xff]
  %v180 = vld [vmem:[%s2 + $0x3c0] sm:$0xff]
  %v181 = vld [vmem:[%s2 + $0x3c8] sm:$0xff]
  %v182 = vld [vmem:[%s2 + $0x3d0] sm:$0xff]
  %v183 = vld [vmem:[%s2 + $0x3d8] sm:$0xff]
  %v184 = vld [vmem:[%s2 + $0x3e0] sm:$0xff]
  %v185 = vld [vmem:[%s2 + $0x3e8] sm:$0xff]
  %v186 = vld [vmem:[%s2 + $0x3f0] sm:$0xff]
  %v187 = vld [vmem:[%s2 + $0x3f8] sm:$0xff]
  %v188 = vld [vmem:[%s3] sm:$0xff]
  %v190 = vlaneseq
  %v191 = vshrl.u32 %v190, 7
  %v192 = vsub.s32 0, %v191
  %v193 = vrot.slane %v188, %v192
  %v194 = vlaneseq
  %v195 = vshrl.u32 %v194, 7
  %v196 = vsub.s32 1, %v195
  %v197 = vrot.slane %v188, %v196
  %v198 = vlaneseq
  %v199 = vshrl.u32 %v198, 7
  %v200 = vsub.s32 2, %v199
  %v201 = vrot.slane %v188, %v200
  %v202 = vlaneseq
  %v203 = vshrl.u32 %v202, 7
  %v204 = vsub.s32 3, %v203
  %v205 = vrot.slane %v188, %v204
  %v206 = vlaneseq
  %v207 = vshrl.u32 %v206, 7
  %v208 = vsub.s32 4, %v207
  %v209 = vrot.slane %v188, %v208
  %v210 = vlaneseq
  %v211 = vshrl.u32 %v210, 7
  %v212 = vsub.s32 5, %v211
  %v213 = vrot.slane %v188, %v212
  %v214 = vlaneseq
  %v215 = vshrl.u32 %v214, 7
  %v216 = vsub.s32 6, %v215
  %v217 = vrot.slane %v188, %v216
  %v218 = vlaneseq
  %v219 = vshrl.u32 %v218, 7
  %v220 = vsub.s32 7, %v219
  %v221 = vrot.slane %v188, %v220
  %230 = vmatprep.subr.mxu0 %v61
  %231 = vmatpush1.msra.mxu0 %v60
  %232 = vmatprep.subr.mxu0 %v69
  %233 = vmatpush1.msra.mxu0 %v68
  %234 = vmatprep.subr.mxu0 %v77
  %235 = vmatpush1.msra.mxu0 %v76
  %236 = vmatprep.subr.mxu0 %v85
  %237 = vmatpush1.msra.mxu0 %v84
  %238 = vmatprep.subr.mxu0 %v93
  %239 = vmatpush1.msra.mxu0 %v92
  %240 = vmatprep.subr.mxu0 %v101
  %241 = vmatpush1.msra.mxu0 %v100
  %242 = vmatprep.subr.mxu0 %v109
  %243 = vmatpush1.msra.mxu0 %v108
  %244 = vmatprep.subr.mxu0 %v117
  %245 = vmatpush1.msra.mxu0 %v116
  %246 = vmatprep.subr.mxu0 %v125
  %247 = vmatpush1.msra.mxu0 %v124
  %248 = vmatprep.subr.mxu0 %v133
  %249 = vmatpush1.msra.mxu0 %v132
  %250 = vmatprep.subr.mxu0 %v141
  %251 = vmatpush1.msra.mxu0 %v140
  %252 = vmatprep.subr.mxu0 %v149
  %253 = vmatpush1.msra.mxu0 %v148
  %254 = vmatprep.subr.mxu0 %v157
  %255 = vmatpush1.msra.mxu0 %v156
  %256 = vmatprep.subr.mxu0 %v165
  %257 = vmatpush1.msra.mxu0 %v164
  %258 = vmatprep.subr.mxu0 %v173
  %259 = vmatpush1.msra.mxu0 %v172
  %260 = vmatprep.subr.mxu0 %v181
  %261 = vmatpush1.msra.mxu0 %v180
  %262 = vmatprep.subr.mxu0 0.0
  %263 = vmatpush1.msra.mxu0 0.0
  %264 = vmatprep.subr.mxu0 0.0
  %265 = vmatpush1.msra.mxu0 0.0
  %266 = vmatprep.subr.mxu0 0.0
  %267 = vmatpush1.msra.mxu0 0.0
  %268 = vmatprep.subr.mxu0 0.0
  %269 = vmatpush1.msra.mxu0 0.0
  %270 = vmatprep.subr.mxu0 0.0
  %271 = vmatpush1.msra.mxu0 0.0
  %272 = vmatprep.subr.mxu0 0.0
  %273 = vmatpush1.msra.mxu0 0.0
  %274 = vmatprep.subr.mxu0 0.0
  %275 = vmatpush1.msra.mxu0 0.0
  %276 = vmatprep.subr.mxu0 0.0
  %277 = vmatpush1.msra.mxu0 0.0
  %278 = vmatprep.subr.mxu0 0.0
  %279 = vmatpush1.msra.mxu0 0.0
  %280 = vmatprep.subr.mxu0 0.0
  %281 = vmatpush1.msra.mxu0 0.0
  %282 = vmatprep.subr.mxu0 0.0
  %283 = vmatpush1.msra.mxu0 0.0
  %284 = vmatprep.subr.mxu0 0.0
  %285 = vmatpush1.msra.mxu0 0.0
  %286 = vmatprep.subr.mxu0 0.0
  %287 = vmatpush1.msra.mxu0 0.0
  %288 = vmatprep.subr.mxu0 0.0
  %289 = vmatpush1.msra.mxu0 0.0
  %290 = vmatprep.subr.mxu0 0.0
  %291 = vmatpush1.msra.mxu0 0.0
  %292 = vmatprep.subr.mxu0 0.0
  %293 = vmatpush1.msra.mxu0 0.0
  %294 = vmatprep.mubr.f32.mxu0 0.0
  %295 = vmatmul.mubr.f32.gmra.mrb[0].mxu0 %v52
  %v296 = vpop.f32.mrb[0].mxu0
  %v297 = vadd.f32 %v193, %v296
  %v298 = vpop.f32.mrb[0].mxu0
  %v299 = vadd.f32 %v197, %v298
  %300 = vmatprep.mubr.f32.mxu0 0.0
  %301 = vmatmul.mubr.f32.gmra.mrb[0].mxu0 %v53
  %v302 = vpop.f32.mrb[0].mxu0
  %v303 = vadd.f32 %v193, %v302
  %v304 = vpop.f32.mrb[0].mxu0
  %v305 = vadd.f32 %v197, %v304
  %306 = vmatprep.mubr.f32.mxu0 0.0
  %307 = vmatmul.mubr.f32.gmra.mrb[0].mxu0 %v54
  %v308 = vpop.f32.mrb[0].mxu0
  %v309 = vadd.f32 %v193, %v308
  %v310 = vpop.f32.mrb[0].mxu0
  %v311 = vadd.f32 %v197, %v310
  %312 = vmatprep.mubr.f32.mxu0 0.0
  %313 = vmatmul.mubr.f32.gmra.mrb[0].mxu0 %v55
  %v314 = vpop.f32.mrb[0].mxu0
  %v315 = vadd.f32 %v193, %v314
  %v316 = vpop.f32.mrb[0].mxu0
  %v317 = vadd.f32 %v197, %v316
  %318 = vmatprep.mubr.f32.mxu0 0.0
  %319 = vmatmul.mubr.f32.gmra.mrb[0].mxu0 %v56
  %v320 = vpop.f32.mrb[0].mxu0
  %v321 = vadd.f32 %v193, %v320
  %v322 = vpop.f32.mrb[0].mxu0
  %v323 = vadd.f32 %v197, %v322
  %324 = vmatprep.mubr.f32.mxu0 0.0
  %325 = vmatmul.mubr.f32.gmra.mrb[0].mxu0 %v57
  %v326 = vpop.f32.mrb[0].mxu0
  %v327 = vadd.f32 %v193, %v326
  %v328 = vpop.f32.mrb[0].mxu0
  %v329 = vadd.f32 %v197, %v328
  %330 = vmatprep.mubr.f32.mxu0 0.0
  %331 = vmatmul.mubr.f32.gmra.mrb[0].mxu0 %v58
  %v332 = vpop.f32.mrb[0].mxu0
  %v333 = vadd.f32 %v193, %v332
  %v334 = vpop.f32.mrb[0].mxu0
  %v335 = vadd.f32 %v197, %v334
  %336 = vmatprep.mubr.f32.mxu0 0.0
  %337 = vmatmul.mubr.f32.gmra.mrb[0].mxu0 %v59
  %v338 = vpop.f32.mrb[0].mxu0
  %v339 = vadd.f32 %v193, %v338
  %v340 = vpop.f32.mrb[0].mxu0
  %v341 = vadd.f32 %v197, %v340
  %342 = vdwg.mxu0
  %343 = vmatprep.subr.mxu0 %v63
  %344 = vmatpush1.msra.mxu0 %v62
  %345 = vmatprep.subr.mxu0 %v71
  %346 = vmatpush1.msra.mxu0 %v70
  %347 = vmatprep.subr.mxu0 %v79
  %348 = vmatpush1.msra.mxu0 %v78
  %349 = vmatprep.subr.mxu0 %v87
  %350 = vmatpush1.msra.mxu0 %v86
  %351 = vmatprep.subr.mxu0 %v95
  %352 = vmatpush1.msra.mxu0 %v94
  %353 = vmatprep.subr.mxu0 %v103
  %354 = vmatpush1.msra.mxu0 %v102
  %355 = vmatprep.subr.mxu0 %v111
  %356 = vmatpush1.msra.mxu0 %v110
  %357 = vmatprep.subr.mxu0 %v119
  %358 = vmatpush1.msra.mxu0 %v118
  %359 = vmatprep.subr.mxu0 %v127
  %360 = vmatpush1.msra.mxu0 %v126
  %361 = vmatprep.subr.mxu0 %v135
  %362 = vmatpush1.msra.mxu0 %v134
  %363 = vmatprep.subr.mxu0 %v143
  %364 = vmatpush1.msra.mxu0 %v142
  %365 = vmatprep.subr.mxu0 %v151
  %366 = vmatpush1.msra.mxu0 %v150
  %367 = vmatprep.subr.mxu0 %v159
  %368 = vmatpush1.msra.mxu0 %v158
  %369 = vmatprep.subr.mxu0 %v167
  %370 = vmatpush1.msra.mxu0 %v166
  %371 = vmatprep.subr.mxu0 %v175
  %372 = vmatpush1.msra.mxu0 %v174
  %373 = vmatprep.subr.mxu0 %v183
  %374 = vmatpush1.msra.mxu0 %v182
  %375 = vmatprep.subr.mxu0 0.0
  %376 = vmatpush1.msra.mxu0 0.0
  %377 = vmatprep.subr.mxu0 0.0
  %378 = vmatpush1.msra.mxu0 0.0
  %379 = vmatprep.subr.mxu0 0.0
  %380 = vmatpush1.msra.mxu0 0.0
  %381 = vmatprep.subr.mxu0 0.0
  %382 = vmatpush1.msra.mxu0 0.0
  %383 = vmatprep.subr.mxu0 0.0
  %384 = vmatpush1.msra.mxu0 0.0
  %385 = vmatprep.subr.mxu0 0.0
  %386 = vmatpush1.msra.mxu0 0.0
  %387 = vmatprep.subr.mxu0 0.0
  %388 = vmatpush1.msra.mxu0 0.0
  %389 = vmatprep.subr.mxu0 0.0
  %390 = vmatpush1.msra.mxu0 0.0
  %391 = vmatprep.subr.mxu0 0.0
  %392 = vmatpush1.msra.mxu0 0.0
  %393 = vmatprep.subr.mxu0 0.0
  %394 = vmatpush1.msra.mxu0 0.0
  %395 = vmatprep.subr.mxu0 0.0
  %396 = vmatpush1.msra.mxu0 0.0
  %397 = vmatprep.subr.mxu0 0.0
  %398 = vmatpush1.msra.mxu0 0.0
  %399 = vmatprep.subr.mxu0 0.0
  %400 = vmatpush1.msra.mxu0 0.0
  %401 = vmatprep.subr.mxu0 0.0
  %402 = vmatpush1.msra.mxu0 0.0
  %403 = vmatprep.subr.mxu0 0.0
  %404 = vmatpush1.msra.mxu0 0.0
  %405 = vmatprep.subr.mxu0 0.0
  %406 = vmatpush1.msra.mxu0 0.0
  %407 = vmatprep.mubr.f32.mxu0 0.0
  %408 = vmatmul.mubr.f32.gmra.mrb[0].mxu0 %v52
  %v409 = vpop.f32.mrb[0].mxu0
  %v410 = vadd.f32 %v201, %v409
  %v411 = vpop.f32.mrb[0].mxu0
  %v412 = vadd.f32 %v205, %v411
  %413 = vmatprep.mubr.f32.mxu0 0.0
  %414 = vmatmul.mubr.f32.gmra.mrb[0].mxu0 %v53
  %v415 = vpop.f32.mrb[0].mxu0
  %v416 = vadd.f32 %v201, %v415
  %v417 = vpop.f32.mrb[0].mxu0
  %v418 = vadd.f32 %v205, %v417
  %419 = vmatprep.mubr.f32.mxu0 0.0
  %420 = vmatmul.mubr.f32.gmra.mrb[0].mxu0 %v54
  %v421 = vpop.f32.mrb[0].mxu0
  %v422 = vadd.f32 %v201, %v421
  %v423 = vpop.f32.mrb[0].mxu0
  %v424 = vadd.f32 %v205, %v423
  %425 = vmatprep.mubr.f32.mxu0 0.0
  %426 = vmatmul.mubr.f32.gmra.mrb[0].mxu0 %v55
  %v427 = vpop.f32.mrb[0].mxu0
  %v428 = vadd.f32 %v201, %v427
  %v429 = vpop.f32.mrb[0].mxu0
  %v430 = vadd.f32 %v205, %v429
  %431 = vmatprep.mubr.f32.mxu0 0.0
  %432 = vmatmul.mubr.f32.gmra.mrb[0].mxu0 %v56
  %v433 = vpop.f32.mrb[0].mxu0
  %v434 = vadd.f32 %v201, %v433
  %v435 = vpop.f32.mrb[0].mxu0
  %v436 = vadd.f32 %v205, %v435
  %437 = vmatprep.mubr.f32.mxu0 0.0
  %438 = vmatmul.mubr.f32.gmra.mrb[0].mxu0 %v57
  %v439 = vpop.f32.mrb[0].mxu0
  %v440 = vadd.f32 %v201, %v439
  %v441 = vpop.f32.mrb[0].mxu0
  %v442 = vadd.f32 %v205, %v441
  %443 = vmatprep.mubr.f32.mxu0 0.0
  %444 = vmatmul.mubr.f32.gmra.mrb[0].mxu0 %v58
  %v445 = vpop.f32.mrb[0].mxu0
  %v446 = vadd.f32 %v201, %v445
  %v447 = vpop.f32.mrb[0].mxu0
  %v448 = vadd.f32 %v205, %v447
  %449 = vmatprep.mubr.f32.mxu0 0.0
  %450 = vmatmul.mubr.f32.gmra.mrb[0].mxu0 %v59
  %v451 = vpop.f32.mrb[0].mxu0
  %v452 = vadd.f32 %v201, %v451
  %v453 = vpop.f32.mrb[0].mxu0
  %v454 = vadd.f32 %v205, %v453
  %455 = vdwg.mxu0
  %456 = vmatprep.subr.mxu0 %v65
  %457 = vmatpush1.msra.mxu0 %v64
  %458 = vmatprep.subr.mxu0 %v73
  %459 = vmatpush1.msra.mxu0 %v72
  %460 = vmatprep.subr.mxu0 %v81
  %461 = vmatpush1.msra.mxu0 %v80
  %462 = vmatprep.subr.mxu0 %v89
  %463 = vmatpush1.msra.mxu0 %v88
  %464 = vmatprep.subr.mxu0 %v97
  %465 = vmatpush1.msra.mxu0 %v96
  %466 = vmatprep.subr.mxu0 %v105
  %467 = vmatpush1.msra.mxu0 %v104
  %468 = vmatprep.subr.mxu0 %v113
  %469 = vmatpush1.msra.mxu0 %v112
  %470 = vmatprep.subr.mxu0 %v121
  %471 = vmatpush1.msra.mxu0 %v120
  %472 = vmatprep.subr.mxu0 %v129
  %473 = vmatpush1.msra.mxu0 %v128
  %474 = vmatprep.subr.mxu0 %v137
  %475 = vmatpush1.msra.mxu0 %v136
  %476 = vmatprep.subr.mxu0 %v145
  %477 = vmatpush1.msra.mxu0 %v144
  %478 = vmatprep.subr.mxu0 %v153
  %479 = vmatpush1.msra.mxu0 %v152
  %480 = vmatprep.subr.mxu0 %v161
  %481 = vmatpush1.msra.mxu0 %v160
  %482 = vmatprep.subr.mxu0 %v169
  %483 = vmatpush1.msra.mxu0 %v168
  %484 = vmatprep.subr.mxu0 %v177
  %485 = vmatpush1.msra.mxu0 %v176
  %486 = vmatprep.subr.mxu0 %v185
  %487 = vmatpush1.msra.mxu0 %v184
  %488 = vmatprep.subr.mxu0 0.0
  %489 = vmatpush1.msra.mxu0 0.0
  %490 = vmatprep.subr.mxu0 0.0
  %491 = vmatpush1.msra.mxu0 0.0
  %492 = vmatprep.subr.mxu0 0.0
  %493 = vmatpush1.msra.mxu0 0.0
  %494 = vmatprep.subr.mxu0 0.0
  %495 = vmatpush1.msra.mxu0 0.0
  %496 = vmatprep.subr.mxu0 0.0
  %497 = vmatpush1.msra.mxu0 0.0
  %498 = vmatprep.subr.mxu0 0.0
  %499 = vmatpush1.msra.mxu0 0.0
  %500 = vmatprep.subr.mxu0 0.0
  %501 = vmatpush1.msra.mxu0 0.0
  %502 = vmatprep.subr.mxu0 0.0
  %503 = vmatpush1.msra.mxu0 0.0
  %504 = vmatprep.subr.mxu0 0.0
  %505 = vmatpush1.msra.mxu0 0.0
  %506 = vmatprep.subr.mxu0 0.0
  %507 = vmatpush1.msra.mxu0 0.0
  %508 = vmatprep.subr.mxu0 0.0
  %509 = vmatpush1.msra.mxu0 0.0
  %510 = vmatprep.subr.mxu0 0.0
  %511 = vmatpush1.msra.mxu0 0.0
  %512 = vmatprep.subr.mxu0 0.0
  %513 = vmatpush1.msra.mxu0 0.0
  %514 = vmatprep.subr.mxu0 0.0
  %515 = vmatpush1.msra.mxu0 0.0
  %516 = vmatprep.subr.mxu0 0.0
  %517 = vmatpush1.msra.mxu0 0.0
  %518 = vmatprep.subr.mxu0 0.0
  %519 = vmatpush1.msra.mxu0 0.0
  %520 = vmatprep.mubr.f32.mxu0 0.0
  %521 = vmatmul.mubr.f32.gmra.mrb[0].mxu0 %v52
  %v522 = vpop.f32.mrb[0].mxu0
  %v523 = vadd.f32 %v209, %v522
  %v524 = vpop.f32.mrb[0].mxu0
  %v525 = vadd.f32 %v213, %v524
  %526 = vmatprep.mubr.f32.mxu0 0.0
  %527 = vmatmul.mubr.f32.gmra.mrb[0].mxu0 %v53
  %v528 = vpop.f32.mrb[0].mxu0
  %v529 = vadd.f32 %v209, %v528
  %v530 = vpop.f32.mrb[0].mxu0
  %v531 = vadd.f32 %v213, %v530
  %532 = vmatprep.mubr.f32.mxu0 0.0
  %533 = vmatmul.mubr.f32.gmra.mrb[0].mxu0 %v54
  %v534 = vpop.f32.mrb[0].mxu0
  %v535 = vadd.f32 %v209, %v534
  %v536 = vpop.f32.mrb[0].mxu0
  %v537 = vadd.f32 %v213, %v536
  %538 = vmatprep.mubr.f32.mxu0 0.0
  %539 = vmatmul.mubr.f32.gmra.mrb[0].mxu0 %v55
  %v540 = vpop.f32.mrb[0].mxu0
  %v541 = vadd.f32 %v209, %v540
  %v542 = vpop.f32.mrb[0].mxu0
  %v543 = vadd.f32 %v213, %v542
  %544 = vmatprep.mubr.f32.mxu0 0.0
  %545 = vmatmul.mubr.f32.gmra.mrb[0].mxu0 %v56
  %v546 = vpop.f32.mrb[0].mxu0
  %v547 = vadd.f32 %v209, %v546
  %v548 = vpop.f32.mrb[0].mxu0
  %v549 = vadd.f32 %v213, %v548
  %550 = vmatprep.mubr.f32.mxu0 0.0
  %551 = vmatmul.mubr.f32.gmra.mrb[0].mxu0 %v57
  %v552 = vpop.f32.mrb[0].mxu0
  %v553 = vadd.f32 %v209, %v552
  %v554 = vpop.f32.mrb[0].mxu0
  %v555 = vadd.f32 %v213, %v554
  %556 = vmatprep.mubr.f32.mxu0 0.0
  %557 = vmatmul.mubr.f32.gmra.mrb[0].mxu0 %v58
  %v558 = vpop.f32.mrb[0].mxu0
  %v559 = vadd.f32 %v209, %v558
  %v560 = vpop.f32.mrb[0].mxu0
  %v561 = vadd.f32 %v213, %v560
  %562 = vmatprep.mubr.f32.mxu0 0.0
  %563 = vmatmul.mubr.f32.gmra.mrb[0].mxu0 %v59
  %v564 = vpop.f32.mrb[0].mxu0
  %v565 = vadd.f32 %v209, %v564
  %v566 = vpop.f32.mrb[0].mxu0
  %v567 = vadd.f32 %v213, %v566
  %568 = vdwg.mxu0
  %569 = vmatprep.subr.mxu0 %v67
  %570 = vmatpush1.msra.mxu0 %v66
  %571 = vmatprep.subr.mxu0 %v75
  %572 = vmatpush1.msra.mxu0 %v74
  %573 = vmatprep.subr.mxu0 %v83
  %574 = vmatpush1.msra.mxu0 %v82
  %575 = vmatprep.subr.mxu0 %v91
  %576 = vmatpush1.msra.mxu0 %v90
  %577 = vmatprep.subr.mxu0 %v99
  %578 = vmatpush1.msra.mxu0 %v98
  %579 = vmatprep.subr.mxu0 %v107
  %580 = vmatpush1.msra.mxu0 %v106
  %581 = vmatprep.subr.mxu0 %v115
  %582 = vmatpush1.msra.mxu0 %v114
  %583 = vmatprep.subr.mxu0 %v123
  %584 = vmatpush1.msra.mxu0 %v122
  %585 = vmatprep.subr.mxu0 %v131
  %586 = vmatpush1.msra.mxu0 %v130
  %587 = vmatprep.subr.mxu0 %v139
  %588 = vmatpush1.msra.mxu0 %v138
  %589 = vmatprep.subr.mxu0 %v147
  %590 = vmatpush1.msra.mxu0 %v146
  %591 = vmatprep.subr.mxu0 %v155
  %592 = vmatpush1.msra.mxu0 %v154
  %593 = vmatprep.subr.mxu0 %v163
  %594 = vmatpush1.msra.mxu0 %v162
  %595 = vmatprep.subr.mxu0 %v171
  %596 = vmatpush1.msra.mxu0 %v170
  %597 = vmatprep.subr.mxu0 %v179
  %598 = vmatpush1.msra.mxu0 %v178
  %599 = vmatprep.subr.mxu0 %v187
  %600 = vmatpush1.msra.mxu0 %v186
  %601 = vmatprep.subr.mxu0 0.0
  %602 = vmatpush1.msra.mxu0 0.0
  %603 = vmatprep.subr.mxu0 0.0
  %604 = vmatpush1.msra.mxu0 0.0
  %605 = vmatprep.subr.mxu0 0.0
  %606 = vmatpush1.msra.mxu0 0.0
  %607 = vmatprep.subr.mxu0 0.0
  %608 = vmatpush1.msra.mxu0 0.0
  %609 = vmatprep.subr.mxu0 0.0
  %610 = vmatpush1.msra.mxu0 0.0
  %611 = vmatprep.subr.mxu0 0.0
  %612 = vmatpush1.msra.mxu0 0.0
  %613 = vmatprep.subr.mxu0 0.0
  %614 = vmatpush1.msra.mxu0 0.0
  %615 = vmatprep.subr.mxu0 0.0
  %616 = vmatpush1.msra.mxu0 0.0
  %617 = vmatprep.subr.mxu0 0.0
  %618 = vmatpush1.msra.mxu0 0.0
  %619 = vmatprep.subr.mxu0 0.0
  %620 = vmatpush1.msra.mxu0 0.0
  %621 = vmatprep.subr.mxu0 0.0
  %622 = vmatpush1.msra.mxu0 0.0
  %623 = vmatprep.subr.mxu0 0.0
  %624 = vmatpush1.msra.mxu0 0.0
  %625 = vmatprep.subr.mxu0 0.0
  %626 = vmatpush1.msra.mxu0 0.0
  %627 = vmatprep.subr.mxu0 0.0
  %628 = vmatpush1.msra.mxu0 0.0
  %629 = vmatprep.subr.mxu0 0.0
  %630 = vmatpush1.msra.mxu0 0.0
  %631 = vmatprep.subr.mxu0 0.0
  %632 = vmatpush1.msra.mxu0 0.0
  %633 = vmatprep.mubr.f32.mxu0 0.0
  %634 = vmatmul.mubr.f32.gmra.mrb[0].mxu0 %v52
  %v635 = vpop.f32.mrb[0].mxu0
  %v636 = vadd.f32 %v217, %v635
  %v637 = vpop.f32.mrb[0].mxu0
  %v638 = vadd.f32 %v221, %v637
  %639 = vmatprep.mubr.f32.mxu0 0.0
  %640 = vmatmul.mubr.f32.gmra.mrb[0].mxu0 %v53
  %v641 = vpop.f32.mrb[0].mxu0
  %v642 = vadd.f32 %v217, %v641
  %v643 = vpop.f32.mrb[0].mxu0
  %v644 = vadd.f32 %v221, %v643
  %645 = vmatprep.mubr.f32.mxu0 0.0
  %646 = vmatmul.mubr.f32.gmra.mrb[0].mxu0 %v54
  %v647 = vpop.f32.mrb[0].mxu0
  %v648 = vadd.f32 %v217, %v647
  %v649 = vpop.f32.mrb[0].mxu0
  %v650 = vadd.f32 %v221, %v649
  %651 = vmatprep.mubr.f32.mxu0 0.0
  %652 = vmatmul.mubr.f32.gmra.mrb[0].mxu0 %v55
  %v653 = vpop.f32.mrb[0].mxu0
  %v654 = vadd.f32 %v217, %v653
  %v655 = vpop.f32.mrb[0].mxu0
  %v656 = vadd.f32 %v221, %v655
  %657 = vmatprep.mubr.f32.mxu0 0.0
  %658 = vmatmul.mubr.f32.gmra.mrb[0].mxu0 %v56
  %v659 = vpop.f32.mrb[0].mxu0
  %v660 = vadd.f32 %v217, %v659
  %v661 = vpop.f32.mrb[0].mxu0
  %v662 = vadd.f32 %v221, %v661
  %663 = vmatprep.mubr.f32.mxu0 0.0
  %664 = vmatmul.mubr.f32.gmra.mrb[0].mxu0 %v57
  %v665 = vpop.f32.mrb[0].mxu0
  %v666 = vadd.f32 %v217, %v665
  %v667 = vpop.f32.mrb[0].mxu0
  %v668 = vadd.f32 %v221, %v667
  %669 = vmatprep.mubr.f32.mxu0 0.0
  %670 = vmatmul.mubr.f32.gmra.mrb[0].mxu0 %v58
  %v671 = vpop.f32.mrb[0].mxu0
  %v672 = vadd.f32 %v217, %v671
  %v673 = vpop.f32.mrb[0].mxu0
  %v674 = vadd.f32 %v221, %v673
  %675 = vmatprep.mubr.f32.mxu0 0.0
  %676 = vmatmul.mubr.f32.gmra.mrb[0].mxu0 %v59
  %v677 = vpop.f32.mrb[0].mxu0
  %v678 = vadd.f32 %v217, %v677
  %v679 = vpop.f32.mrb[0].mxu0
  %v680 = vadd.f32 %v221, %v679
  %681 = vdwg.mxu0
  %682 = vst [vmem:[#allocation2] sm:$0xff] %v297
  %683 = vst [vmem:[#allocation2 + $0x8] sm:$0xff] %v299
  %684 = vst [vmem:[#allocation2 + $0x10] sm:$0xff] %v410
  %685 = vst [vmem:[#allocation2 + $0x18] sm:$0xff] %v412
  %686 = vst [vmem:[#allocation2 + $0x20] sm:$0xff] %v303
  %687 = vst [vmem:[#allocation2 + $0x28] sm:$0xff] %v305
  %688 = vst [vmem:[#allocation2 + $0x30] sm:$0xff] %v416
  %689 = vst [vmem:[#allocation2 + $0x38] sm:$0xff] %v418
  %690 = vst [vmem:[#allocation2 + $0x40] sm:$0xff] %v309
  %691 = vst [vmem:[#allocation2 + $0x48] sm:$0xff] %v311
  %692 = vst [vmem:[#allocation2 + $0x50] sm:$0xff] %v422
  %693 = vst [vmem:[#allocation2 + $0x58] sm:$0xff] %v424
  %694 = vst [vmem:[#allocation2 + $0x60] sm:$0xff] %v315
  %695 = vst [vmem:[#allocation2 + $0x68] sm:$0xff] %v317
  %696 = vst [vmem:[#allocation2 + $0x70] sm:$0xff] %v428
  %697 = vst [vmem:[#allocation2 + $0x78] sm:$0xff] %v430
  %698 = vst [vmem:[#allocation2 + $0x80] sm:$0xff] %v321
  %699 = vst [vmem:[#allocation2 + $0x88] sm:$0xff] %v323
  %700 = vst [vmem:[#allocation2 + $0x90] sm:$0xff] %v434
  %701 = vst [vmem:[#allocation2 + $0x98] sm:$0xff] %v436
  %702 = vst [vmem:[#allocation2 + $0xa0] sm:$0xff] %v327
  %703 = vst [vmem:[#allocation2 + $0xa8] sm:$0xff] %v329
  %704 = vst [vmem:[#allocation2 + $0xb0] sm:$0xff] %v440
  %705 = vst [vmem:[#allocation2 + $0xb8] sm:$0xff] %v442
  %706 = vst [vmem:[#allocation2 + $0xc0] sm:$0xff] %v333
  %707 = vst [vmem:[#allocation2 + $0xc8] sm:$0xff] %v335
  %708 = vst [vmem:[#allocation2 + $0xd0] sm:$0xff] %v446
  %709 = vst [vmem:[#allocation2 + $0xd8] sm:$0xff] %v448
  %710 = vst [vmem:[#allocation2 + $0xe0] sm:$0xff] %v339
  %711 = vst [vmem:[#allocation2 + $0xe8] sm:$0xff] %v341
  %712 = vst [vmem:[#allocation2 + $0xf0] sm:$0xff] %v452
  %713 = vst [vmem:[#allocation2 + $0xf8] sm:$0xff] %v454
  %714 = vst [vmem:[#allocation3] sm:$0xff] %v523
  %715 = vst [vmem:[#allocation3 + $0x8] sm:$0xff] %v525
  %716 = vst [vmem:[#allocation3 + $0x10] sm:$0xff] %v636
  %717 = vst [vmem:[#allocation3 + $0x18] sm:$0xff] %v638
  %718 = vst [vmem:[#allocation3 + $0x20] sm:$0xff] %v529
  %719 = vst [vmem:[#allocation3 + $0x28] sm:$0xff] %v531
  %720 = vst [vmem:[#allocation3 + $0x30] sm:$0xff] %v642
  %721 = vst [vmem:[#allocation3 + $0x38] sm:$0xff] %v644
  %722 = vst [vmem:[#allocation3 + $0x40] sm:$0xff] %v535
  %723 = vst [vmem:[#allocation3 + $0x48] sm:$0xff] %v537
  %724 = vst [vmem:[#allocation3 + $0x50] sm:$0xff] %v648
  %725 = vst [vmem:[#allocation3 + $0x58] sm:$0xff] %v650
  %726 = vst [vmem:[#allocation3 + $0x60] sm:$0xff] %v541
  %727 = vst [vmem:[#allocation3 + $0x68] sm:$0xff] %v543
  %728 = vst [vmem:[#allocation3 + $0x70] sm:$0xff] %v654
  %729 = vst [vmem:[#allocation3 + $0x78] sm:$0xff] %v656
  %730 = vst [vmem:[#allocation3 + $0x80] sm:$0xff] %v547
  %731 = vst [vmem:[#allocation3 + $0x88] sm:$0xff] %v549
  %732 = vst [vmem:[#allocation3 + $0x90] sm:$0xff] %v660
  %733 = vst [vmem:[#allocation3 + $0x98] sm:$0xff] %v662
  %734 = vst [vmem:[#allocation3 + $0xa0] sm:$0xff] %v553
  %735 = vst [vmem:[#allocation3 + $0xa8] sm:$0xff] %v555
  %736 = vst [vmem:[#allocation3 + $0xb0] sm:$0xff] %v666
  %737 = vst [vmem:[#allocation3 + $0xb8] sm:$0xff] %v668
  %738 = vst [vmem:[#allocation3 + $0xc0] sm:$0xff] %v559
  %739 = vst [vmem:[#allocation3 + $0xc8] sm:$0xff] %v561
  %740 = vst [vmem:[#allocation3 + $0xd0] sm:$0xff] %v672
  %741 = vst [vmem:[#allocation3 + $0xd8] sm:$0xff] %v674
  %742 = vst [vmem:[#allocation3 + $0xe0] sm:$0xff] %v565
  %743 = vst [vmem:[#allocation3 + $0xe8] sm:$0xff] %v567
  %744 = vst [vmem:[#allocation3 + $0xf0] sm:$0xff] %v678
  %745 = vst [vmem:[#allocation3 + $0xf8] sm:$0xff] %v680
  %v746 = vld [vmem:[%s1] sm:$0xff]
  %v747 = vld [vmem:[#allocation2] sm:$0xff]
  %v748 = vld [vmem:[#allocation2 + $0x8] sm:$0xff]
  %v749 = vld [vmem:[#allocation2 + $0x10] sm:$0xff]
  %v750 = vld [vmem:[#allocation2 + $0x18] sm:$0xff]
  %v751 = vld [vmem:[%s4] sm:$0xff]
  %v752 = vld [vmem:[%s4 + $0x8] sm:$0xff]
  %v753 = vld [vmem:[%s4 + $0x10] sm:$0xff]
  %v754 = vld [vmem:[%s4 + $0x18] sm:$0xff]
  %v755 = vld [vmem:[%s4 + $0x20] sm:$0xff]
  %v756 = vld [vmem:[%s4 + $0x28] sm:$0xff]
  %v757 = vld [vmem:[%s4 + $0x30] sm:$0xff]
  %v758 = vld [vmem:[%s4 + $0x38] sm:$0xff]
  %v759 = vld [vmem:[%s4 + $0x40] sm:$0xff]
  %v760 = vld [vmem:[%s4 + $0x48] sm:$0xff]
  %v761 = vld [vmem:[%s4 + $0x50] sm:$0xff]
  %v762 = vld [vmem:[%s4 + $0x58] sm:$0xff]
  %v763 = vld [vmem:[%s4 + $0x60] sm:$0xff]
  %v764 = vld [vmem:[%s4 + $0x68] sm:$0xff]
  %v765 = vld [vmem:[%s4 + $0x70] sm:$0xff]
  %v766 = vld [vmem:[%s4 + $0x78] sm:$0xff]
  %v767 = vld [vmem:[%s4 + $0x80] sm:$0xff]
  %v768 = vld [vmem:[%s4 + $0x88] sm:$0xff]
  %v769 = vld [vmem:[%s4 + $0x90] sm:$0xff]
  %v770 = vld [vmem:[%s4 + $0x98] sm:$0xff]
  %v771 = vld [vmem:[%s4 + $0xa0] sm:$0xff]
  %v772 = vld [vmem:[%s4 + $0xa8] sm:$0xff]
  %v773 = vld [vmem:[%s4 + $0xb0] sm:$0xff]
  %v774 = vld [vmem:[%s4 + $0xb8] sm:$0xff]
  %v775 = vld [vmem:[%s4 + $0xc0] sm:$0xff]
  %v776 = vld [vmem:[%s4 + $0xc8] sm:$0xff]
  %v777 = vld [vmem:[%s4 + $0xd0] sm:$0xff]
  %v778 = vld [vmem:[%s4 + $0xd8] sm:$0xff]
  %v779 = vld [vmem:[%s4 + $0xe0] sm:$0xff]
  %v780 = vld [vmem:[%s4 + $0xe8] sm:$0xff]
  %v781 = vld [vmem:[%s4 + $0xf0] sm:$0xff]
  %v782 = vld [vmem:[%s4 + $0xf8] sm:$0xff]
  %v783 = vld [vmem:[%s4 + $0x100] sm:$0xff]
  %v784 = vld [vmem:[%s4 + $0x108] sm:$0xff]
  %v785 = vld [vmem:[%s4 + $0x110] sm:$0xff]
  %v786 = vld [vmem:[%s4 + $0x118] sm:$0xff]
  %v787 = vld [vmem:[%s4 + $0x120] sm:$0xff]
  %v788 = vld [vmem:[%s4 + $0x128] sm:$0xff]
  %v789 = vld [vmem:[%s4 + $0x130] sm:$0xff]
  %v790 = vld [vmem:[%s4 + $0x138] sm:$0xff]
  %v791 = vld [vmem:[%s4 + $0x140] sm:$0xff]
  %v792 = vld [vmem:[%s4 + $0x148] sm:$0xff]
  %v793 = vld [vmem:[%s4 + $0x150] sm:$0xff]
  %v794 = vld [vmem:[%s4 + $0x158] sm:$0xff]
  %v795 = vld [vmem:[%s4 + $0x160] sm:$0xff]
  %v796 = vld [vmem:[%s4 + $0x168] sm:$0xff]
  %v797 = vld [vmem:[%s4 + $0x170] sm:$0xff]
  %v798 = vld [vmem:[%s4 + $0x178] sm:$0xff]
  %v799 = vld [vmem:[%s4 + $0x180] sm:$0xff]
  %v800 = vld [vmem:[%s4 + $0x188] sm:$0xff]
  %v801 = vld [vmem:[%s4 + $0x190] sm:$0xff]
  %v802 = vld [vmem:[%s4 + $0x198] sm:$0xff]
  %v803 = vld [vmem:[%s4 + $0x1a0] sm:$0xff]
  %v804 = vld [vmem:[%s4 + $0x1a8] sm:$0xff]
  %v805 = vld [vmem:[%s4 + $0x1b0] sm:$0xff]
  %v806 = vld [vmem:[%s4 + $0x1b8] sm:$0xff]
  %v807 = vld [vmem:[%s4 + $0x1c0] sm:$0xff]
  %v808 = vld [vmem:[%s4 + $0x1c8] sm:$0xff]
  %v809 = vld [vmem:[%s4 + $0x1d0] sm:$0xff]
  %v810 = vld [vmem:[%s4 + $0x1d8] sm:$0xff]
  %v811 = vld [vmem:[%s4 + $0x1e0] sm:$0xff]
  %v812 = vld [vmem:[%s4 + $0x1e8] sm:$0xff]
  %v813 = vld [vmem:[%s4 + $0x1f0] sm:$0xff]
  %v814 = vld [vmem:[%s4 + $0x1f8] sm:$0xff]
  %815 = vmatprep.subr.mxu0 %v752
  %816 = vmatpush1.msra.mxu0 %v751
  %817 = vmatprep.subr.mxu0 %v756
  %818 = vmatpush1.msra.mxu0 %v755
  %819 = vmatprep.subr.mxu0 %v760
  %820 = vmatpush1.msra.mxu0 %v759
  %821 = vmatprep.subr.mxu0 %v764
  %822 = vmatpush1.msra.mxu0 %v763
  %823 = vmatprep.subr.mxu0 %v768
  %824 = vmatpush1.msra.mxu0 %v767
  %825 = vmatprep.subr.mxu0 %v772
  %826 = vmatpush1.msra.mxu0 %v771
  %827 = vmatprep.subr.mxu0 %v776
  %828 = vmatpush1.msra.mxu0 %v775
  %829 = vmatprep.subr.mxu0 %v780
  %830 = vmatpush1.msra.mxu0 %v779
  %831 = vmatprep.subr.mxu0 %v784
  %832 = vmatpush1.msra.mxu0 %v783
  %833 = vmatprep.subr.mxu0 %v788
  %834 = vmatpush1.msra.mxu0 %v787
  %835 = vmatprep.subr.mxu0 %v792
  %836 = vmatpush1.msra.mxu0 %v791
  %837 = vmatprep.subr.mxu0 %v796
  %838 = vmatpush1.msra.mxu0 %v795
  %839 = vmatprep.subr.mxu0 %v800
  %840 = vmatpush1.msra.mxu0 %v799
  %841 = vmatprep.subr.mxu0 %v804
  %842 = vmatpush1.msra.mxu0 %v803
  %843 = vmatprep.subr.mxu0 %v808
  %844 = vmatpush1.msra.mxu0 %v807
  %845 = vmatprep.subr.mxu0 %v812
  %846 = vmatpush1.msra.mxu0 %v811
  %847 = vmatprep.subr.mxu0 0.0
  %848 = vmatpush1.msra.mxu0 0.0
  %849 = vmatprep.subr.mxu0 0.0
  %850 = vmatpush1.msra.mxu0 0.0
  %851 = vmatprep.subr.mxu0 0.0
  %852 = vmatpush1.msra.mxu0 0.0
  %853 = vmatprep.subr.mxu0 0.0
  %854 = vmatpush1.msra.mxu0 0.0
  %855 = vmatprep.subr.mxu0 0.0
  %856 = vmatpush1.msra.mxu0 0.0
  %857 = vmatprep.subr.mxu0 0.0
  %858 = vmatpush1.msra.mxu0 0.0
  %859 = vmatprep.subr.mxu0 0.0
  %860 = vmatpush1.msra.mxu0 0.0
  %861 = vmatprep.subr.mxu0 0.0
  %862 = vmatpush1.msra.mxu0 0.0
  %863 = vmatprep.subr.mxu0 0.0
  %864 = vmatpush1.msra.mxu0 0.0
  %865 = vmatprep.subr.mxu0 0.0
  %866 = vmatpush1.msra.mxu0 0.0
  %867 = vmatprep.subr.mxu0 0.0
  %868 = vmatpush1.msra.mxu0 0.0
  %869 = vmatprep.subr.mxu0 0.0
  %870 = vmatpush1.msra.mxu0 0.0
  %871 = vmatprep.subr.mxu0 0.0
  %872 = vmatpush1.msra.mxu0 0.0
  %873 = vmatprep.subr.mxu0 0.0
  %874 = vmatpush1.msra.mxu0 0.0
  %875 = vmatprep.subr.mxu0 0.0
  %876 = vmatpush1.msra.mxu0 0.0
  %877 = vmatprep.subr.mxu0 0.0
  %878 = vmatpush1.msra.mxu0 0.0
  %879 = vmatprep.mubr.f32.mxu0 0.0
  %880 = vmatmul.mubr.f32.gmra.mrb[0].mxu0 0.0
  %v881 = vpop.f32.mrb[0].mxu0
  %v882 = vadd.f32 0.0, %v881
  %v883 = vpop.f32.mrb[0].mxu0
  %v884 = vadd.f32 0.0, %v883
  %885 = vdwg.mxu0
  %886 = vmatprep.subr.mxu0 %v754
  %887 = vmatpush1.msra.mxu0 %v753
  %888 = vmatprep.subr.mxu0 %v758
  %889 = vmatpush1.msra.mxu0 %v757
  %890 = vmatprep.subr.mxu0 %v762
  %891 = vmatpush1.msra.mxu0 %v761
  %892 = vmatprep.subr.mxu0 %v766
  %893 = vmatpush1.msra.mxu0 %v765
  %894 = vmatprep.subr.mxu0 %v770
  %895 = vmatpush1.msra.mxu0 %v769
  %896 = vmatprep.subr.mxu0 %v774
  %897 = vmatpush1.msra.mxu0 %v773
  %898 = vmatprep.subr.mxu0 %v778
  %899 = vmatpush1.msra.mxu0 %v777
  %900 = vmatprep.subr.mxu0 %v782
  %901 = vmatpush1.msra.mxu0 %v781
  %902 = vmatprep.subr.mxu0 %v786
  %903 = vmatpush1.msra.mxu0 %v785
  %904 = vmatprep.subr.mxu0 %v790
  %905 = vmatpush1.msra.mxu0 %v789
  %906 = vmatprep.subr.mxu0 %v794
  %907 = vmatpush1.msra.mxu0 %v793
  %908 = vmatprep.subr.mxu0 %v798
  %909 = vmatpush1.msra.mxu0 %v797
  %910 = vmatprep.subr.mxu0 %v802
  %911 = vmatpush1.msra.mxu0 %v801
  %912 = vmatprep.subr.mxu0 %v806
  %913 = vmatpush1.msra.mxu0 %v805
  %914 = vmatprep.subr.mxu0 %v810
  %915 = vmatpush1.msra.mxu0 %v809
  %916 = vmatprep.subr.mxu0 %v814
  %917 = vmatpush1.msra.mxu0 %v813
  %918 = vmatprep.subr.mxu0 0.0
  %919 = vmatpush1.msra.mxu0 0.0
  %920 = vmatprep.subr.mxu0 0.0
  %921 = vmatpush1.msra.mxu0 0.0
  %922 = vmatprep.subr.mxu0 0.0
  %923 = vmatpush1.msra.mxu0 0.0
  %924 = vmatprep.subr.mxu0 0.0
  %925 = vmatpush1.msra.mxu0 0.0
  %926 = vmatprep.subr.mxu0 0.0
  %927 = vmatpush1.msra.mxu0 0.0
  %928 = vmatprep.subr.mxu0 0.0
  %929 = vmatpush1.msra.mxu0 0.0
  %930 = vmatprep.subr.mxu0 0.0
  %931 = vmatpush1.msra.mxu0 0.0
  %932 = vmatprep.subr.mxu0 0.0
  %933 = vmatpush1.msra.mxu0 0.0
  %934 = vmatprep.subr.mxu0 0.0
  %935 = vmatpush1.msra.mxu0 0.0
  %936 = vmatprep.subr.mxu0 0.0
  %937 = vmatpush1.msra.mxu0 0.0
  %938 = vmatprep.subr.mxu0 0.0
  %939 = vmatpush1.msra.mxu0 0.0
  %940 = vmatprep.subr.mxu0 0.0
  %941 = vmatpush1.msra.mxu0 0.0
  %942 = vmatprep.subr.mxu0 0.0
  %943 = vmatpush1.msra.mxu0 0.0
  %944 = vmatprep.subr.mxu0 0.0
  %945 = vmatpush1.msra.mxu0 0.0
  %946 = vmatprep.subr.mxu0 0.0
  %947 = vmatpush1.msra.mxu0 0.0
  %948 = vmatprep.subr.mxu0 0.0
  %949 = vmatpush1.msra.mxu0 0.0
  %950 = vmatprep.mubr.f32.mxu0 0.0
  %951 = vmatmul.mubr.f32.gmra.mrb[0].mxu0 0.0
  %v952 = vpop.f32.mrb[0].mxu0
  %v953 = vadd.f32 0.0, %v952
  %v954 = vpop.f32.mrb[0].mxu0
  %v955 = vadd.f32 0.0, %v954
  %956 = vdwg.mxu0
  %v957 = vadd.f32 %v747, %v882
  %v958 = vadd.f32 %v748, %v884
  %v959 = vadd.f32 %v749, %v953
  %v960 = vadd.f32 %v750, %v955
  %v961 = vxor.u32 %v957, 2147483648
  %v962 = vmul.f32 %v961, 1.442695
  %v963 = vpow.pop %v962
  %v964 = vadd.f32 %v963, 1.0
  %v965 = vrcp.pop %v964
  %v966 = vmul.f32 1.0, %v965
  %v967 = vxor.u32 %v958, 2147483648
  %v968 = vmul.f32 %v967, 1.442695
  %v969 = vpow.pop %v968
  %v970 = vadd.f32 %v969, 1.0
  %v971 = vrcp.pop %v970
  %v972 = vmul.f32 1.0, %v971
  %v973 = vtanh.pop %v959
  %v974 = vxor.u32 %v960, 2147483648
  %v975 = vmul.f32 %v974, 1.442695
  %v976 = vpow.pop %v975
  %v977 = vadd.f32 %v976, 1.0
  %v978 = vrcp.pop %v977
  %v979 = vmul.f32 1.0, %v978
  %v980 = vmul.f32 %v972, 0.0
  %v981 = vmul.f32 %v966, %v973
  %v982 = vadd.f32 %v980, %v981
  %v983 = vtanh.pop %v982
  %v984 = vmul.f32 %v979, %v983
  %s985 = scalar_lea.vmem [#allocation3], 224
  %v986 = vld [vmem:[%s985] sm:$0xff]
  %v987 = vld [vmem:[%s985 + $0x8] sm:$0xff]
  %v988 = vld [vmem:[%s985 + $0x10] sm:$0xff]
  %v989 = vld [vmem:[%s985 + $0x18] sm:$0xff]
  %v990 = vld [vmem:[%s5] sm:$0xff]
  %v991 = vld [vmem:[%s5 + $0x8] sm:$0xff]
  %v992 = vld [vmem:[%s5 + $0x10] sm:$0xff]
  %v993 = vld [vmem:[%s5 + $0x18] sm:$0xff]
  %v994 = vld [vmem:[%s5 + $0x20] sm:$0xff]
  %v995 = vld [vmem:[%s5 + $0x28] sm:$0xff]
  %v996 = vld [vmem:[%s5 + $0x30] sm:$0xff]
  %v997 = vld [vmem:[%s5 + $0x38] sm:$0xff]
  %v998 = vld [vmem:[%s5 + $0x40] sm:$0xff]
  %v999 = vld [vmem:[%s5 + $0x48] sm:$0xff]
  %v1000 = vld [vmem:[%s5 + $0x50] sm:$0xff]
  %v1001 = vld [vmem:[%s5 + $0x58] sm:$0xff]
  %v1002 = vld [vmem:[%s5 + $0x60] sm:$0xff]
  %v1003 = vld [vmem:[%s5 + $0x68] sm:$0xff]
  %v1004 = vld [vmem:[%s5 + $0x70] sm:$0xff]
  %v1005 = vld [vmem:[%s5 + $0x78] sm:$0xff]
  %v1006 = vld [vmem:[%s5 + $0x80] sm:$0xff]
  %v1007 = vld [vmem:[%s5 + $0x88] sm:$0xff]
  %v1008 = vld [vmem:[%s5 + $0x90] sm:$0xff]
  %v1009 = vld [vmem:[%s5 + $0x98] sm:$0xff]
  %v1010 = vld [vmem:[%s5 + $0xa0] sm:$0xff]
  %v1011 = vld [vmem:[%s5 + $0xa8] sm:$0xff]
  %v1012 = vld [vmem:[%s5 + $0xb0] sm:$0xff]
  %v1013 = vld [vmem:[%s5 + $0xb8] sm:$0xff]
  %v1014 = vld [vmem:[%s5 + $0xc0] sm:$0xff]
  %v1015 = vld [vmem:[%s5 + $0xc8] sm:$0xff]
  %v1016 = vld [vmem:[%s5 + $0xd0] sm:$0xff]
  %v1017 = vld [vmem:[%s5 + $0xd8] sm:$0xff]
  %v1018 = vld [vmem:[%s5 + $0xe0] sm:$0xff]
  %v1019 = vld [vmem:[%s5 + $0xe8] sm:$0xff]
  %v1020 = vld [vmem:[%s5 + $0xf0] sm:$0xff]
  %v1021 = vld [vmem:[%s5 + $0xf8] sm:$0xff]
  %v1022 = vld [vmem:[%s5 + $0x100] sm:$0xff]
  %v1023 = vld [vmem:[%s5 + $0x108] sm:$0xff]
  %v1024 = vld [vmem:[%s5 + $0x110] sm:$0xff]
  %v1025 = vld [vmem:[%s5 + $0x118] sm:$0xff]
  %v1026 = vld [vmem:[%s5 + $0x120] sm:$0xff]
  %v1027 = vld [vmem:[%s5 + $0x128] sm:$0xff]
  %v1028 = vld [vmem:[%s5 + $0x130] sm:$0xff]
  %v1029 = vld [vmem:[%s5 + $0x138] sm:$0xff]
  %v1030 = vld [vmem:[%s5 + $0x140] sm:$0xff]
  %v1031 = vld [vmem:[%s5 + $0x148] sm:$0xff]
  %v1032 = vld [vmem:[%s5 + $0x150] sm:$0xff]
  %v1033 = vld [vmem:[%s5 + $0x158] sm:$0xff]
  %v1034 = vld [vmem:[%s5 + $0x160] sm:$0xff]
  %v1035 = vld [vmem:[%s5 + $0x168] sm:$0xff]
  %v1036 = vld [vmem:[%s5 + $0x170] sm:$0xff]
  %v1037 = vld [vmem:[%s5 + $0x178] sm:$0xff]
  %v1038 = vld [vmem:[%s5 + $0x180] sm:$0xff]
  %v1039 = vld [vmem:[%s5 + $0x188] sm:$0xff]
  %v1040 = vld [vmem:[%s5 + $0x190] sm:$0xff]
  %v1041 = vld [vmem:[%s5 + $0x198] sm:$0xff]
  %v1042 = vld [vmem:[%s5 + $0x1a0] sm:$0xff]
  %v1043 = vld [vmem:[%s5 + $0x1a8] sm:$0xff]
  %v1044 = vld [vmem:[%s5 + $0x1b0] sm:$0xff]
  %v1045 = vld [vmem:[%s5 + $0x1b8] sm:$0xff]
  %v1046 = vld [vmem:[%s5 + $0x1c0] sm:$0xff]
  %v1047 = vld [vmem:[%s5 + $0x1c8] sm:$0xff]
  %v1048 = vld [vmem:[%s5 + $0x1d0] sm:$0xff]
  %v1049 = vld [vmem:[%s5 + $0x1d8] sm:$0xff]
  %v1050 = vld [vmem:[%s5 + $0x1e0] sm:$0xff]
  %v1051 = vld [vmem:[%s5 + $0x1e8] sm:$0xff]
  %v1052 = vld [vmem:[%s5 + $0x1f0] sm:$0xff]
  %v1053 = vld [vmem:[%s5 + $0x1f8] sm:$0xff]
  %1054 = vmatprep.subr.mxu0 %v991
  %1055 = vmatpush1.msra.mxu0 %v990
  %1056 = vmatprep.subr.mxu0 %v995
  %1057 = vmatpush1.msra.mxu0 %v994
  %1058 = vmatprep.subr.mxu0 %v999
  %1059 = vmatpush1.msra.mxu0 %v998
  %1060 = vmatprep.subr.mxu0 %v1003
  %1061 = vmatpush1.msra.mxu0 %v1002
  %1062 = vmatprep.subr.mxu0 %v1007
  %1063 = vmatpush1.msra.mxu0 %v1006
  %1064 = vmatprep.subr.mxu0 %v1011
  %1065 = vmatpush1.msra.mxu0 %v1010
  %1066 = vmatprep.subr.mxu0 %v1015
  %1067 = vmatpush1.msra.mxu0 %v1014
  %1068 = vmatprep.subr.mxu0 %v1019
  %1069 = vmatpush1.msra.mxu0 %v1018
  %1070 = vmatprep.subr.mxu0 %v1023
  %1071 = vmatpush1.msra.mxu0 %v1022
  %1072 = vmatprep.subr.mxu0 %v1027
  %1073 = vmatpush1.msra.mxu0 %v1026
  %1074 = vmatprep.subr.mxu0 %v1031
  %1075 = vmatpush1.msra.mxu0 %v1030
  %1076 = vmatprep.subr.mxu0 %v1035
  %1077 = vmatpush1.msra.mxu0 %v1034
  %1078 = vmatprep.subr.mxu0 %v1039
  %1079 = vmatpush1.msra.mxu0 %v1038
  %1080 = vmatprep.subr.mxu0 %v1043
  %1081 = vmatpush1.msra.mxu0 %v1042
  %1082 = vmatprep.subr.mxu0 %v1047
  %1083 = vmatpush1.msra.mxu0 %v1046
  %1084 = vmatprep.subr.mxu0 %v1051
  %1085 = vmatpush1.msra.mxu0 %v1050
  %1086 = vmatprep.subr.mxu0 0.0
  %1087 = vmatpush1.msra.mxu0 0.0
  %1088 = vmatprep.subr.mxu0 0.0
  %1089 = vmatpush1.msra.mxu0 0.0
  %1090 = vmatprep.subr.mxu0 0.0
  %1091 = vmatpush1.msra.mxu0 0.0
  %1092 = vmatprep.subr.mxu0 0.0
  %1093 = vmatpush1.msra.mxu0 0.0
  %1094 = vmatprep.subr.mxu0 0.0
  %1095 = vmatpush1.msra.mxu0 0.0
  %1096 = vmatprep.subr.mxu0 0.0
  %1097 = vmatpush1.msra.mxu0 0.0
  %1098 = vmatprep.subr.mxu0 0.0
  %1099 = vmatpush1.msra.mxu0 0.0
  %1100 = vmatprep.subr.mxu0 0.0
  %1101 = vmatpush1.msra.mxu0 0.0
  %1102 = vmatprep.subr.mxu0 0.0
  %1103 = vmatpush1.msra.mxu0 0.0
  %1104 = vmatprep.subr.mxu0 0.0
  %1105 = vmatpush1.msra.mxu0 0.0
  %1106 = vmatprep.subr.mxu0 0.0
  %1107 = vmatpush1.msra.mxu0 0.0
  %1108 = vmatprep.subr.mxu0 0.0
  %1109 = vmatpush1.msra.mxu0 0.0
  %1110 = vmatprep.subr.mxu0 0.0
  %1111 = vmatpush1.msra.mxu0 0.0
  %1112 = vmatprep.subr.mxu0 0.0
  %1113 = vmatpush1.msra.mxu0 0.0
  %1114 = vmatprep.subr.mxu0 0.0
  %1115 = vmatpush1.msra.mxu0 0.0
  %1116 = vmatprep.subr.mxu0 0.0
  %1117 = vmatpush1.msra.mxu0 0.0
  %1118 = vmatprep.mubr.f32.mxu0 0.0
  %1119 = vmatmul.mubr.f32.gmra.mrb[0].mxu0 0.0
  %v1120 = vpop.f32.mrb[0].mxu0
  %v1121 = vadd.f32 0.0, %v1120
  %v1122 = vpop.f32.mrb[0].mxu0
  %v1123 = vadd.f32 0.0, %v1122
  %1124 = vdwg.mxu0
  %1125 = vmatprep.subr.mxu0 %v993
  %1126 = vmatpush1.msra.mxu0 %v992
  %1127 = vmatprep.subr.mxu0 %v997
  %1128 = vmatpush1.msra.mxu0 %v996
  %1129 = vmatprep.subr.mxu0 %v1001
  %1130 = vmatpush1.msra.mxu0 %v1000
  %1131 = vmatprep.subr.mxu0 %v1005
  %1132 = vmatpush1.msra.mxu0 %v1004
  %1133 = vmatprep.subr.mxu0 %v1009
  %1134 = vmatpush1.msra.mxu0 %v1008
  %1135 = vmatprep.subr.mxu0 %v1013
  %1136 = vmatpush1.msra.mxu0 %v1012
  %1137 = vmatprep.subr.mxu0 %v1017
  %1138 = vmatpush1.msra.mxu0 %v1016
  %1139 = vmatprep.subr.mxu0 %v1021
  %1140 = vmatpush1.msra.mxu0 %v1020
  %1141 = vmatprep.subr.mxu0 %v1025
  %1142 = vmatpush1.msra.mxu0 %v1024
  %1143 = vmatprep.subr.mxu0 %v1029
  %1144 = vmatpush1.msra.mxu0 %v1028
  %1145 = vmatprep.subr.mxu0 %v1033
  %1146 = vmatpush1.msra.mxu0 %v1032
  %1147 = vmatprep.subr.mxu0 %v1037
  %1148 = vmatpush1.msra.mxu0 %v1036
  %1149 = vmatprep.subr.mxu0 %v1041
  %1150 = vmatpush1.msra.mxu0 %v1040
  %1151 = vmatprep.subr.mxu0 %v1045
  %1152 = vmatpush1.msra.mxu0 %v1044
  %1153 = vmatprep.subr.mxu0 %v1049
  %1154 = vmatpush1.msra.mxu0 %v1048
  %1155 = vmatprep.subr.mxu0 %v1053
  %1156 = vmatpush1.msra.mxu0 %v1052
  %1157 = vmatprep.subr.mxu0 0.0
  %1158 = vmatpush1.msra.mxu0 0.0
  %1159 = vmatprep.subr.mxu0 0.0
  %1160 = vmatpush1.msra.mxu0 0.0
  %1161 = vmatprep.subr.mxu0 0.0
  %1162 = vmatpush1.msra.mxu0 0.0
  %1163 = vmatprep.subr.mxu0 0.0
  %1164 = vmatpush1.msra.mxu0 0.0
  %1165 = vmatprep.subr.mxu0 0.0
  %1166 = vmatpush1.msra.mxu0 0.0
  %1167 = vmatprep.subr.mxu0 0.0
  %1168 = vmatpush1.msra.mxu0 0.0
  %1169 = vmatprep.subr.mxu0 0.0
  %1170 = vmatpush1.msra.mxu0 0.0
  %1171 = vmatprep.subr.mxu0 0.0
  %1172 = vmatpush1.msra.mxu0 0.0
  %1173 = vmatprep.subr.mxu0 0.0
  %1174 = vmatpush1.msra.mxu0 0.0
  %1175 = vmatprep.subr.mxu0 0.0
  %1176 = vmatpush1.msra.mxu0 0.0
  %1177 = vmatprep.subr.mxu0 0.0
  %1178 = vmatpush1.msra.mxu0 0.0
  %1179 = vmatprep.subr.mxu0 0.0
  %1180 = vmatpush1.msra.mxu0 0.0
  %1181 = vmatprep.subr.mxu0 0.0
  %1182 = vmatpush1.msra.mxu0 0.0
  %1183 = vmatprep.subr.mxu0 0.0
  %1184 = vmatpush1.msra.mxu0 0.0
  %1185 = vmatprep.subr.mxu0 0.0
  %1186 = vmatpush1.msra.mxu0 0.0
  %1187 = vmatprep.subr.mxu0 0.0
  %1188 = vmatpush1.msra.mxu0 0.0
  %1189 = vmatprep.mubr.f32.mxu0 0.0
  %1190 = vmatmul.mubr.f32.gmra.mrb[0].mxu0 0.0
  %v1191 = vpop.f32.mrb[0].mxu0
  %v1192 = vadd.f32 0.0, %v1191
  %v1193 = vpop.f32.mrb[0].mxu0
  %v1194 = vadd.f32 0.0, %v1193
  %1195 = vdwg.mxu0
  %v1196 = vadd.f32 %v986, %v1121
  %v1197 = vadd.f32 %v987, %v1123
  %v1198 = vadd.f32 %v988, %v1192
  %v1199 = vadd.f32 %v989, %v1194
  %v1200 = vxor.u32 %v1196, 2147483648
  %v1201 = vmul.f32 %v1200, 1.442695
  %v1202 = vpow.pop %v1201
  %v1203 = vadd.f32 %v1202, 1.0
  %v1204 = vrcp.pop %v1203
  %v1205 = vmul.f32 1.0, %v1204
  %v1206 = vxor.u32 %v1197, 2147483648
  %v1207 = vmul.f32 %v1206, 1.442695
  %v1208 = vpow.pop %v1207
  %v1209 = vadd.f32 %v1208, 1.0
  %v1210 = vrcp.pop %v1209
  %v1211 = vmul.f32 1.0, %v1210
  %v1212 = vtanh.pop %v1198
  %v1213 = vxor.u32 %v1199, 2147483648
  %v1214 = vmul.f32 %v1213, 1.442695
  %v1215 = vpow.pop %v1214
  %v1216 = vadd.f32 %v1215, 1.0
  %v1217 = vrcp.pop %v1216
  %v1218 = vmul.f32 1.0, %v1217
  %v1219 = vmul.f32 %v1211, 0.0
  %v1220 = vmul.f32 %v1205, %v1212
  %v1221 = vadd.f32 %v1219, %v1220
  %v1222 = vtanh.pop %v1221
  %v1223 = vmul.f32 %v1218, %v1222
  %vm1224 = vcmp.gt.s32.totalorder %v746, 0
  %v1225 = vsel %vm1224, %v984, 0.0
  %v1226 = vadd.f32 %v1225, 0.0
  %vm1227 = vcmp.gt.s32.totalorder %v746, 7
  %v1228 = vsel %vm1227, %v1223, 0.0
  %v1229 = vadd.f32 %v1228, 0.0
  %s1230 = scalar_lea.vmem [#allocation2], 32
  %v1231 = vld [vmem:[%s1230] sm:$0xff]
  %v1232 = vld [vmem:[%s1230 + $0x8] sm:$0xff]
  %v1233 = vld [vmem:[%s1230 + $0x10] sm:$0xff]
  %v1234 = vld [vmem:[%s1230 + $0x18] sm:$0xff]
  %1235 = vmatprep.subr.mxu0 %v752
  %1236 = vmatpush1.msra.mxu0 %v751
  %1237 = vmatprep.subr.mxu0 %v756
  %1238 = vmatpush1.msra.mxu0 %v755
  %1239 = vmatprep.subr.mxu0 %v760
  %1240 = vmatpush1.msra.mxu0 %v759
  %1241 = vmatprep.subr.mxu0 %v764
  %1242 = vmatpush1.msra.mxu0 %v763
  %1243 = vmatprep.subr.mxu0 %v768
  %1244 = vmatpush1.msra.mxu0 %v767
  %1245 = vmatprep.subr.mxu0 %v772
  %1246 = vmatpush1.msra.mxu0 %v771
  %1247 = vmatprep.subr.mxu0 %v776
  %1248 = vmatpush1.msra.mxu0 %v775
  %1249 = vmatprep.subr.mxu0 %v780
  %1250 = vmatpush1.msra.mxu0 %v779
  %1251 = vmatprep.subr.mxu0 %v784
  %1252 = vmatpush1.msra.mxu0 %v783
  %1253 = vmatprep.subr.mxu0 %v788
  %1254 = vmatpush1.msra.mxu0 %v787
  %1255 = vmatprep.subr.mxu0 %v792
  %1256 = vmatpush1.msra.mxu0 %v791
  %1257 = vmatprep.subr.mxu0 %v796
  %1258 = vmatpush1.msra.mxu0 %v795
  %1259 = vmatprep.subr.mxu0 %v800
  %1260 = vmatpush1.msra.mxu0 %v799
  %1261 = vmatprep.subr.mxu0 %v804
  %1262 = vmatpush1.msra.mxu0 %v803
  %1263 = vmatprep.subr.mxu0 %v808
  %1264 = vmatpush1.msra.mxu0 %v807
  %1265 = vmatprep.subr.mxu0 %v812
  %1266 = vmatpush1.msra.mxu0 %v811
  %1267 = vmatprep.subr.mxu0 0.0
  %1268 = vmatpush1.msra.mxu0 0.0
  %1269 = vmatprep.subr.mxu0 0.0
  %1270 = vmatpush1.msra.mxu0 0.0
  %1271 = vmatprep.subr.mxu0 0.0
  %1272 = vmatpush1.msra.mxu0 0.0
  %1273 = vmatprep.subr.mxu0 0.0
  %1274 = vmatpush1.msra.mxu0 0.0
  %1275 = vmatprep.subr.mxu0 0.0
  %1276 = vmatpush1.msra.mxu0 0.0
  %1277 = vmatprep.subr.mxu0 0.0
  %1278 = vmatpush1.msra.mxu0 0.0
  %1279 = vmatprep.subr.mxu0 0.0
  %1280 = vmatpush1.msra.mxu0 0.0
  %1281 = vmatprep.subr.mxu0 0.0
  %1282 = vmatpush1.msra.mxu0 0.0
  %1283 = vmatprep.subr.mxu0 0.0
  %1284 = vmatpush1.msra.mxu0 0.0
  %1285 = vmatprep.subr.mxu0 0.0
  %1286 = vmatpush1.msra.mxu0 0.0
  %1287 = vmatprep.subr.mxu0 0.0
  %1288 = vmatpush1.msra.mxu0 0.0
  %1289 = vmatprep.subr.mxu0 0.0
  %1290 = vmatpush1.msra.mxu0 0.0
  %1291 = vmatprep.subr.mxu0 0.0
  %1292 = vmatpush1.msra.mxu0 0.0
  %1293 = vmatprep.subr.mxu0 0.0
  %1294 = vmatpush1.msra.mxu0 0.0
  %1295 = vmatprep.subr.mxu0 0.0
  %1296 = vmatpush1.msra.mxu0 0.0
  %1297 = vmatprep.subr.mxu0 0.0
  %1298 = vmatpush1.msra.mxu0 0.0
  %1299 = vmatprep.mubr.f32.mxu0 0.0
  %1300 = vmatmul.mubr.f32.gmra.mrb[0].mxu0 %v984
  %v1301 = vpop.f32.mrb[0].mxu0
  %v1302 = vadd.f32 0.0, %v1301
  %v1303 = vpop.f32.mrb[0].mxu0
  %v1304 = vadd.f32 0.0, %v1303
  %1305 = vdwg.mxu0
  %1306 = vmatprep.subr.mxu0 %v754
  %1307 = vmatpush1.msra.mxu0 %v753
  %1308 = vmatprep.subr.mxu0 %v758
  %1309 = vmatpush1.msra.mxu0 %v757
  %1310 = vmatprep.subr.mxu0 %v762
  %1311 = vmatpush1.msra.mxu0 %v761
  %1312 = vmatprep.subr.mxu0 %v766
  %1313 = vmatpush1.msra.mxu0 %v765
  %1314 = vmatprep.subr.mxu0 %v770
  %1315 = vmatpush1.msra.mxu0 %v769
  %1316 = vmatprep.subr.mxu0 %v774
  %1317 = vmatpush1.msra.mxu0 %v773
  %1318 = vmatprep.subr.mxu0 %v778
  %1319 = vmatpush1.msra.mxu0 %v777
  %1320 = vmatprep.subr.mxu0 %v782
  %1321 = vmatpush1.msra.mxu0 %v781
  %1322 = vmatprep.subr.mxu0 %v786
  %1323 = vmatpush1.msra.mxu0 %v785
  %1324 = vmatprep.subr.mxu0 %v790
  %1325 = vmatpush1.msra.mxu0 %v789
  %1326 = vmatprep.subr.mxu0 %v794
  %1327 = vmatpush1.msra.mxu0 %v793
  %1328 = vmatprep.subr.mxu0 %v798
  %1329 = vmatpush1.msra.mxu0 %v797
  %1330 = vmatprep.subr.mxu0 %v802
  %1331 = vmatpush1.msra.mxu0 %v801
  %1332 = vmatprep.subr.mxu0 %v806
  %1333 = vmatpush1.msra.mxu0 %v805
  %1334 = vmatprep.subr.mxu0 %v810
  %1335 = vmatpush1.msra.mxu0 %v809
  %1336 = vmatprep.subr.mxu0 %v814
  %1337 = vmatpush1.msra.mxu0 %v813
  %1338 = vmatprep.subr.mxu0 0.0
  %1339 = vmatpush1.msra.mxu0 0.0
  %1340 = vmatprep.subr.mxu0 0.0
  %1341 = vmatpush1.msra.mxu0 0.0
  %1342 = vmatprep.subr.mxu0 0.0
  %1343 = vmatpush1.msra.mxu0 0.0
  %1344 = vmatprep.subr.mxu0 0.0
  %1345 = vmatpush1.msra.mxu0 0.0
  %1346 = vmatprep.subr.mxu0 0.0
  %1347 = vmatpush1.msra.mxu0 0.0
  %1348 = vmatprep.subr.mxu0 0.0
  %1349 = vmatpush1.msra.mxu0 0.0
  %1350 = vmatprep.subr.mxu0 0.0
  %1351 = vmatpush1.msra.mxu0 0.0
  %1352 = vmatprep.subr.mxu0 0.0
  %1353 = vmatpush1.msra.mxu0 0.0
  %1354 = vmatprep.subr.mxu0 0.0
  %1355 = vmatpush1.msra.mxu0 0.0
  %1356 = vmatprep.subr.mxu0 0.0
  %1357 = vmatpush1.msra.mxu0 0.0
  %1358 = vmatprep.subr.mxu0 0.0
  %1359 = vmatpush1.msra.mxu0 0.0
  %1360 = vmatprep.subr.mxu0 0.0
  %1361 = vmatpush1.msra.mxu0 0.0
  %1362 = vmatprep.subr.mxu0 0.0
  %1363 = vmatpush1.msra.mxu0 0.0
  %1364 = vmatprep.subr.mxu0 0.0
  %1365 = vmatpush1.msra.mxu0 0.0
  %1366 = vmatprep.subr.mxu0 0.0
  %1367 = vmatpush1.msra.mxu0 0.0
  %1368 = vmatprep.subr.mxu0 0.0
  %1369 = vmatpush1.msra.mxu0 0.0
  %1370 = vmatprep.mubr.f32.mxu0 0.0
  %1371 = vmatmul.mubr.f32.gmra.mrb[0].mxu0 %v984
  %v1372 = vpop.f32.mrb[0].mxu0
  %v1373 = vadd.f32 0.0, %v1372
  %v1374 = vpop.f32.mrb[0].mxu0
  %v1375 = vadd.f32 0.0, %v1374
  %1376 = vdwg.mxu0
  %v1377 = vadd.f32 %v1231, %v1302
  %v1378 = vadd.f32 %v1232, %v1304
  %v1379 = vadd.f32 %v1233, %v1373
  %v1380 = vadd.f32 %v1234, %v1375
  %v1381 = vxor.u32 %v1377, 2147483648
  %v1382 = vmul.f32 %v1381, 1.442695
  %v1383 = vpow.pop %v1382
  %v1384 = vadd.f32 %v1383, 1.0
  %v1385 = vrcp.pop %v1384
  %v1386 = vmul.f32 1.0, %v1385
  %v1387 = vxor.u32 %v1378, 2147483648
  %v1388 = vmul.f32 %v1387, 1.442695
  %v1389 = vpow.pop %v1388
  %v1390 = vadd.f32 %v1389, 1.0
  %v1391 = vrcp.pop %v1390
  %v1392 = vmul.f32 1.0, %v1391
  %v1393 = vtanh.pop %v1379
  %v1394 = vxor.u32 %v1380, 2147483648
  %v1395 = vmul.f32 %v1394, 1.442695
  %v1396 = vpow.pop %v1395
  %v1397 = vadd.f32 %v1396, 1.0
  %v1398 = vrcp.pop %v1397
  %v1399 = vmul.f32 1.0, %v1398
  %v1400 = vmul.f32 %v1392, %v982
  %v1401 = vmul.f32 %v1386, %v1393
  %v1402 = vadd.f32 %v1400, %v1401
  %v1403 = vtanh.pop %v1402
  %v1404 = vmul.f32 %v1399, %v1403
  %s1405 = scalar_lea.vmem [#allocation3], 192
  %v1406 = vld [vmem:[%s1405] sm:$0xff]
  %v1407 = vld [vmem:[%s1405 + $0x8] sm:$0xff]
  %v1408 = vld [vmem:[%s1405 + $0x10] sm:$0xff]
  %v1409 = vld [vmem:[%s1405 + $0x18] sm:$0xff]
  %1410 = vmatprep.subr.mxu0 %v991
  %1411 = vmatpush1.msra.mxu0 %v990
  %1412 = vmatprep.subr.mxu0 %v995
  %1413 = vmatpush1.msra.mxu0 %v994
  %1414 = vmatprep.subr.mxu0 %v999
  %1415 = vmatpush1.msra.mxu0 %v998
  %1416 = vmatprep.subr.mxu0 %v1003
  %1417 = vmatpush1.msra.mxu0 %v1002
  %1418 = vmatprep.subr.mxu0 %v1007
  %1419 = vmatpush1.msra.mxu0 %v1006
  %1420 = vmatprep.subr.mxu0 %v1011
  %1421 = vmatpush1.msra.mxu0 %v1010
  %1422 = vmatprep.subr.mxu0 %v1015
  %1423 = vmatpush1.msra.mxu0 %v1014
  %1424 = vmatprep.subr.mxu0 %v1019
  %1425 = vmatpush1.msra.mxu0 %v1018
  %1426 = vmatprep.subr.mxu0 %v1023
  %1427 = vmatpush1.msra.mxu0 %v1022
  %1428 = vmatprep.subr.mxu0 %v1027
  %1429 = vmatpush1.msra.mxu0 %v1026
  %1430 = vmatprep.subr.mxu0 %v1031
  %1431 = vmatpush1.msra.mxu0 %v1030
  %1432 = vmatprep.subr.mxu0 %v1035
  %1433 = vmatpush1.msra.mxu0 %v1034
  %1434 = vmatprep.subr.mxu0 %v1039
  %1435 = vmatpush1.msra.mxu0 %v1038
  %1436 = vmatprep.subr.mxu0 %v1043
  %1437 = vmatpush1.msra.mxu0 %v1042
  %1438 = vmatprep.subr.mxu0 %v1047
  %1439 = vmatpush1.msra.mxu0 %v1046
  %1440 = vmatprep.subr.mxu0 %v1051
  %1441 = vmatpush1.msra.mxu0 %v1050
  %1442 = vmatprep.subr.mxu0 0.0
  %1443 = vmatpush1.msra.mxu0 0.0
  %1444 = vmatprep.subr.mxu0 0.0
  %1445 = vmatpush1.msra.mxu0 0.0
  %1446 = vmatprep.subr.mxu0 0.0
  %1447 = vmatpush1.msra.mxu0 0.0
  %1448 = vmatprep.subr.mxu0 0.0
  %1449 = vmatpush1.msra.mxu0 0.0
  %1450 = vmatprep.subr.mxu0 0.0
  %1451 = vmatpush1.msra.mxu0 0.0
  %1452 = vmatprep.subr.mxu0 0.0
  %1453 = vmatpush1.msra.mxu0 0.0
  %1454 = vmatprep.subr.mxu0 0.0
  %1455 = vmatpush1.msra.mxu0 0.0
  %1456 = vmatprep.subr.mxu0 0.0
  %1457 = vmatpush1.msra.mxu0 0.0
  %1458 = vmatprep.subr.mxu0 0.0
  %1459 = vmatpush1.msra.mxu0 0.0
  %1460 = vmatprep.subr.mxu0 0.0
  %1461 = vmatpush1.msra.mxu0 0.0
  %1462 = vmatprep.subr.mxu0 0.0
  %1463 = vmatpush1.msra.mxu0 0.0
  %1464 = vmatprep.subr.mxu0 0.0
  %1465 = vmatpush1.msra.mxu0 0.0
  %1466 = vmatprep.subr.mxu0 0.0
  %1467 = vmatpush1.msra.mxu0 0.0
  %1468 = vmatprep.subr.mxu0 0.0
  %1469 = vmatpush1.msra.mxu0 0.0
  %1470 = vmatprep.subr.mxu0 0.0
  %1471 = vmatpush1.msra.mxu0 0.0
  %1472 = vmatprep.subr.mxu0 0.0
  %1473 = vmatpush1.msra.mxu0 0.0
  %1474 = vmatprep.mubr.f32.mxu0 0.0
  %1475 = vmatmul.mubr.f32.gmra.mrb[0].mxu0 %v1223
  %v1476 = vpop.f32.mrb[0].mxu0
  %v1477 = vadd.f32 0.0, %v1476
  %v1478 = vpop.f32.mrb[0].mxu0
  %v1479 = vadd.f32 0.0, %v1478
  %1480 = vdwg.mxu0
  %1481 = vmatprep.subr.mxu0 %v993
  %1482 = vmatpush1.msra.mxu0 %v992
  %1483 = vmatprep.subr.mxu0 %v997
  %1484 = vmatpush1.msra.mxu0 %v996
  %1485 = vmatprep.subr.mxu0 %v1001
  %1486 = vmatpush1.msra.mxu0 %v1000
  %1487 = vmatprep.subr.mxu0 %v1005
  %1488 = vmatpush1.msra.mxu0 %v1004
  %1489 = vmatprep.subr.mxu0 %v1009
  %1490 = vmatpush1.msra.mxu0 %v1008
  %1491 = vmatprep.subr.mxu0 %v1013
  %1492 = vmatpush1.msra.mxu0 %v1012
  %1493 = vmatprep.subr.mxu0 %v1017
  %1494 = vmatpush1.msra.mxu0 %v1016
  %1495 = vmatprep.subr.mxu0 %v1021
  %1496 = vmatpush1.msra.mxu0 %v1020
  %1497 = vmatprep.subr.mxu0 %v1025
  %1498 = vmatpush1.msra.mxu0 %v1024
  %1499 = vmatprep.subr.mxu0 %v1029
  %1500 = vmatpush1.msra.mxu0 %v1028
  %1501 = vmatprep.subr.mxu0 %v1033
  %1502 = vmatpush1.msra.mxu0 %v1032
  %1503 = vmatprep.subr.mxu0 %v1037
  %1504 = vmatpush1.msra.mxu0 %v1036
  %1505 = vmatprep.subr.mxu0 %v1041
  %1506 = vmatpush1.msra.mxu0 %v1040
  %1507 = vmatprep.subr.mxu0 %v1045
  %1508 = vmatpush1.msra.mxu0 %v1044
  %1509 = vmatprep.subr.mxu0 %v1049
  %1510 = vmatpush1.msra.mxu0 %v1048
  %1511 = vmatprep.subr.mxu0 %v1053
  %1512 = vmatpush1.msra.mxu0 %v1052
  %1513 = vmatprep.subr.mxu0 0.0
  %1514 = vmatpush1.msra.mxu0 0.0
  %1515 = vmatprep.subr.mxu0 0.0
  %1516 = vmatpush1.msra.mxu0 0.0
  %1517 = vmatprep.subr.mxu0 0.0
  %1518 = vmatpush1.msra.mxu0 0.0
  %1519 = vmatprep.subr.mxu0 0.0
  %1520 = vmatpush1.msra.mxu0 0.0
  %1521 = vmatprep.subr.mxu0 0.0
  %1522 = vmatpush1.msra.mxu0 0.0
  %1523 = vmatprep.subr.mxu0 0.0
  %1524 = vmatpush1.msra.mxu0 0.0
  %1525 = vmatprep.subr.mxu0 0.0
  %1526 = vmatpush1.msra.mxu0 0.0
  %1527 = vmatprep.subr.mxu0 0.0
  %1528 = vmatpush1.msra.mxu0 0.0
  %1529 = vmatprep.subr.mxu0 0.0
  %1530 = vmatpush1.msra.mxu0 0.0
  %1531 = vmatprep.subr.mxu0 0.0
  %1532 = vmatpush1.msra.mxu0 0.0
  %1533 = vmatprep.subr.mxu0 0.0
  %1534 = vmatpush1.msra.mxu0 0.0
  %1535 = vmatprep.subr.mxu0 0.0
  %1536 = vmatpush1.msra.mxu0 0.0
  %1537 = vmatprep.subr.mxu0 0.0
  %1538 = vmatpush1.msra.mxu0 0.0
  %1539 = vmatprep.subr.mxu0 0.0
  %1540 = vmatpush1.msra.mxu0 0.0
  %1541 = vmatprep.subr.mxu0 0.0
  %1542 = vmatpush1.msra.mxu0 0.0
  %1543 = vmatprep.subr.mxu0 0.0
  %1544 = vmatpush1.msra.mxu0 0.0
  %1545 = vmatprep.mubr.f32.mxu0 0.0
  %1546 = vmatmul.mubr.f32.gmra.mrb[0].mxu0 %v1223
  %v1547 = vpop.f32.mrb[0].mxu0
  %v1548 = vadd.f32 0.0, %v1547
  %v1549 = vpop.f32.mrb[0].mxu0
  %v1550 = vadd.f32 0.0, %v1549
  %1551 = vdwg.mxu0
  %v1552 = vadd.f32 %v1406, %v1477
  %v1553 = vadd.f32 %v1407, %v1479
  %v1554 = vadd.f32 %v1408, %v1548
  %v1555 = vadd.f32 %v1409, %v1550
  %v1556 = vxor.u32 %v1552, 2147483648
  %v1557 = vmul.f32 %v1556, 1.442695
  %v1558 = vpow.pop %v1557
  %v1559 = vadd.f32 %v1558, 1.0
  %v1560 = vrcp.pop %v1559
  %v1561 = vmul.f32 1.0, %v1560
  %v1562 = vxor.u32 %v1553, 2147483648
  %v1563 = vmul.f32 %v1562, 1.442695
  %v1564 = vpow.pop %v1563
  %v1565 = vadd.f32 %v1564, 1.0
  %v1566 = vrcp.pop %v1565
  %v1567 = vmul.f32 1.0, %v1566
  %v1568 = vtanh.pop %v1554
  %v1569 = vxor.u32 %v1555, 2147483648
  %v1570 = vmul.f32 %v1569, 1.442695
  %v1571 = vpow.pop %v1570
  %v1572 = vadd.f32 %v1571, 1.0
  %v1573 = vrcp.pop %v1572
  %v1574 = vmul.f32 1.0, %v1573
  %v1575 = vmul.f32 %v1567, %v1221
  %v1576 = vmul.f32 %v1561, %v1568
  %v1577 = vadd.f32 %v1575, %v1576
  %v1578 = vtanh.pop %v1577
  %v1579 = vmul.f32 %v1574, %v1578
  %vm1580 = vcmp.gt.s32.totalorder %v746, 1
  %v1581 = vsel %vm1580, %v1404, 0.0
  %v1582 = vadd.f32 %v1226, %v1581
  %vm1583 = vcmp.gt.s32.totalorder %v746, 6
  %v1584 = vsel %vm1583, %v1579, 0.0
  %v1585 = vadd.f32 %v1229, %v1584
  %s1586 = scalar_lea.vmem [#allocation2], 64
  %v1587 = vld [vmem:[%s1586] sm:$0xff]
  %v1588 = vld [vmem:[%s1586 + $0x8] sm:$0xff]
  %v1589 = vld [vmem:[%s1586 + $0x10] sm:$0xff]
  %v1590 = vld [vmem:[%s1586 + $0x18] sm:$0xff]
  %1591 = vmatprep.subr.mxu0 %v752
  %1592 = vmatpush1.msra.mxu0 %v751
  %1593 = vmatprep.subr.mxu0 %v756
  %1594 = vmatpush1.msra.mxu0 %v755
  %1595 = vmatprep.subr.mxu0 %v760
  %1596 = vmatpush1.msra.mxu0 %v759
  %1597 = vmatprep.subr.mxu0 %v764
  %1598 = vmatpush1.msra.mxu0 %v763
  %1599 = vmatprep.subr.mxu0 %v768
  %1600 = vmatpush1.msra.mxu0 %v767
  %1601 = vmatprep.subr.mxu0 %v772
  %1602 = vmatpush1.msra.mxu0 %v771
  %1603 = vmatprep.subr.mxu0 %v776
  %1604 = vmatpush1.msra.mxu0 %v775
  %1605 = vmatprep.subr.mxu0 %v780
  %1606 = vmatpush1.msra.mxu0 %v779
  %1607 = vmatprep.subr.mxu0 %v784
  %1608 = vmatpush1.msra.mxu0 %v783
  %1609 = vmatprep.subr.mxu0 %v788
  %1610 = vmatpush1.msra.mxu0 %v787
  %1611 = vmatprep.subr.mxu0 %v792
  %1612 = vmatpush1.msra.mxu0 %v791
  %1613 = vmatprep.subr.mxu0 %v796
  %1614 = vmatpush1.msra.mxu0 %v795
  %1615 = vmatprep.subr.mxu0 %v800
  %1616 = vmatpush1.msra.mxu0 %v799
  %1617 = vmatprep.subr.mxu0 %v804
  %1618 = vmatpush1.msra.mxu0 %v803
  %1619 = vmatprep.subr.mxu0 %v808
  %1620 = vmatpush1.msra.mxu0 %v807
  %1621 = vmatprep.subr.mxu0 %v812
  %1622 = vmatpush1.msra.mxu0 %v811
  %1623 = vmatprep.subr.mxu0 0.0
  %1624 = vmatpush1.msra.mxu0 0.0
  %1625 = vmatprep.subr.mxu0 0.0
  %1626 = vmatpush1.msra.mxu0 0.0
  %1627 = vmatprep.subr.mxu0 0.0
  %1628 = vmatpush1.msra.mxu0 0.0
  %1629 = vmatprep.subr.mxu0 0.0
  %1630 = vmatpush1.msra.mxu0 0.0
  %1631 = vmatprep.subr.mxu0 0.0
  %1632 = vmatpush1.msra.mxu0 0.0
  %1633 = vmatprep.subr.mxu0 0.0
  %1634 = vmatpush1.msra.mxu0 0.0
  %1635 = vmatprep.subr.mxu0 0.0
  %1636 = vmatpush1.msra.mxu0 0.0
  %1637 = vmatprep.subr.mxu0 0.0
  %1638 = vmatpush1.msra.mxu0 0.0
  %1639 = vmatprep.subr.mxu0 0.0
  %1640 = vmatpush1.msra.mxu0 0.0
  %1641 = vmatprep.subr.mxu0 0.0
  %1642 = vmatpush1.msra.mxu0 0.0
  %1643 = vmatprep.subr.mxu0 0.0
  %1644 = vmatpush1.msra.mxu0 0.0
  %1645 = vmatprep.subr.mxu0 0.0
  %1646 = vmatpush1.msra.mxu0 0.0
  %1647 = vmatprep.subr.mxu0 0.0
  %1648 = vmatpush1.msra.mxu0 0.0
  %1649 = vmatprep.subr.mxu0 0.0
  %1650 = vmatpush1.msra.mxu0 0.0
  %1651 = vmatprep.subr.mxu0 0.0
  %1652 = vmatpush1.msra.mxu0 0.0
  %1653 = vmatprep.subr.mxu0 0.0
  %1654 = vmatpush1.msra.mxu0 0.0
  %1655 = vmatprep.mubr.f32.mxu0 0.0
  %1656 = vmatmul.mubr.f32.gmra.mrb[0].mxu0 %v1404
  %v1657 = vpop.f32.mrb[0].mxu0
  %v1658 = vadd.f32 0.0, %v1657
  %v1659 = vpop.f32.mrb[0].mxu0
  %v1660 = vadd.f32 0.0, %v1659
  %1661 = vdwg.mxu0
  %1662 = vmatprep.subr.mxu0 %v754
  %1663 = vmatpush1.msra.mxu0 %v753
  %1664 = vmatprep.subr.mxu0 %v758
  %1665 = vmatpush1.msra.mxu0 %v757
  %1666 = vmatprep.subr.mxu0 %v762
  %1667 = vmatpush1.msra.mxu0 %v761
  %1668 = vmatprep.subr.mxu0 %v766
  %1669 = vmatpush1.msra.mxu0 %v765
  %1670 = vmatprep.subr.mxu0 %v770
  %1671 = vmatpush1.msra.mxu0 %v769
  %1672 = vmatprep.subr.mxu0 %v774
  %1673 = vmatpush1.msra.mxu0 %v773
  %1674 = vmatprep.subr.mxu0 %v778
  %1675 = vmatpush1.msra.mxu0 %v777
  %1676 = vmatprep.subr.mxu0 %v782
  %1677 = vmatpush1.msra.mxu0 %v781
  %1678 = vmatprep.subr.mxu0 %v786
  %1679 = vmatpush1.msra.mxu0 %v785
  %1680 = vmatprep.subr.mxu0 %v790
  %1681 = vmatpush1.msra.mxu0 %v789
  %1682 = vmatprep.subr.mxu0 %v794
  %1683 = vmatpush1.msra.mxu0 %v793
  %1684 = vmatprep.subr.mxu0 %v798
  %1685 = vmatpush1.msra.mxu0 %v797
  %1686 = vmatprep.subr.mxu0 %v802
  %1687 = vmatpush1.msra.mxu0 %v801
  %1688 = vmatprep.subr.mxu0 %v806
  %1689 = vmatpush1.msra.mxu0 %v805
  %1690 = vmatprep.subr.mxu0 %v810
  %1691 = vmatpush1.msra.mxu0 %v809
  %1692 = vmatprep.subr.mxu0 %v814
  %1693 = vmatpush1.msra.mxu0 %v813
  %1694 = vmatprep.subr.mxu0 0.0
  %1695 = vmatpush1.msra.mxu0 0.0
  %1696 = vmatprep.subr.mxu0 0.0
  %1697 = vmatpush1.msra.mxu0 0.0
  %1698 = vmatprep.subr.mxu0 0.0
  %1699 = vmatpush1.msra.mxu0 0.0
  %1700 = vmatprep.subr.mxu0 0.0
  %1701 = vmatpush1.msra.mxu0 0.0
  %1702 = vmatprep.subr.mxu0 0.0
  %1703 = vmatpush1.msra.mxu0 0.0
  %1704 = vmatprep.subr.mxu0 0.0
  %1705 = vmatpush1.msra.mxu0 0.0
  %1706 = vmatprep.subr.mxu0 0.0
  %1707 = vmatpush1.msra.mxu0 0.0
  %1708 = vmatprep.subr.mxu0 0.0
  %1709 = vmatpush1.msra.mxu0 0.0
  %1710 = vmatprep.subr.mxu0 0.0
  %1711 = vmatpush1.msra.mxu0 0.0
  %1712 = vmatprep.subr.mxu0 0.0
  %1713 = vmatpush1.msra.mxu0 0.0
  %1714 = vmatprep.subr.mxu0 0.0
  %1715 = vmatpush1.msra.mxu0 0.0
  %1716 = vmatprep.subr.mxu0 0.0
  %1717 = vmatpush1.msra.mxu0 0.0
  %1718 = vmatprep.subr.mxu0 0.0
  %1719 = vmatpush1.msra.mxu0 0.0
  %1720 = vmatprep.subr.mxu0 0.0
  %1721 = vmatpush1.msra.mxu0 0.0
  %1722 = vmatprep.subr.mxu0 0.0
  %1723 = vmatpush1.msra.mxu0 0.0
  %1724 = vmatprep.subr.mxu0 0.0
  %1725 = vmatpush1.msra.mxu0 0.0
  %1726 = vmatprep.mubr.f32.mxu0 0.0
  %1727 = vmatmul.mubr.f32.gmra.mrb[0].mxu0 %v1404
  %v1728 = vpop.f32.mrb[0].mxu0
  %v1729 = vadd.f32 0.0, %v1728
  %v1730 = vpop.f32.mrb[0].mxu0
  %v1731 = vadd.f32 0.0, %v1730
  %1732 = vdwg.mxu0
  %v1733 = vadd.f32 %v1587, %v1658
  %v1734 = vadd.f32 %v1588, %v1660
  %v1735 = vadd.f32 %v1589, %v1729
  %v1736 = vadd.f32 %v1590, %v1731
  %v1737 = vxor.u32 %v1733, 2147483648
  %v1738 = vmul.f32 %v1737, 1.442695
  %v1739 = vpow.pop %v1738
  %v1740 = vadd.f32 %v1739, 1.0
  %v1741 = vrcp.pop %v1740
  %v1742 = vmul.f32 1.0, %v1741
  %v1743 = vxor.u32 %v1734, 2147483648
  %v1744 = vmul.f32 %v1743, 1.442695
  %v1745 = vpow.pop %v1744
  %v1746 = vadd.f32 %v1745, 1.0
  %v1747 = vrcp.pop %v1746
  %v1748 = vmul.f32 1.0, %v1747
  %v1749 = vtanh.pop %v1735
  %v1750 = vxor.u32 %v1736, 2147483648
  %v1751 = vmul.f32 %v1750, 1.442695
  %v1752 = vpow.pop %v1751
  %v1753 = vadd.f32 %v1752, 1.0
  %v1754 = vrcp.pop %v1753
  %v1755 = vmul.f32 1.0, %v1754
  %v1756 = vmul.f32 %v1748, %v1402
  %v1757 = vmul.f32 %v1742, %v1749
  %v1758 = vadd.f32 %v1756, %v1757
  %v1759 = vtanh.pop %v1758
  %v1760 = vmul.f32 %v1755, %v1759
  %s1761 = scalar_lea.vmem [#allocation3], 160
  %v1762 = vld [vmem:[%s1761] sm:$0xff]
  %v1763 = vld [vmem:[%s1761 + $0x8] sm:$0xff]
  %v1764 = vld [vmem:[%s1761 + $0x10] sm:$0xff]
  %v1765 = vld [vmem:[%s1761 + $0x18] sm:$0xff]
  %1766 = vmatprep.subr.mxu0 %v991
  %1767 = vmatpush1.msra.mxu0 %v990
  %1768 = vmatprep.subr.mxu0 %v995
  %1769 = vmatpush1.msra.mxu0 %v994
  %1770 = vmatprep.subr.mxu0 %v999
  %1771 = vmatpush1.msra.mxu0 %v998
  %1772 = vmatprep.subr.mxu0 %v1003
  %1773 = vmatpush1.msra.mxu0 %v1002
  %1774 = vmatprep.subr.mxu0 %v1007
  %1775 = vmatpush1.msra.mxu0 %v1006
  %1776 = vmatprep.subr.mxu0 %v1011
  %1777 = vmatpush1.msra.mxu0 %v1010
  %1778 = vmatprep.subr.mxu0 %v1015
  %1779 = vmatpush1.msra.mxu0 %v1014
  %1780 = vmatprep.subr.mxu0 %v1019
  %1781 = vmatpush1.msra.mxu0 %v1018
  %1782 = vmatprep.subr.mxu0 %v1023
  %1783 = vmatpush1.msra.mxu0 %v1022
  %1784 = vmatprep.subr.mxu0 %v1027
  %1785 = vmatpush1.msra.mxu0 %v1026
  %1786 = vmatprep.subr.mxu0 %v1031
  %1787 = vmatpush1.msra.mxu0 %v1030
  %1788 = vmatprep.subr.mxu0 %v1035
  %1789 = vmatpush1.msra.mxu0 %v1034
  %1790 = vmatprep.subr.mxu0 %v1039
  %1791 = vmatpush1.msra.mxu0 %v1038
  %1792 = vmatprep.subr.mxu0 %v1043
  %1793 = vmatpush1.msra.mxu0 %v1042
  %1794 = vmatprep.subr.mxu0 %v1047
  %1795 = vmatpush1.msra.mxu0 %v1046
  %1796 = vmatprep.subr.mxu0 %v1051
  %1797 = vmatpush1.msra.mxu0 %v1050
  %1798 = vmatprep.subr.mxu0 0.0
  %1799 = vmatpush1.msra.mxu0 0.0
  %1800 = vmatprep.subr.mxu0 0.0
  %1801 = vmatpush1.msra.mxu0 0.0
  %1802 = vmatprep.subr.mxu0 0.0
  %1803 = vmatpush1.msra.mxu0 0.0
  %1804 = vmatprep.subr.mxu0 0.0
  %1805 = vmatpush1.msra.mxu0 0.0
  %1806 = vmatprep.subr.mxu0 0.0
  %1807 = vmatpush1.msra.mxu0 0.0
  %1808 = vmatprep.subr.mxu0 0.0
  %1809 = vmatpush1.msra.mxu0 0.0
  %1810 = vmatprep.subr.mxu0 0.0
  %1811 = vmatpush1.msra.mxu0 0.0
  %1812 = vmatprep.subr.mxu0 0.0
  %1813 = vmatpush1.msra.mxu0 0.0
  %1814 = vmatprep.subr.mxu0 0.0
  %1815 = vmatpush1.msra.mxu0 0.0
  %1816 = vmatprep.subr.mxu0 0.0
  %1817 = vmatpush1.msra.mxu0 0.0
  %1818 = vmatprep.subr.mxu0 0.0
  %1819 = vmatpush1.msra.mxu0 0.0
  %1820 = vmatprep.subr.mxu0 0.0
  %1821 = vmatpush1.msra.mxu0 0.0
  %1822 = vmatprep.subr.mxu0 0.0
  %1823 = vmatpush1.msra.mxu0 0.0
  %1824 = vmatprep.subr.mxu0 0.0
  %1825 = vmatpush1.msra.mxu0 0.0
  %1826 = vmatprep.subr.mxu0 0.0
  %1827 = vmatpush1.msra.mxu0 0.0
  %1828 = vmatprep.subr.mxu0 0.0
  %1829 = vmatpush1.msra.mxu0 0.0
  %1830 = vmatprep.mubr.f32.mxu0 0.0
  %1831 = vmatmul.mubr.f32.gmra.mrb[0].mxu0 %v1579
  %v1832 = vpop.f32.mrb[0].mxu0
  %v1833 = vadd.f32 0.0, %v1832
  %v1834 = vpop.f32.mrb[0].mxu0
  %v1835 = vadd.f32 0.0, %v1834
  %1836 = vdwg.mxu0
  %1837 = vmatprep.subr.mxu0 %v993
  %1838 = vmatpush1.msra.mxu0 %v992
  %1839 = vmatprep.subr.mxu0 %v997
  %1840 = vmatpush1.msra.mxu0 %v996
  %1841 = vmatprep.subr.mxu0 %v1001
  %1842 = vmatpush1.msra.mxu0 %v1000
  %1843 = vmatprep.subr.mxu0 %v1005
  %1844 = vmatpush1.msra.mxu0 %v1004
  %1845 = vmatprep.subr.mxu0 %v1009
  %1846 = vmatpush1.msra.mxu0 %v1008
  %1847 = vmatprep.subr.mxu0 %v1013
  %1848 = vmatpush1.msra.mxu0 %v1012
  %1849 = vmatprep.subr.mxu0 %v1017
  %1850 = vmatpush1.msra.mxu0 %v1016
  %1851 = vmatprep.subr.mxu0 %v1021
  %1852 = vmatpush1.msra.mxu0 %v1020
  %1853 = vmatprep.subr.mxu0 %v1025
  %1854 = vmatpush1.msra.mxu0 %v1024
  %1855 = vmatprep.subr.mxu0 %v1029
  %1856 = vmatpush1.msra.mxu0 %v1028
  %1857 = vmatprep.subr.mxu0 %v1033
  %1858 = vmatpush1.msra.mxu0 %v1032
  %1859 = vmatprep.subr.mxu0 %v1037
  %1860 = vmatpush1.msra.mxu0 %v1036
  %1861 = vmatprep.subr.mxu0 %v1041
  %1862 = vmatpush1.msra.mxu0 %v1040
  %1863 = vmatprep.subr.mxu0 %v1045
  %1864 = vmatpush1.msra.mxu0 %v1044
  %1865 = vmatprep.subr.mxu0 %v1049
  %1866 = vmatpush1.msra.mxu0 %v1048
  %1867 = vmatprep.subr.mxu0 %v1053
  %1868 = vmatpush1.msra.mxu0 %v1052
  %1869 = vmatprep.subr.mxu0 0.0
  %1870 = vmatpush1.msra.mxu0 0.0
  %1871 = vmatprep.subr.mxu0 0.0
  %1872 = vmatpush1.msra.mxu0 0.0
  %1873 = vmatprep.subr.mxu0 0.0
  %1874 = vmatpush1.msra.mxu0 0.0
  %1875 = vmatprep.subr.mxu0 0.0
  %1876 = vmatpush1.msra.mxu0 0.0
  %1877 = vmatprep.subr.mxu0 0.0
  %1878 = vmatpush1.msra.mxu0 0.0
  %1879 = vmatprep.subr.mxu0 0.0
  %1880 = vmatpush1.msra.mxu0 0.0
  %1881 = vmatprep.subr.mxu0 0.0
  %1882 = vmatpush1.msra.mxu0 0.0
  %1883 = vmatprep.subr.mxu0 0.0
  %1884 = vmatpush1.msra.mxu0 0.0
  %1885 = vmatprep.subr.mxu0 0.0
  %1886 = vmatpush1.msra.mxu0 0.0
  %1887 = vmatprep.subr.mxu0 0.0
  %1888 = vmatpush1.msra.mxu0 0.0
  %1889 = vmatprep.subr.mxu0 0.0
  %1890 = vmatpush1.msra.mxu0 0.0
  %1891 = vmatprep.subr.mxu0 0.0
  %1892 = vmatpush1.msra.mxu0 0.0
  %1893 = vmatprep.subr.mxu0 0.0
  %1894 = vmatpush1.msra.mxu0 0.0
  %1895 = vmatprep.subr.mxu0 0.0
  %1896 = vmatpush1.msra.mxu0 0.0
  %1897 = vmatprep.subr.mxu0 0.0
  %1898 = vmatpush1.msra.mxu0 0.0
  %1899 = vmatprep.subr.mxu0 0.0
  %1900 = vmatpush1.msra.mxu0 0.0
  %1901 = vmatprep.mubr.f32.mxu0 0.0
  %1902 = vmatmul.mubr.f32.gmra.mrb[0].mxu0 %v1579
  %v1903 = vpop.f32.mrb[0].mxu0
  %v1904 = vadd.f32 0.0, %v1903
  %v1905 = vpop.f32.mrb[0].mxu0
  %v1906 = vadd.f32 0.0, %v1905
  %1907 = vdwg.mxu0
  %v1908 = vadd.f32 %v1762, %v1833
  %v1909 = vadd.f32 %v1763, %v1835
  %v1910 = vadd.f32 %v1764, %v1904
  %v1911 = vadd.f32 %v1765, %v1906
  %v1912 = vxor.u32 %v1908, 2147483648
  %v1913 = vmul.f32 %v1912, 1.442695
  %v1914 = vpow.pop %v1913
  %v1915 = vadd.f32 %v1914, 1.0
  %v1916 = vrcp.pop %v1915
  %v1917 = vmul.f32 1.0, %v1916
  %v1918 = vxor.u32 %v1909, 2147483648
  %v1919 = vmul.f32 %v1918, 1.442695
  %v1920 = vpow.pop %v1919
  %v1921 = vadd.f32 %v1920, 1.0
  %v1922 = vrcp.pop %v1921
  %v1923 = vmul.f32 1.0, %v1922
  %v1924 = vtanh.pop %v1910
  %v1925 = vxor.u32 %v1911, 2147483648
  %v1926 = vmul.f32 %v1925, 1.442695
  %v1927 = vpow.pop %v1926
  %v1928 = vadd.f32 %v1927, 1.0
  %v1929 = vrcp.pop %v1928
  %v1930 = vmul.f32 1.0, %v1929
  %v1931 = vmul.f32 %v1923, %v1577
  %v1932 = vmul.f32 %v1917, %v1924
  %v1933 = vadd.f32 %v1931, %v1932
  %v1934 = vtanh.pop %v1933
  %v1935 = vmul.f32 %v1930, %v1934
  %vm1936 = vcmp.gt.s32.totalorder %v746, 2
  %v1937 = vsel %vm1936, %v1760, 0.0
  %v1938 = vadd.f32 %v1582, %v1937
  %vm1939 = vcmp.gt.s32.totalorder %v746, 5
  %v1940 = vsel %vm1939, %v1935, 0.0
  %v1941 = vadd.f32 %v1585, %v1940
  %s1942 = scalar_lea.vmem [#allocation2], 96
  %v1943 = vld [vmem:[%s1942] sm:$0xff]
  %v1944 = vld [vmem:[%s1942 + $0x8] sm:$0xff]
  %v1945 = vld [vmem:[%s1942 + $0x10] sm:$0xff]
  %v1946 = vld [vmem:[%s1942 + $0x18] sm:$0xff]
  %1947 = vmatprep.subr.mxu0 %v752
  %1948 = vmatpush1.msra.mxu0 %v751
  %1949 = vmatprep.subr.mxu0 %v756
  %1950 = vmatpush1.msra.mxu0 %v755
  %1951 = vmatprep.subr.mxu0 %v760
  %1952 = vmatpush1.msra.mxu0 %v759
  %1953 = vmatprep.subr.mxu0 %v764
  %1954 = vmatpush1.msra.mxu0 %v763
  %1955 = vmatprep.subr.mxu0 %v768
  %1956 = vmatpush1.msra.mxu0 %v767
  %1957 = vmatprep.subr.mxu0 %v772
  %1958 = vmatpush1.msra.mxu0 %v771
  %1959 = vmatprep.subr.mxu0 %v776
  %1960 = vmatpush1.msra.mxu0 %v775
  %1961 = vmatprep.subr.mxu0 %v780
  %1962 = vmatpush1.msra.mxu0 %v779
  %1963 = vmatprep.subr.mxu0 %v784
  %1964 = vmatpush1.msra.mxu0 %v783
  %1965 = vmatprep.subr.mxu0 %v788
  %1966 = vmatpush1.msra.mxu0 %v787
  %1967 = vmatprep.subr.mxu0 %v792
  %1968 = vmatpush1.msra.mxu0 %v791
  %1969 = vmatprep.subr.mxu0 %v796
  %1970 = vmatpush1.msra.mxu0 %v795
  %1971 = vmatprep.subr.mxu0 %v800
  %1972 = vmatpush1.msra.mxu0 %v799
  %1973 = vmatprep.subr.mxu0 %v804
  %1974 = vmatpush1.msra.mxu0 %v803
  %1975 = vmatprep.subr.mxu0 %v808
  %1976 = vmatpush1.msra.mxu0 %v807
  %1977 = vmatprep.subr.mxu0 %v812
  %1978 = vmatpush1.msra.mxu0 %v811
  %1979 = vmatprep.subr.mxu0 0.0
  %1980 = vmatpush1.msra.mxu0 0.0
  %1981 = vmatprep.subr.mxu0 0.0
  %1982 = vmatpush1.msra.mxu0 0.0
  %1983 = vmatprep.subr.mxu0 0.0
  %1984 = vmatpush1.msra.mxu0 0.0
  %1985 = vmatprep.subr.mxu0 0.0
  %1986 = vmatpush1.msra.mxu0 0.0
  %1987 = vmatprep.subr.mxu0 0.0
  %1988 = vmatpush1.msra.mxu0 0.0
  %1989 = vmatprep.subr.mxu0 0.0
  %1990 = vmatpush1.msra.mxu0 0.0
  %1991 = vmatprep.subr.mxu0 0.0
  %1992 = vmatpush1.msra.mxu0 0.0
  %1993 = vmatprep.subr.mxu0 0.0
  %1994 = vmatpush1.msra.mxu0 0.0
  %1995 = vmatprep.subr.mxu0 0.0
  %1996 = vmatpush1.msra.mxu0 0.0
  %1997 = vmatprep.subr.mxu0 0.0
  %1998 = vmatpush1.msra.mxu0 0.0
  %1999 = vmatprep.subr.mxu0 0.0
  %2000 = vmatpush1.msra.mxu0 0.0
  %2001 = vmatprep.subr.mxu0 0.0
  %2002 = vmatpush1.msra.mxu0 0.0
  %2003 = vmatprep.subr.mxu0 0.0
  %2004 = vmatpush1.msra.mxu0 0.0
  %2005 = vmatprep.subr.mxu0 0.0
  %2006 = vmatpush1.msra.mxu0 0.0
  %2007 = vmatprep.subr.mxu0 0.0
  %2008 = vmatpush1.msra.mxu0 0.0
  %2009 = vmatprep.subr.mxu0 0.0
  %2010 = vmatpush1.msra.mxu0 0.0
  %2011 = vmatprep.mubr.f32.mxu0 0.0
  %2012 = vmatmul.mubr.f32.gmra.mrb[0].mxu0 %v1760
  %v2013 = vpop.f32.mrb[0].mxu0
  %v2014 = vadd.f32 0.0, %v2013
  %v2015 = vpop.f32.mrb[0].mxu0
  %v2016 = vadd.f32 0.0, %v2015
  %2017 = vdwg.mxu0
  %2018 = vmatprep.subr.mxu0 %v754
  %2019 = vmatpush1.msra.mxu0 %v753
  %2020 = vmatprep.subr.mxu0 %v758
  %2021 = vmatpush1.msra.mxu0 %v757
  %2022 = vmatprep.subr.mxu0 %v762
  %2023 = vmatpush1.msra.mxu0 %v761
  %2024 = vmatprep.subr.mxu0 %v766
  %2025 = vmatpush1.msra.mxu0 %v765
  %2026 = vmatprep.subr.mxu0 %v770
  %2027 = vmatpush1.msra.mxu0 %v769
  %2028 = vmatprep.subr.mxu0 %v774
  %2029 = vmatpush1.msra.mxu0 %v773
  %2030 = vmatprep.subr.mxu0 %v778
  %2031 = vmatpush1.msra.mxu0 %v777
  %2032 = vmatprep.subr.mxu0 %v782
  %2033 = vmatpush1.msra.mxu0 %v781
  %2034 = vmatprep.subr.mxu0 %v786
  %2035 = vmatpush1.msra.mxu0 %v785
  %2036 = vmatprep.subr.mxu0 %v790
  %2037 = vmatpush1.msra.mxu0 %v789
  %2038 = vmatprep.subr.mxu0 %v794
  %2039 = vmatpush1.msra.mxu0 %v793
  %2040 = vmatprep.subr.mxu0 %v798
  %2041 = vmatpush1.msra.mxu0 %v797
  %2042 = vmatprep.subr.mxu0 %v802
  %2043 = vmatpush1.msra.mxu0 %v801
  %2044 = vmatprep.subr.mxu0 %v806
  %2045 = vmatpush1.msra.mxu0 %v805
  %2046 = vmatprep.subr.mxu0 %v810
  %2047 = vmatpush1.msra.mxu0 %v809
  %2048 = vmatprep.subr.mxu0 %v814
  %2049 = vmatpush1.msra.mxu0 %v813
  %2050 = vmatprep.subr.mxu0 0.0
  %2051 = vmatpush1.msra.mxu0 0.0
  %2052 = vmatprep.subr.mxu0 0.0
  %2053 = vmatpush1.msra.mxu0 0.0
  %2054 = vmatprep.subr.mxu0 0.0
  %2055 = vmatpush1.msra.mxu0 0.0
  %2056 = vmatprep.subr.mxu0 0.0
  %2057 = vmatpush1.msra.mxu0 0.0
  %2058 = vmatprep.subr.mxu0 0.0
  %2059 = vmatpush1.msra.mxu0 0.0
  %2060 = vmatprep.subr.mxu0 0.0
  %2061 = vmatpush1.msra.mxu0 0.0
  %2062 = vmatprep.subr.mxu0 0.0
  %2063 = vmatpush1.msra.mxu0 0.0
  %2064 = vmatprep.subr.mxu0 0.0
  %2065 = vmatpush1.msra.mxu0 0.0
  %2066 = vmatprep.subr.mxu0 0.0
  %2067 = vmatpush1.msra.mxu0 0.0
  %2068 = vmatprep.subr.mxu0 0.0
  %2069 = vmatpush1.msra.mxu0 0.0
  %2070 = vmatprep.subr.mxu0 0.0
  %2071 = vmatpush1.msra.mxu0 0.0
  %2072 = vmatprep.subr.mxu0 0.0
  %2073 = vmatpush1.msra.mxu0 0.0
  %2074 = vmatprep.subr.mxu0 0.0
  %2075 = vmatpush1.msra.mxu0 0.0
  %2076 = vmatprep.subr.mxu0 0.0
  %2077 = vmatpush1.msra.mxu0 0.0
  %2078 = vmatprep.subr.mxu0 0.0
  %2079 = vmatpush1.msra.mxu0 0.0
  %2080 = vmatprep.subr.mxu0 0.0
  %2081 = vmatpush1.msra.mxu0 0.0
  %2082 = vmatprep.mubr.f32.mxu0 0.0
  %2083 = vmatmul.mubr.f32.gmra.mrb[0].mxu0 %v1760
  %v2084 = vpop.f32.mrb[0].mxu0
  %v2085 = vadd.f32 0.0, %v2084
  %v2086 = vpop.f32.mrb[0].mxu0
  %v2087 = vadd.f32 0.0, %v2086
  %2088 = vdwg.mxu0
  %v2089 = vadd.f32 %v1943, %v2014
  %v2090 = vadd.f32 %v1944, %v2016
  %v2091 = vadd.f32 %v1945, %v2085
  %v2092 = vadd.f32 %v1946, %v2087
  %v2093 = vxor.u32 %v2089, 2147483648
  %v2094 = vmul.f32 %v2093, 1.442695
  %v2095 = vpow.pop %v2094
  %v2096 = vadd.f32 %v2095, 1.0
  %v2097 = vrcp.pop %v2096
  %v2098 = vmul.f32 1.0, %v2097
  %v2099 = vxor.u32 %v2090, 2147483648
  %v2100 = vmul.f32 %v2099, 1.442695
  %v2101 = vpow.pop %v2100
  %v2102 = vadd.f32 %v2101, 1.0
  %v2103 = vrcp.pop %v2102
  %v2104 = vmul.f32 1.0, %v2103
  %v2105 = vtanh.pop %v2091
  %v2106 = vxor.u32 %v2092, 2147483648
  %v2107 = vmul.f32 %v2106, 1.442695
  %v2108 = vpow.pop %v2107
  %v2109 = vadd.f32 %v2108, 1.0
  %v2110 = vrcp.pop %v2109
  %v2111 = vmul.f32 1.0, %v2110
  %v2112 = vmul.f32 %v2104, %v1758
  %v2113 = vmul.f32 %v2098, %v2105
  %v2114 = vadd.f32 %v2112, %v2113
  %v2115 = vtanh.pop %v2114
  %v2116 = vmul.f32 %v2111, %v2115
  %s2117 = scalar_lea.vmem [#allocation3], 128
  %v2118 = vld [vmem:[%s2117] sm:$0xff]
  %v2119 = vld [vmem:[%s2117 + $0x8] sm:$0xff]
  %v2120 = vld [vmem:[%s2117 + $0x10] sm:$0xff]
  %v2121 = vld [vmem:[%s2117 + $0x18] sm:$0xff]
  %2122 = vmatprep.subr.mxu0 %v991
  %2123 = vmatpush1.msra.mxu0 %v990
  %2124 = vmatprep.subr.mxu0 %v995
  %2125 = vmatpush1.msra.mxu0 %v994
  %2126 = vmatprep.subr.mxu0 %v999
  %2127 = vmatpush1.msra.mxu0 %v998
  %2128 = vmatprep.subr.mxu0 %v1003
  %2129 = vmatpush1.msra.mxu0 %v1002
  %2130 = vmatprep.subr.mxu0 %v1007
  %2131 = vmatpush1.msra.mxu0 %v1006
  %2132 = vmatprep.subr.mxu0 %v1011
  %2133 = vmatpush1.msra.mxu0 %v1010
  %2134 = vmatprep.subr.mxu0 %v1015
  %2135 = vmatpush1.msra.mxu0 %v1014
  %2136 = vmatprep.subr.mxu0 %v1019
  %2137 = vmatpush1.msra.mxu0 %v1018
  %2138 = vmatprep.subr.mxu0 %v1023
  %2139 = vmatpush1.msra.mxu0 %v1022
  %2140 = vmatprep.subr.mxu0 %v1027
  %2141 = vmatpush1.msra.mxu0 %v1026
  %2142 = vmatprep.subr.mxu0 %v1031
  %2143 = vmatpush1.msra.mxu0 %v1030
  %2144 = vmatprep.subr.mxu0 %v1035
  %2145 = vmatpush1.msra.mxu0 %v1034
  %2146 = vmatprep.subr.mxu0 %v1039
  %2147 = vmatpush1.msra.mxu0 %v1038
  %2148 = vmatprep.subr.mxu0 %v1043
  %2149 = vmatpush1.msra.mxu0 %v1042
  %2150 = vmatprep.subr.mxu0 %v1047
  %2151 = vmatpush1.msra.mxu0 %v1046
  %2152 = vmatprep.subr.mxu0 %v1051
  %2153 = vmatpush1.msra.mxu0 %v1050
  %2154 = vmatprep.subr.mxu0 0.0
  %2155 = vmatpush1.msra.mxu0 0.0
  %2156 = vmatprep.subr.mxu0 0.0
  %2157 = vmatpush1.msra.mxu0 0.0
  %2158 = vmatprep.subr.mxu0 0.0
  %2159 = vmatpush1.msra.mxu0 0.0
  %2160 = vmatprep.subr.mxu0 0.0
  %2161 = vmatpush1.msra.mxu0 0.0
  %2162 = vmatprep.subr.mxu0 0.0
  %2163 = vmatpush1.msra.mxu0 0.0
  %2164 = vmatprep.subr.mxu0 0.0
  %2165 = vmatpush1.msra.mxu0 0.0
  %2166 = vmatprep.subr.mxu0 0.0
  %2167 = vmatpush1.msra.mxu0 0.0
  %2168 = vmatprep.subr.mxu0 0.0
  %2169 = vmatpush1.msra.mxu0 0.0
  %2170 = vmatprep.subr.mxu0 0.0
  %2171 = vmatpush1.msra.mxu0 0.0
  %2172 = vmatprep.subr.mxu0 0.0
  %2173 = vmatpush1.msra.mxu0 0.0
  %2174 = vmatprep.subr.mxu0 0.0
  %2175 = vmatpush1.msra.mxu0 0.0
  %2176 = vmatprep.subr.mxu0 0.0
  %2177 = vmatpush1.msra.mxu0 0.0
  %2178 = vmatprep.subr.mxu0 0.0
  %2179 = vmatpush1.msra.mxu0 0.0
  %2180 = vmatprep.subr.mxu0 0.0
  %2181 = vmatpush1.msra.mxu0 0.0
  %2182 = vmatprep.subr.mxu0 0.0
  %2183 = vmatpush1.msra.mxu0 0.0
  %2184 = vmatprep.subr.mxu0 0.0
  %2185 = vmatpush1.msra.mxu0 0.0
  %2186 = vmatprep.mubr.f32.mxu0 0.0
  %2187 = vmatmul.mubr.f32.gmra.mrb[0].mxu0 %v1935
  %v2188 = vpop.f32.mrb[0].mxu0
  %v2189 = vadd.f32 0.0, %v2188
  %v2190 = vpop.f32.mrb[0].mxu0
  %v2191 = vadd.f32 0.0, %v2190
  %2192 = vdwg.mxu0
  %2193 = vmatprep.subr.mxu0 %v993
  %2194 = vmatpush1.msra.mxu0 %v992
  %2195 = vmatprep.subr.mxu0 %v997
  %2196 = vmatpush1.msra.mxu0 %v996
  %2197 = vmatprep.subr.mxu0 %v1001
  %2198 = vmatpush1.msra.mxu0 %v1000
  %2199 = vmatprep.subr.mxu0 %v1005
  %2200 = vmatpush1.msra.mxu0 %v1004
  %2201 = vmatprep.subr.mxu0 %v1009
  %2202 = vmatpush1.msra.mxu0 %v1008
  %2203 = vmatprep.subr.mxu0 %v1013
  %2204 = vmatpush1.msra.mxu0 %v1012
  %2205 = vmatprep.subr.mxu0 %v1017
  %2206 = vmatpush1.msra.mxu0 %v1016
  %2207 = vmatprep.subr.mxu0 %v1021
  %2208 = vmatpush1.msra.mxu0 %v1020
  %2209 = vmatprep.subr.mxu0 %v1025
  %2210 = vmatpush1.msra.mxu0 %v1024
  %2211 = vmatprep.subr.mxu0 %v1029
  %2212 = vmatpush1.msra.mxu0 %v1028
  %2213 = vmatprep.subr.mxu0 %v1033
  %2214 = vmatpush1.msra.mxu0 %v1032
  %2215 = vmatprep.subr.mxu0 %v1037
  %2216 = vmatpush1.msra.mxu0 %v1036
  %2217 = vmatprep.subr.mxu0 %v1041
  %2218 = vmatpush1.msra.mxu0 %v1040
  %2219 = vmatprep.subr.mxu0 %v1045
  %2220 = vmatpush1.msra.mxu0 %v1044
  %2221 = vmatprep.subr.mxu0 %v1049
  %2222 = vmatpush1.msra.mxu0 %v1048
  %2223 = vmatprep.subr.mxu0 %v1053
  %2224 = vmatpush1.msra.mxu0 %v1052
  %2225 = vmatprep.subr.mxu0 0.0
  %2226 = vmatpush1.msra.mxu0 0.0
  %2227 = vmatprep.subr.mxu0 0.0
  %2228 = vmatpush1.msra.mxu0 0.0
  %2229 = vmatprep.subr.mxu0 0.0
  %2230 = vmatpush1.msra.mxu0 0.0
  %2231 = vmatprep.subr.mxu0 0.0
  %2232 = vmatpush1.msra.mxu0 0.0
  %2233 = vmatprep.subr.mxu0 0.0
  %2234 = vmatpush1.msra.mxu0 0.0
  %2235 = vmatprep.subr.mxu0 0.0
  %2236 = vmatpush1.msra.mxu0 0.0
  %2237 = vmatprep.subr.mxu0 0.0
  %2238 = vmatpush1.msra.mxu0 0.0
  %2239 = vmatprep.subr.mxu0 0.0
  %2240 = vmatpush1.msra.mxu0 0.0
  %2241 = vmatprep.subr.mxu0 0.0
  %2242 = vmatpush1.msra.mxu0 0.0
  %2243 = vmatprep.subr.mxu0 0.0
  %2244 = vmatpush1.msra.mxu0 0.0
  %2245 = vmatprep.subr.mxu0 0.0
  %2246 = vmatpush1.msra.mxu0 0.0
  %2247 = vmatprep.subr.mxu0 0.0
  %2248 = vmatpush1.msra.mxu0 0.0
  %2249 = vmatprep.subr.mxu0 0.0
  %2250 = vmatpush1.msra.mxu0 0.0
  %2251 = vmatprep.subr.mxu0 0.0
  %2252 = vmatpush1.msra.mxu0 0.0
  %2253 = vmatprep.subr.mxu0 0.0
  %2254 = vmatpush1.msra.mxu0 0.0
  %2255 = vmatprep.subr.mxu0 0.0
  %2256 = vmatpush1.msra.mxu0 0.0
  %2257 = vmatprep.mubr.f32.mxu0 0.0
  %2258 = vmatmul.mubr.f32.gmra.mrb[0].mxu0 %v1935
  %v2259 = vpop.f32.mrb[0].mxu0
  %v2260 = vadd.f32 0.0, %v2259
  %v2261 = vpop.f32.mrb[0].mxu0
  %v2262 = vadd.f32 0.0, %v2261
  %2263 = vdwg.mxu0
  %v2264 = vadd.f32 %v2118, %v2189
  %v2265 = vadd.f32 %v2119, %v2191
  %v2266 = vadd.f32 %v2120, %v2260
  %v2267 = vadd.f32 %v2121, %v2262
  %v2268 = vxor.u32 %v2264, 2147483648
  %v2269 = vmul.f32 %v2268, 1.442695
  %v2270 = vpow.pop %v2269
  %v2271 = vadd.f32 %v2270, 1.0
  %v2272 = vrcp.pop %v2271
  %v2273 = vmul.f32 1.0, %v2272
  %v2274 = vxor.u32 %v2265, 2147483648
  %v2275 = vmul.f32 %v2274, 1.442695
  %v2276 = vpow.pop %v2275
  %v2277 = vadd.f32 %v2276, 1.0
  %v2278 = vrcp.pop %v2277
  %v2279 = vmul.f32 1.0, %v2278
  %v2280 = vtanh.pop %v2266
  %v2281 = vxor.u32 %v2267, 2147483648
  %v2282 = vmul.f32 %v2281, 1.442695
  %v2283 = vpow.pop %v2282
  %v2284 = vadd.f32 %v2283, 1.0
  %v2285 = vrcp.pop %v2284
  %v2286 = vmul.f32 1.0, %v2285
  %v2287 = vmul.f32 %v2279, %v1933
  %v2288 = vmul.f32 %v2273, %v2280
  %v2289 = vadd.f32 %v2287, %v2288
  %v2290 = vtanh.pop %v2289
  %v2291 = vmul.f32 %v2286, %v2290
  %vm2292 = vcmp.gt.s32.totalorder %v746, 3
  %v2293 = vsel %vm2292, %v2116, 0.0
  %v2294 = vadd.f32 %v1938, %v2293
  %vm2295 = vcmp.gt.s32.totalorder %v746, 4
  %v2296 = vsel %vm2295, %v2291, 0.0
  %v2297 = vadd.f32 %v1941, %v2296
  %s2298 = scalar_lea.vmem [#allocation2], 128
  %v2299 = vld [vmem:[%s2298] sm:$0xff]
  %v2300 = vld [vmem:[%s2298 + $0x8] sm:$0xff]
  %v2301 = vld [vmem:[%s2298 + $0x10] sm:$0xff]
  %v2302 = vld [vmem:[%s2298 + $0x18] sm:$0xff]
  %2303 = vmatprep.subr.mxu0 %v752
  %2304 = vmatpush1.msra.mxu0 %v751
  %2305 = vmatprep.subr.mxu0 %v756
  %2306 = vmatpush1.msra.mxu0 %v755
  %2307 = vmatprep.subr.mxu0 %v760
  %2308 = vmatpush1.msra.mxu0 %v759
  %2309 = vmatprep.subr.mxu0 %v764
  %2310 = vmatpush1.msra.mxu0 %v763
  %2311 = vmatprep.subr.mxu0 %v768
  %2312 = vmatpush1.msra.mxu0 %v767
  %2313 = vmatprep.subr.mxu0 %v772
  %2314 = vmatpush1.msra.mxu0 %v771
  %2315 = vmatprep.subr.mxu0 %v776
  %2316 = vmatpush1.msra.mxu0 %v775
  %2317 = vmatprep.subr.mxu0 %v780
  %2318 = vmatpush1.msra.mxu0 %v779
  %2319 = vmatprep.subr.mxu0 %v784
  %2320 = vmatpush1.msra.mxu0 %v783
  %2321 = vmatprep.subr.mxu0 %v788
  %2322 = vmatpush1.msra.mxu0 %v787
  %2323 = vmatprep.subr.mxu0 %v792
  %2324 = vmatpush1.msra.mxu0 %v791
  %2325 = vmatprep.subr.mxu0 %v796
  %2326 = vmatpush1.msra.mxu0 %v795
  %2327 = vmatprep.subr.mxu0 %v800
  %2328 = vmatpush1.msra.mxu0 %v799
  %2329 = vmatprep.subr.mxu0 %v804
  %2330 = vmatpush1.msra.mxu0 %v803
  %2331 = vmatprep.subr.mxu0 %v808
  %2332 = vmatpush1.msra.mxu0 %v807
  %2333 = vmatprep.subr.mxu0 %v812
  %2334 = vmatpush1.msra.mxu0 %v811
  %2335 = vmatprep.subr.mxu0 0.0
  %2336 = vmatpush1.msra.mxu0 0.0
  %2337 = vmatprep.subr.mxu0 0.0
  %2338 = vmatpush1.msra.mxu0 0.0
  %2339 = vmatprep.subr.mxu0 0.0
  %2340 = vmatpush1.msra.mxu0 0.0
  %2341 = vmatprep.subr.mxu0 0.0
  %2342 = vmatpush1.msra.mxu0 0.0
  %2343 = vmatprep.subr.mxu0 0.0
  %2344 = vmatpush1.msra.mxu0 0.0
  %2345 = vmatprep.subr.mxu0 0.0
  %2346 = vmatpush1.msra.mxu0 0.0
  %2347 = vmatprep.subr.mxu0 0.0
  %2348 = vmatpush1.msra.mxu0 0.0
  %2349 = vmatprep.subr.mxu0 0.0
  %2350 = vmatpush1.msra.mxu0 0.0
  %2351 = vmatprep.subr.mxu0 0.0
  %2352 = vmatpush1.msra.mxu0 0.0
  %2353 = vmatprep.subr.mxu0 0.0
  %2354 = vmatpush1.msra.mxu0 0.0
  %2355 = vmatprep.subr.mxu0 0.0
  %2356 = vmatpush1.msra.mxu0 0.0
  %2357 = vmatprep.subr.mxu0 0.0
  %2358 = vmatpush1.msra.mxu0 0.0
  %2359 = vmatprep.subr.mxu0 0.0
  %2360 = vmatpush1.msra.mxu0 0.0
  %2361 = vmatprep.subr.mxu0 0.0
  %2362 = vmatpush1.msra.mxu0 0.0
  %2363 = vmatprep.subr.mxu0 0.0
  %2364 = vmatpush1.msra.mxu0 0.0
  %2365 = vmatprep.subr.mxu0 0.0
  %2366 = vmatpush1.msra.mxu0 0.0
  %2367 = vmatprep.mubr.f32.mxu0 0.0
  %2368 = vmatmul.mubr.f32.gmra.mrb[0].mxu0 %v2116
  %v2369 = vpop.f32.mrb[0].mxu0
  %v2370 = vadd.f32 0.0, %v2369
  %v2371 = vpop.f32.mrb[0].mxu0
  %v2372 = vadd.f32 0.0, %v2371
  %2373 = vdwg.mxu0
  %2374 = vmatprep.subr.mxu0 %v754
  %2375 = vmatpush1.msra.mxu0 %v753
  %2376 = vmatprep.subr.mxu0 %v758
  %2377 = vmatpush1.msra.mxu0 %v757
  %2378 = vmatprep.subr.mxu0 %v762
  %2379 = vmatpush1.msra.mxu0 %v761
  %2380 = vmatprep.subr.mxu0 %v766
  %2381 = vmatpush1.msra.mxu0 %v765
  %2382 = vmatprep.subr.mxu0 %v770
  %2383 = vmatpush1.msra.mxu0 %v769
  %2384 = vmatprep.subr.mxu0 %v774
  %2385 = vmatpush1.msra.mxu0 %v773
  %2386 = vmatprep.subr.mxu0 %v778
  %2387 = vmatpush1.msra.mxu0 %v777
  %2388 = vmatprep.subr.mxu0 %v782
  %2389 = vmatpush1.msra.mxu0 %v781
  %2390 = vmatprep.subr.mxu0 %v786
  %2391 = vmatpush1.msra.mxu0 %v785
  %2392 = vmatprep.subr.mxu0 %v790
  %2393 = vmatpush1.msra.mxu0 %v789
  %2394 = vmatprep.subr.mxu0 %v794
  %2395 = vmatpush1.msra.mxu0 %v793
  %2396 = vmatprep.subr.mxu0 %v798
  %2397 = vmatpush1.msra.mxu0 %v797
  %2398 = vmatprep.subr.mxu0 %v802
  %2399 = vmatpush1.msra.mxu0 %v801
  %2400 = vmatprep.subr.mxu0 %v806
  %2401 = vmatpush1.msra.mxu0 %v805
  %2402 = vmatprep.subr.mxu0 %v810
  %2403 = vmatpush1.msra.mxu0 %v809
  %2404 = vmatprep.subr.mxu0 %v814
  %2405 = vmatpush1.msra.mxu0 %v813
  %2406 = vmatprep.subr.mxu0 0.0
  %2407 = vmatpush1.msra.mxu0 0.0
  %2408 = vmatprep.subr.mxu0 0.0
  %2409 = vmatpush1.msra.mxu0 0.0
  %2410 = vmatprep.subr.mxu0 0.0
  %2411 = vmatpush1.msra.mxu0 0.0
  %2412 = vmatprep.subr.mxu0 0.0
  %2413 = vmatpush1.msra.mxu0 0.0
  %2414 = vmatprep.subr.mxu0 0.0
  %2415 = vmatpush1.msra.mxu0 0.0
  %2416 = vmatprep.subr.mxu0 0.0
  %2417 = vmatpush1.msra.mxu0 0.0
  %2418 = vmatprep.subr.mxu0 0.0
  %2419 = vmatpush1.msra.mxu0 0.0
  %2420 = vmatprep.subr.mxu0 0.0
  %2421 = vmatpush1.msra.mxu0 0.0
  %2422 = vmatprep.subr.mxu0 0.0
  %2423 = vmatpush1.msra.mxu0 0.0
  %2424 = vmatprep.subr.mxu0 0.0
  %2425 = vmatpush1.msra.mxu0 0.0
  %2426 = vmatprep.subr.mxu0 0.0
  %2427 = vmatpush1.msra.mxu0 0.0
  %2428 = vmatprep.subr.mxu0 0.0
  %2429 = vmatpush1.msra.mxu0 0.0
  %2430 = vmatprep.subr.mxu0 0.0
  %2431 = vmatpush1.msra.mxu0 0.0
  %2432 = vmatprep.subr.mxu0 0.0
  %2433 = vmatpush1.msra.mxu0 0.0
  %2434 = vmatprep.subr.mxu0 0.0
  %2435 = vmatpush1.msra.mxu0 0.0
  %2436 = vmatprep.subr.mxu0 0.0
  %2437 = vmatpush1.msra.mxu0 0.0
  %2438 = vmatprep.mubr.f32.mxu0 0.0
  %2439 = vmatmul.mubr.f32.gmra.mrb[0].mxu0 %v2116
  %v2440 = vpop.f32.mrb[0].mxu0
  %v2441 = vadd.f32 0.0, %v2440
  %v2442 = vpop.f32.mrb[0].mxu0
  %v2443 = vadd.f32 0.0, %v2442
  %2444 = vdwg.mxu0
  %v2445 = vadd.f32 %v2299, %v2370
  %v2446 = vadd.f32 %v2300, %v2372
  %v2447 = vadd.f32 %v2301, %v2441
  %v2448 = vadd.f32 %v2302, %v2443
  %v2449 = vxor.u32 %v2445, 2147483648
  %v2450 = vmul.f32 %v2449, 1.442695
  %v2451 = vpow.pop %v2450
  %v2452 = vadd.f32 %v2451, 1.0
  %v2453 = vrcp.pop %v2452
  %v2454 = vmul.f32 1.0, %v2453
  %v2455 = vxor.u32 %v2446, 2147483648
  %v2456 = vmul.f32 %v2455, 1.442695
  %v2457 = vpow.pop %v2456
  %v2458 = vadd.f32 %v2457, 1.0
  %v2459 = vrcp.pop %v2458
  %v2460 = vmul.f32 1.0, %v2459
  %v2461 = vtanh.pop %v2447
  %v2462 = vxor.u32 %v2448, 2147483648
  %v2463 = vmul.f32 %v2462, 1.442695
  %v2464 = vpow.pop %v2463
  %v2465 = vadd.f32 %v2464, 1.0
  %v2466 = vrcp.pop %v2465
  %v2467 = vmul.f32 1.0, %v2466
  %v2468 = vmul.f32 %v2460, %v2114
  %v2469 = vmul.f32 %v2454, %v2461
  %v2470 = vadd.f32 %v2468, %v2469
  %v2471 = vtanh.pop %v2470
  %v2472 = vmul.f32 %v2467, %v2471
  %s2473 = scalar_lea.vmem [#allocation3], 96
  %v2474 = vld [vmem:[%s2473] sm:$0xff]
  %v2475 = vld [vmem:[%s2473 + $0x8] sm:$0xff]
  %v2476 = vld [vmem:[%s2473 + $0x10] sm:$0xff]
  %v2477 = vld [vmem:[%s2473 + $0x18] sm:$0xff]
  %2478 = vmatprep.subr.mxu0 %v991
  %2479 = vmatpush1.msra.mxu0 %v990
  %2480 = vmatprep.subr.mxu0 %v995
  %2481 = vmatpush1.msra.mxu0 %v994
  %2482 = vmatprep.subr.mxu0 %v999
  %2483 = vmatpush1.msra.mxu0 %v998
  %2484 = vmatprep.subr.mxu0 %v1003
  %2485 = vmatpush1.msra.mxu0 %v1002
  %2486 = vmatprep.subr.mxu0 %v1007
  %2487 = vmatpush1.msra.mxu0 %v1006
  %2488 = vmatprep.subr.mxu0 %v1011
  %2489 = vmatpush1.msra.mxu0 %v1010
  %2490 = vmatprep.subr.mxu0 %v1015
  %2491 = vmatpush1.msra.mxu0 %v1014
  %2492 = vmatprep.subr.mxu0 %v1019
  %2493 = vmatpush1.msra.mxu0 %v1018
  %2494 = vmatprep.subr.mxu0 %v1023
  %2495 = vmatpush1.msra.mxu0 %v1022
  %2496 = vmatprep.subr.mxu0 %v1027
  %2497 = vmatpush1.msra.mxu0 %v1026
  %2498 = vmatprep.subr.mxu0 %v1031
  %2499 = vmatpush1.msra.mxu0 %v1030
  %2500 = vmatprep.subr.mxu0 %v1035
  %2501 = vmatpush1.msra.mxu0 %v1034
  %2502 = vmatprep.subr.mxu0 %v1039
  %2503 = vmatpush1.msra.mxu0 %v1038
  %2504 = vmatprep.subr.mxu0 %v1043
  %2505 = vmatpush1.msra.mxu0 %v1042
  %2506 = vmatprep.subr.mxu0 %v1047
  %2507 = vmatpush1.msra.mxu0 %v1046
  %2508 = vmatprep.subr.mxu0 %v1051
  %2509 = vmatpush1.msra.mxu0 %v1050
  %2510 = vmatprep.subr.mxu0 0.0
  %2511 = vmatpush1.msra.mxu0 0.0
  %2512 = vmatprep.subr.mxu0 0.0
  %2513 = vmatpush1.msra.mxu0 0.0
  %2514 = vmatprep.subr.mxu0 0.0
  %2515 = vmatpush1.msra.mxu0 0.0
  %2516 = vmatprep.subr.mxu0 0.0
  %2517 = vmatpush1.msra.mxu0 0.0
  %2518 = vmatprep.subr.mxu0 0.0
  %2519 = vmatpush1.msra.mxu0 0.0
  %2520 = vmatprep.subr.mxu0 0.0
  %2521 = vmatpush1.msra.mxu0 0.0
  %2522 = vmatprep.subr.mxu0 0.0
  %2523 = vmatpush1.msra.mxu0 0.0
  %2524 = vmatprep.subr.mxu0 0.0
  %2525 = vmatpush1.msra.mxu0 0.0
  %2526 = vmatprep.subr.mxu0 0.0
  %2527 = vmatpush1.msra.mxu0 0.0
  %2528 = vmatprep.subr.mxu0 0.0
  %2529 = vmatpush1.msra.mxu0 0.0
  %2530 = vmatprep.subr.mxu0 0.0
  %2531 = vmatpush1.msra.mxu0 0.0
  %2532 = vmatprep.subr.mxu0 0.0
  %2533 = vmatpush1.msra.mxu0 0.0
  %2534 = vmatprep.subr.mxu0 0.0
  %2535 = vmatpush1.msra.mxu0 0.0
  %2536 = vmatprep.subr.mxu0 0.0
  %2537 = vmatpush1.msra.mxu0 0.0
  %2538 = vmatprep.subr.mxu0 0.0
  %2539 = vmatpush1.msra.mxu0 0.0
  %2540 = vmatprep.subr.mxu0 0.0
  %2541 = vmatpush1.msra.mxu0 0.0
  %2542 = vmatprep.mubr.f32.mxu0 0.0
  %2543 = vmatmul.mubr.f32.gmra.mrb[0].mxu0 %v2291
  %v2544 = vpop.f32.mrb[0].mxu0
  %v2545 = vadd.f32 0.0, %v2544
  %v2546 = vpop.f32.mrb[0].mxu0
  %v2547 = vadd.f32 0.0, %v2546
  %2548 = vdwg.mxu0
  %2549 = vmatprep.subr.mxu0 %v993
  %2550 = vmatpush1.msra.mxu0 %v992
  %2551 = vmatprep.subr.mxu0 %v997
  %2552 = vmatpush1.msra.mxu0 %v996
  %2553 = vmatprep.subr.mxu0 %v1001
  %2554 = vmatpush1.msra.mxu0 %v1000
  %2555 = vmatprep.subr.mxu0 %v1005
  %2556 = vmatpush1.msra.mxu0 %v1004
  %2557 = vmatprep.subr.mxu0 %v1009
  %2558 = vmatpush1.msra.mxu0 %v1008
  %2559 = vmatprep.subr.mxu0 %v1013
  %2560 = vmatpush1.msra.mxu0 %v1012
  %2561 = vmatprep.subr.mxu0 %v1017
  %2562 = vmatpush1.msra.mxu0 %v1016
  %2563 = vmatprep.subr.mxu0 %v1021
  %2564 = vmatpush1.msra.mxu0 %v1020
  %2565 = vmatprep.subr.mxu0 %v1025
  %2566 = vmatpush1.msra.mxu0 %v1024
  %2567 = vmatprep.subr.mxu0 %v1029
  %2568 = vmatpush1.msra.mxu0 %v1028
  %2569 = vmatprep.subr.mxu0 %v1033
  %2570 = vmatpush1.msra.mxu0 %v1032
  %2571 = vmatprep.subr.mxu0 %v1037
  %2572 = vmatpush1.msra.mxu0 %v1036
  %2573 = vmatprep.subr.mxu0 %v1041
  %2574 = vmatpush1.msra.mxu0 %v1040
  %2575 = vmatprep.subr.mxu0 %v1045
  %2576 = vmatpush1.msra.mxu0 %v1044
  %2577 = vmatprep.subr.mxu0 %v1049
  %2578 = vmatpush1.msra.mxu0 %v1048
  %2579 = vmatprep.subr.mxu0 %v1053
  %2580 = vmatpush1.msra.mxu0 %v1052
  %2581 = vmatprep.subr.mxu0 0.0
  %2582 = vmatpush1.msra.mxu0 0.0
  %2583 = vmatprep.subr.mxu0 0.0
  %2584 = vmatpush1.msra.mxu0 0.0
  %2585 = vmatprep.subr.mxu0 0.0
  %2586 = vmatpush1.msra.mxu0 0.0
  %2587 = vmatprep.subr.mxu0 0.0
  %2588 = vmatpush1.msra.mxu0 0.0
  %2589 = vmatprep.subr.mxu0 0.0
  %2590 = vmatpush1.msra.mxu0 0.0
  %2591 = vmatprep.subr.mxu0 0.0
  %2592 = vmatpush1.msra.mxu0 0.0
  %2593 = vmatprep.subr.mxu0 0.0
  %2594 = vmatpush1.msra.mxu0 0.0
  %2595 = vmatprep.subr.mxu0 0.0
  %2596 = vmatpush1.msra.mxu0 0.0
  %2597 = vmatprep.subr.mxu0 0.0
  %2598 = vmatpush1.msra.mxu0 0.0
  %2599 = vmatprep.subr.mxu0 0.0
  %2600 = vmatpush1.msra.mxu0 0.0
  %2601 = vmatprep.subr.mxu0 0.0
  %2602 = vmatpush1.msra.mxu0 0.0
  %2603 = vmatprep.subr.mxu0 0.0
  %2604 = vmatpush1.msra.mxu0 0.0
  %2605 = vmatprep.subr.mxu0 0.0
  %2606 = vmatpush1.msra.mxu0 0.0
  %2607 = vmatprep.subr.mxu0 0.0
  %2608 = vmatpush1.msra.mxu0 0.0
  %2609 = vmatprep.subr.mxu0 0.0
  %2610 = vmatpush1.msra.mxu0 0.0
  %2611 = vmatprep.subr.mxu0 0.0
  %2612 = vmatpush1.msra.mxu0 0.0
  %2613 = vmatprep.mubr.f32.mxu0 0.0
  %2614 = vmatmul.mubr.f32.gmra.mrb[0].mxu0 %v2291
  %v2615 = vpop.f32.mrb[0].mxu0
  %v2616 = vadd.f32 0.0, %v2615
  %v2617 = vpop.f32.mrb[0].mxu0
  %v2618 = vadd.f32 0.0, %v2617
  %2619 = vdwg.mxu0
  %v2620 = vadd.f32 %v2474, %v2545
  %v2621 = vadd.f32 %v2475, %v2547
  %v2622 = vadd.f32 %v2476, %v2616
  %v2623 = vadd.f32 %v2477, %v2618
  %v2624 = vxor.u32 %v2620, 2147483648
  %v2625 = vmul.f32 %v2624, 1.442695
  %v2626 = vpow.pop %v2625
  %v2627 = vadd.f32 %v2626, 1.0
  %v2628 = vrcp.pop %v2627
  %v2629 = vmul.f32 1.0, %v2628
  %v2630 = vxor.u32 %v2621, 2147483648
  %v2631 = vmul.f32 %v2630, 1.442695
  %v2632 = vpow.pop %v2631
  %v2633 = vadd.f32 %v2632, 1.0
  %v2634 = vrcp.pop %v2633
  %v2635 = vmul.f32 1.0, %v2634
  %v2636 = vtanh.pop %v2622
  %v2637 = vxor.u32 %v2623, 2147483648
  %v2638 = vmul.f32 %v2637, 1.442695
  %v2639 = vpow.pop %v2638
  %v2640 = vadd.f32 %v2639, 1.0
  %v2641 = vrcp.pop %v2640
  %v2642 = vmul.f32 1.0, %v2641
  %v2643 = vmul.f32 %v2635, %v2289
  %v2644 = vmul.f32 %v2629, %v2636
  %v2645 = vadd.f32 %v2643, %v2644
  %v2646 = vtanh.pop %v2645
  %v2647 = vmul.f32 %v2642, %v2646
  %v2648 = vsel %vm2295, %v2472, 0.0
  %v2649 = vadd.f32 %v2294, %v2648
  %v2650 = vsel %vm2292, %v2647, 0.0
  %v2651 = vadd.f32 %v2297, %v2650
  %s2652 = scalar_lea.vmem [#allocation2], 160
  %v2653 = vld [vmem:[%s2652] sm:$0xff]
  %v2654 = vld [vmem:[%s2652 + $0x8] sm:$0xff]
  %v2655 = vld [vmem:[%s2652 + $0x10] sm:$0xff]
  %v2656 = vld [vmem:[%s2652 + $0x18] sm:$0xff]
  %2657 = vmatprep.subr.mxu0 %v752
  %2658 = vmatpush1.msra.mxu0 %v751
  %2659 = vmatprep.subr.mxu0 %v756
  %2660 = vmatpush1.msra.mxu0 %v755
  %2661 = vmatprep.subr.mxu0 %v760
  %2662 = vmatpush1.msra.mxu0 %v759
  %2663 = vmatprep.subr.mxu0 %v764
  %2664 = vmatpush1.msra.mxu0 %v763
  %2665 = vmatprep.subr.mxu0 %v768
  %2666 = vmatpush1.msra.mxu0 %v767
  %2667 = vmatprep.subr.mxu0 %v772
  %2668 = vmatpush1.msra.mxu0 %v771
  %2669 = vmatprep.subr.mxu0 %v776
  %2670 = vmatpush1.msra.mxu0 %v775
  %2671 = vmatprep.subr.mxu0 %v780
  %2672 = vmatpush1.msra.mxu0 %v779
  %2673 = vmatprep.subr.mxu0 %v784
  %2674 = vmatpush1.msra.mxu0 %v783
  %2675 = vmatprep.subr.mxu0 %v788
  %2676 = vmatpush1.msra.mxu0 %v787
  %2677 = vmatprep.subr.mxu0 %v792
  %2678 = vmatpush1.msra.mxu0 %v791
  %2679 = vmatprep.subr.mxu0 %v796
  %2680 = vmatpush1.msra.mxu0 %v795
  %2681 = vmatprep.subr.mxu0 %v800
  %2682 = vmatpush1.msra.mxu0 %v799
  %2683 = vmatprep.subr.mxu0 %v804
  %2684 = vmatpush1.msra.mxu0 %v803
  %2685 = vmatprep.subr.mxu0 %v808
  %2686 = vmatpush1.msra.mxu0 %v807
  %2687 = vmatprep.subr.mxu0 %v812
  %2688 = vmatpush1.msra.mxu0 %v811
  %2689 = vmatprep.subr.mxu0 0.0
  %2690 = vmatpush1.msra.mxu0 0.0
  %2691 = vmatprep.subr.mxu0 0.0
  %2692 = vmatpush1.msra.mxu0 0.0
  %2693 = vmatprep.subr.mxu0 0.0
  %2694 = vmatpush1.msra.mxu0 0.0
  %2695 = vmatprep.subr.mxu0 0.0
  %2696 = vmatpush1.msra.mxu0 0.0
  %2697 = vmatprep.subr.mxu0 0.0
  %2698 = vmatpush1.msra.mxu0 0.0
  %2699 = vmatprep.subr.mxu0 0.0
  %2700 = vmatpush1.msra.mxu0 0.0
  %2701 = vmatprep.subr.mxu0 0.0
  %2702 = vmatpush1.msra.mxu0 0.0
  %2703 = vmatprep.subr.mxu0 0.0
  %2704 = vmatpush1.msra.mxu0 0.0
  %2705 = vmatprep.subr.mxu0 0.0
  %2706 = vmatpush1.msra.mxu0 0.0
  %2707 = vmatprep.subr.mxu0 0.0
  %2708 = vmatpush1.msra.mxu0 0.0
  %2709 = vmatprep.subr.mxu0 0.0
  %2710 = vmatpush1.msra.mxu0 0.0
  %2711 = vmatprep.subr.mxu0 0.0
  %2712 = vmatpush1.msra.mxu0 0.0
  %2713 = vmatprep.subr.mxu0 0.0
  %2714 = vmatpush1.msra.mxu0 0.0
  %2715 = vmatprep.subr.mxu0 0.0
  %2716 = vmatpush1.msra.mxu0 0.0
  %2717 = vmatprep.subr.mxu0 0.0
  %2718 = vmatpush1.msra.mxu0 0.0
  %2719 = vmatprep.subr.mxu0 0.0
  %2720 = vmatpush1.msra.mxu0 0.0
  %2721 = vmatprep.mubr.f32.mxu0 0.0
  %2722 = vmatmul.mubr.f32.gmra.mrb[0].mxu0 %v2472
  %v2723 = vpop.f32.mrb[0].mxu0
  %v2724 = vadd.f32 0.0, %v2723
  %v2725 = vpop.f32.mrb[0].mxu0
  %v2726 = vadd.f32 0.0, %v2725
  %2727 = vdwg.mxu0
  %2728 = vmatprep.subr.mxu0 %v754
  %2729 = vmatpush1.msra.mxu0 %v753
  %2730 = vmatprep.subr.mxu0 %v758
  %2731 = vmatpush1.msra.mxu0 %v757
  %2732 = vmatprep.subr.mxu0 %v762
  %2733 = vmatpush1.msra.mxu0 %v761
  %2734 = vmatprep.subr.mxu0 %v766
  %2735 = vmatpush1.msra.mxu0 %v765
  %2736 = vmatprep.subr.mxu0 %v770
  %2737 = vmatpush1.msra.mxu0 %v769
  %2738 = vmatprep.subr.mxu0 %v774
  %2739 = vmatpush1.msra.mxu0 %v773
  %2740 = vmatprep.subr.mxu0 %v778
  %2741 = vmatpush1.msra.mxu0 %v777
  %2742 = vmatprep.subr.mxu0 %v782
  %2743 = vmatpush1.msra.mxu0 %v781
  %2744 = vmatprep.subr.mxu0 %v786
  %2745 = vmatpush1.msra.mxu0 %v785
  %2746 = vmatprep.subr.mxu0 %v790
  %2747 = vmatpush1.msra.mxu0 %v789
  %2748 = vmatprep.subr.mxu0 %v794
  %2749 = vmatpush1.msra.mxu0 %v793
  %2750 = vmatprep.subr.mxu0 %v798
  %2751 = vmatpush1.msra.mxu0 %v797
  %2752 = vmatprep.subr.mxu0 %v802
  %2753 = vmatpush1.msra.mxu0 %v801
  %2754 = vmatprep.subr.mxu0 %v806
  %2755 = vmatpush1.msra.mxu0 %v805
  %2756 = vmatprep.subr.mxu0 %v810
  %2757 = vmatpush1.msra.mxu0 %v809
  %2758 = vmatprep.subr.mxu0 %v814
  %2759 = vmatpush1.msra.mxu0 %v813
  %2760 = vmatprep.subr.mxu0 0.0
  %2761 = vmatpush1.msra.mxu0 0.0
  %2762 = vmatprep.subr.mxu0 0.0
  %2763 = vmatpush1.msra.mxu0 0.0
  %2764 = vmatprep.subr.mxu0 0.0
  %2765 = vmatpush1.msra.mxu0 0.0
  %2766 = vmatprep.subr.mxu0 0.0
  %2767 = vmatpush1.msra.mxu0 0.0
  %2768 = vmatprep.subr.mxu0 0.0
  %2769 = vmatpush1.msra.mxu0 0.0
  %2770 = vmatprep.subr.mxu0 0.0
  %2771 = vmatpush1.msra.mxu0 0.0
  %2772 = vmatprep.subr.mxu0 0.0
  %2773 = vmatpush1.msra.mxu0 0.0
  %2774 = vmatprep.subr.mxu0 0.0
  %2775 = vmatpush1.msra.mxu0 0.0
  %2776 = vmatprep.subr.mxu0 0.0
  %2777 = vmatpush1.msra.mxu0 0.0
  %2778 = vmatprep.subr.mxu0 0.0
  %2779 = vmatpush1.msra.mxu0 0.0
  %2780 = vmatprep.subr.mxu0 0.0
  %2781 = vmatpush1.msra.mxu0 0.0
  %2782 = vmatprep.subr.mxu0 0.0
  %2783 = vmatpush1.msra.mxu0 0.0
  %2784 = vmatprep.subr.mxu0 0.0
  %2785 = vmatpush1.msra.mxu0 0.0
  %2786 = vmatprep.subr.mxu0 0.0
  %2787 = vmatpush1.msra.mxu0 0.0
  %2788 = vmatprep.subr.mxu0 0.0
  %2789 = vmatpush1.msra.mxu0 0.0
  %2790 = vmatprep.subr.mxu0 0.0
  %2791 = vmatpush1.msra.mxu0 0.0
  %2792 = vmatprep.mubr.f32.mxu0 0.0
  %2793 = vmatmul.mubr.f32.gmra.mrb[0].mxu0 %v2472
  %v2794 = vpop.f32.mrb[0].mxu0
  %v2795 = vadd.f32 0.0, %v2794
  %v2796 = vpop.f32.mrb[0].mxu0
  %v2797 = vadd.f32 0.0, %v2796
  %2798 = vdwg.mxu0
  %v2799 = vadd.f32 %v2653, %v2724
  %v2800 = vadd.f32 %v2654, %v2726
  %v2801 = vadd.f32 %v2655, %v2795
  %v2802 = vadd.f32 %v2656, %v2797
  %v2803 = vxor.u32 %v2799, 2147483648
  %v2804 = vmul.f32 %v2803, 1.442695
  %v2805 = vpow.pop %v2804
  %v2806 = vadd.f32 %v2805, 1.0
  %v2807 = vrcp.pop %v2806
  %v2808 = vmul.f32 1.0, %v2807
  %v2809 = vxor.u32 %v2800, 2147483648
  %v2810 = vmul.f32 %v2809, 1.442695
  %v2811 = vpow.pop %v2810
  %v2812 = vadd.f32 %v2811, 1.0
  %v2813 = vrcp.pop %v2812
  %v2814 = vmul.f32 1.0, %v2813
  %v2815 = vtanh.pop %v2801
  %v2816 = vxor.u32 %v2802, 2147483648
  %v2817 = vmul.f32 %v2816, 1.442695
  %v2818 = vpow.pop %v2817
  %v2819 = vadd.f32 %v2818, 1.0
  %v2820 = vrcp.pop %v2819
  %v2821 = vmul.f32 1.0, %v2820
  %v2822 = vmul.f32 %v2814, %v2470
  %v2823 = vmul.f32 %v2808, %v2815
  %v2824 = vadd.f32 %v2822, %v2823
  %v2825 = vtanh.pop %v2824
  %v2826 = vmul.f32 %v2821, %v2825
  %s2827 = scalar_lea.vmem [#allocation3], 64
  %v2828 = vld [vmem:[%s2827] sm:$0xff]
  %v2829 = vld [vmem:[%s2827 + $0x8] sm:$0xff]
  %v2830 = vld [vmem:[%s2827 + $0x10] sm:$0xff]
  %v2831 = vld [vmem:[%s2827 + $0x18] sm:$0xff]
  %2832 = vmatprep.subr.mxu0 %v991
  %2833 = vmatpush1.msra.mxu0 %v990
  %2834 = vmatprep.subr.mxu0 %v995
  %2835 = vmatpush1.msra.mxu0 %v994
  %2836 = vmatprep.subr.mxu0 %v999
  %2837 = vmatpush1.msra.mxu0 %v998
  %2838 = vmatprep.subr.mxu0 %v1003
  %2839 = vmatpush1.msra.mxu0 %v1002
  %2840 = vmatprep.subr.mxu0 %v1007
  %2841 = vmatpush1.msra.mxu0 %v1006
  %2842 = vmatprep.subr.mxu0 %v1011
  %2843 = vmatpush1.msra.mxu0 %v1010
  %2844 = vmatprep.subr.mxu0 %v1015
  %2845 = vmatpush1.msra.mxu0 %v1014
  %2846 = vmatprep.subr.mxu0 %v1019
  %2847 = vmatpush1.msra.mxu0 %v1018
  %2848 = vmatprep.subr.mxu0 %v1023
  %2849 = vmatpush1.msra.mxu0 %v1022
  %2850 = vmatprep.subr.mxu0 %v1027
  %2851 = vmatpush1.msra.mxu0 %v1026
  %2852 = vmatprep.subr.mxu0 %v1031
  %2853 = vmatpush1.msra.mxu0 %v1030
  %2854 = vmatprep.subr.mxu0 %v1035
  %2855 = vmatpush1.msra.mxu0 %v1034
  %2856 = vmatprep.subr.mxu0 %v1039
  %2857 = vmatpush1.msra.mxu0 %v1038
  %2858 = vmatprep.subr.mxu0 %v1043
  %2859 = vmatpush1.msra.mxu0 %v1042
  %2860 = vmatprep.subr.mxu0 %v1047
  %2861 = vmatpush1.msra.mxu0 %v1046
  %2862 = vmatprep.subr.mxu0 %v1051
  %2863 = vmatpush1.msra.mxu0 %v1050
  %2864 = vmatprep.subr.mxu0 0.0
  %2865 = vmatpush1.msra.mxu0 0.0
  %2866 = vmatprep.subr.mxu0 0.0
  %2867 = vmatpush1.msra.mxu0 0.0
  %2868 = vmatprep.subr.mxu0 0.0
  %2869 = vmatpush1.msra.mxu0 0.0
  %2870 = vmatprep.subr.mxu0 0.0
  %2871 = vmatpush1.msra.mxu0 0.0
  %2872 = vmatprep.subr.mxu0 0.0
  %2873 = vmatpush1.msra.mxu0 0.0
  %2874 = vmatprep.subr.mxu0 0.0
  %2875 = vmatpush1.msra.mxu0 0.0
  %2876 = vmatprep.subr.mxu0 0.0
  %2877 = vmatpush1.msra.mxu0 0.0
  %2878 = vmatprep.subr.mxu0 0.0
  %2879 = vmatpush1.msra.mxu0 0.0
  %2880 = vmatprep.subr.mxu0 0.0
  %2881 = vmatpush1.msra.mxu0 0.0
  %2882 = vmatprep.subr.mxu0 0.0
  %2883 = vmatpush1.msra.mxu0 0.0
  %2884 = vmatprep.subr.mxu0 0.0
  %2885 = vmatpush1.msra.mxu0 0.0
  %2886 = vmatprep.subr.mxu0 0.0
  %2887 = vmatpush1.msra.mxu0 0.0
  %2888 = vmatprep.subr.mxu0 0.0
  %2889 = vmatpush1.msra.mxu0 0.0
  %2890 = vmatprep.subr.mxu0 0.0
  %2891 = vmatpush1.msra.mxu0 0.0
  %2892 = vmatprep.subr.mxu0 0.0
  %2893 = vmatpush1.msra.mxu0 0.0
  %2894 = vmatprep.subr.mxu0 0.0
  %2895 = vmatpush1.msra.mxu0 0.0
  %2896 = vmatprep.mubr.f32.mxu0 0.0
  %2897 = vmatmul.mubr.f32.gmra.mrb[0].mxu0 %v2647
  %v2898 = vpop.f32.mrb[0].mxu0
  %v2899 = vadd.f32 0.0, %v2898
  %v2900 = vpop.f32.mrb[0].mxu0
  %v2901 = vadd.f32 0.0, %v2900
  %2902 = vdwg.mxu0
  %2903 = vmatprep.subr.mxu0 %v993
  %2904 = vmatpush1.msra.mxu0 %v992
  %2905 = vmatprep.subr.mxu0 %v997
  %2906 = vmatpush1.msra.mxu0 %v996
  %2907 = vmatprep.subr.mxu0 %v1001
  %2908 = vmatpush1.msra.mxu0 %v1000
  %2909 = vmatprep.subr.mxu0 %v1005
  %2910 = vmatpush1.msra.mxu0 %v1004
  %2911 = vmatprep.subr.mxu0 %v1009
  %2912 = vmatpush1.msra.mxu0 %v1008
  %2913 = vmatprep.subr.mxu0 %v1013
  %2914 = vmatpush1.msra.mxu0 %v1012
  %2915 = vmatprep.subr.mxu0 %v1017
  %2916 = vmatpush1.msra.mxu0 %v1016
  %2917 = vmatprep.subr.mxu0 %v1021
  %2918 = vmatpush1.msra.mxu0 %v1020
  %2919 = vmatprep.subr.mxu0 %v1025
  %2920 = vmatpush1.msra.mxu0 %v1024
  %2921 = vmatprep.subr.mxu0 %v1029
  %2922 = vmatpush1.msra.mxu0 %v1028
  %2923 = vmatprep.subr.mxu0 %v1033
  %2924 = vmatpush1.msra.mxu0 %v1032
  %2925 = vmatprep.subr.mxu0 %v1037
  %2926 = vmatpush1.msra.mxu0 %v1036
  %2927 = vmatprep.subr.mxu0 %v1041
  %2928 = vmatpush1.msra.mxu0 %v1040
  %2929 = vmatprep.subr.mxu0 %v1045
  %2930 = vmatpush1.msra.mxu0 %v1044
  %2931 = vmatprep.subr.mxu0 %v1049
  %2932 = vmatpush1.msra.mxu0 %v1048
  %2933 = vmatprep.subr.mxu0 %v1053
  %2934 = vmatpush1.msra.mxu0 %v1052
  %2935 = vmatprep.subr.mxu0 0.0
  %2936 = vmatpush1.msra.mxu0 0.0
  %2937 = vmatprep.subr.mxu0 0.0
  %2938 = vmatpush1.msra.mxu0 0.0
  %2939 = vmatprep.subr.mxu0 0.0
  %2940 = vmatpush1.msra.mxu0 0.0
  %2941 = vmatprep.subr.mxu0 0.0
  %2942 = vmatpush1.msra.mxu0 0.0
  %2943 = vmatprep.subr.mxu0 0.0
  %2944 = vmatpush1.msra.mxu0 0.0
  %2945 = vmatprep.subr.mxu0 0.0
  %2946 = vmatpush1.msra.mxu0 0.0
  %2947 = vmatprep.subr.mxu0 0.0
  %2948 = vmatpush1.msra.mxu0 0.0
  %2949 = vmatprep.subr.mxu0 0.0
  %2950 = vmatpush1.msra.mxu0 0.0
  %2951 = vmatprep.subr.mxu0 0.0
  %2952 = vmatpush1.msra.mxu0 0.0
  %2953 = vmatprep.subr.mxu0 0.0
  %2954 = vmatpush1.msra.mxu0 0.0
  %2955 = vmatprep.subr.mxu0 0.0
  %2956 = vmatpush1.msra.mxu0 0.0
  %2957 = vmatprep.subr.mxu0 0.0
  %2958 = vmatpush1.msra.mxu0 0.0
  %2959 = vmatprep.subr.mxu0 0.0
  %2960 = vmatpush1.msra.mxu0 0.0
  %2961 = vmatprep.subr.mxu0 0.0
  %2962 = vmatpush1.msra.mxu0 0.0
  %2963 = vmatprep.subr.mxu0 0.0
  %2964 = vmatpush1.msra.mxu0 0.0
  %2965 = vmatprep.subr.mxu0 0.0
  %2966 = vmatpush1.msra.mxu0 0.0
  %2967 = vmatprep.mubr.f32.mxu0 0.0
  %2968 = vmatmul.mubr.f32.gmra.mrb[0].mxu0 %v2647
  %v2969 = vpop.f32.mrb[0].mxu0
  %v2970 = vadd.f32 0.0, %v2969
  %v2971 = vpop.f32.mrb[0].mxu0
  %v2972 = vadd.f32 0.0, %v2971
  %2973 = vdwg.mxu0
  %v2974 = vadd.f32 %v2828, %v2899
  %v2975 = vadd.f32 %v2829, %v2901
  %v2976 = vadd.f32 %v2830, %v2970
  %v2977 = vadd.f32 %v2831, %v2972
  %v2978 = vxor.u32 %v2974, 2147483648
  %v2979 = vmul.f32 %v2978, 1.442695
  %v2980 = vpow.pop %v2979
  %v2981 = vadd.f32 %v2980, 1.0
  %v2982 = vrcp.pop %v2981
  %v2983 = vmul.f32 1.0, %v2982
  %v2984 = vxor.u32 %v2975, 2147483648
  %v2985 = vmul.f32 %v2984, 1.442695
  %v2986 = vpow.pop %v2985
  %v2987 = vadd.f32 %v2986, 1.0
  %v2988 = vrcp.pop %v2987
  %v2989 = vmul.f32 1.0, %v2988
  %v2990 = vtanh.pop %v2976
  %v2991 = vxor.u32 %v2977, 2147483648
  %v2992 = vmul.f32 %v2991, 1.442695
  %v2993 = vpow.pop %v2992
  %v2994 = vadd.f32 %v2993, 1.0
  %v2995 = vrcp.pop %v2994
  %v2996 = vmul.f32 1.0, %v2995
  %v2997 = vmul.f32 %v2989, %v2645
  %v2998 = vmul.f32 %v2983, %v2990
  %v2999 = vadd.f32 %v2997, %v2998
  %v3000 = vtanh.pop %v2999
  %v3001 = vmul.f32 %v2996, %v3000
  %v3002 = vsel %vm1939, %v2826, 0.0
  %v3003 = vadd.f32 %v2649, %v3002
  %v3004 = vsel %vm1936, %v3001, 0.0
  %v3005 = vadd.f32 %v2651, %v3004
  %s3006 = scalar_lea.vmem [#allocation2], 192
  %v3007 = vld [vmem:[%s3006] sm:$0xff]
  %v3008 = vld [vmem:[%s3006 + $0x8] sm:$0xff]
  %v3009 = vld [vmem:[%s3006 + $0x10] sm:$0xff]
  %v3010 = vld [vmem:[%s3006 + $0x18] sm:$0xff]
  %3011 = vmatprep.subr.mxu0 %v752
  %3012 = vmatpush1.msra.mxu0 %v751
  %3013 = vmatprep.subr.mxu0 %v756
  %3014 = vmatpush1.msra.mxu0 %v755
  %3015 = vmatprep.subr.mxu0 %v760
  %3016 = vmatpush1.msra.mxu0 %v759
  %3017 = vmatprep.subr.mxu0 %v764
  %3018 = vmatpush1.msra.mxu0 %v763
  %3019 = vmatprep.subr.mxu0 %v768
  %3020 = vmatpush1.msra.mxu0 %v767
  %3021 = vmatprep.subr.mxu0 %v772
  %3022 = vmatpush1.msra.mxu0 %v771
  %3023 = vmatprep.subr.mxu0 %v776
  %3024 = vmatpush1.msra.mxu0 %v775
  %3025 = vmatprep.subr.mxu0 %v780
  %3026 = vmatpush1.msra.mxu0 %v779
  %3027 = vmatprep.subr.mxu0 %v784
  %3028 = vmatpush1.msra.mxu0 %v783
  %3029 = vmatprep.subr.mxu0 %v788
  %3030 = vmatpush1.msra.mxu0 %v787
  %3031 = vmatprep.subr.mxu0 %v792
  %3032 = vmatpush1.msra.mxu0 %v791
  %3033 = vmatprep.subr.mxu0 %v796
  %3034 = vmatpush1.msra.mxu0 %v795
  %3035 = vmatprep.subr.mxu0 %v800
  %3036 = vmatpush1.msra.mxu0 %v799
  %3037 = vmatprep.subr.mxu0 %v804
  %3038 = vmatpush1.msra.mxu0 %v803
  %3039 = vmatprep.subr.mxu0 %v808
  %3040 = vmatpush1.msra.mxu0 %v807
  %3041 = vmatprep.subr.mxu0 %v812
  %3042 = vmatpush1.msra.mxu0 %v811
  %3043 = vmatprep.subr.mxu0 0.0
  %3044 = vmatpush1.msra.mxu0 0.0
  %3045 = vmatprep.subr.mxu0 0.0
  %3046 = vmatpush1.msra.mxu0 0.0
  %3047 = vmatprep.subr.mxu0 0.0
  %3048 = vmatpush1.msra.mxu0 0.0
  %3049 = vmatprep.subr.mxu0 0.0
  %3050 = vmatpush1.msra.mxu0 0.0
  %3051 = vmatprep.subr.mxu0 0.0
  %3052 = vmatpush1.msra.mxu0 0.0
  %3053 = vmatprep.subr.mxu0 0.0
  %3054 = vmatpush1.msra.mxu0 0.0
  %3055 = vmatprep.subr.mxu0 0.0
  %3056 = vmatpush1.msra.mxu0 0.0
  %3057 = vmatprep.subr.mxu0 0.0
  %3058 = vmatpush1.msra.mxu0 0.0
  %3059 = vmatprep.subr.mxu0 0.0
  %3060 = vmatpush1.msra.mxu0 0.0
  %3061 = vmatprep.subr.mxu0 0.0
  %3062 = vmatpush1.msra.mxu0 0.0
  %3063 = vmatprep.subr.mxu0 0.0
  %3064 = vmatpush1.msra.mxu0 0.0
  %3065 = vmatprep.subr.mxu0 0.0
  %3066 = vmatpush1.msra.mxu0 0.0
  %3067 = vmatprep.subr.mxu0 0.0
  %3068 = vmatpush1.msra.mxu0 0.0
  %3069 = vmatprep.subr.mxu0 0.0
  %3070 = vmatpush1.msra.mxu0 0.0
  %3071 = vmatprep.subr.mxu0 0.0
  %3072 = vmatpush1.msra.mxu0 0.0
  %3073 = vmatprep.subr.mxu0 0.0
  %3074 = vmatpush1.msra.mxu0 0.0
  %3075 = vmatprep.mubr.f32.mxu0 0.0
  %3076 = vmatmul.mubr.f32.gmra.mrb[0].mxu0 %v2826
  %v3077 = vpop.f32.mrb[0].mxu0
  %v3078 = vadd.f32 0.0, %v3077
  %v3079 = vpop.f32.mrb[0].mxu0
  %v3080 = vadd.f32 0.0, %v3079
  %3081 = vdwg.mxu0
  %3082 = vmatprep.subr.mxu0 %v754
  %3083 = vmatpush1.msra.mxu0 %v753
  %3084 = vmatprep.subr.mxu0 %v758
  %3085 = vmatpush1.msra.mxu0 %v757
  %3086 = vmatprep.subr.mxu0 %v762
  %3087 = vmatpush1.msra.mxu0 %v761
  %3088 = vmatprep.subr.mxu0 %v766
  %3089 = vmatpush1.msra.mxu0 %v765
  %3090 = vmatprep.subr.mxu0 %v770
  %3091 = vmatpush1.msra.mxu0 %v769
  %3092 = vmatprep.subr.mxu0 %v774
  %3093 = vmatpush1.msra.mxu0 %v773
  %3094 = vmatprep.subr.mxu0 %v778
  %3095 = vmatpush1.msra.mxu0 %v777
  %3096 = vmatprep.subr.mxu0 %v782
  %3097 = vmatpush1.msra.mxu0 %v781
  %3098 = vmatprep.subr.mxu0 %v786
  %3099 = vmatpush1.msra.mxu0 %v785
  %3100 = vmatprep.subr.mxu0 %v790
  %3101 = vmatpush1.msra.mxu0 %v789
  %3102 = vmatprep.subr.mxu0 %v794
  %3103 = vmatpush1.msra.mxu0 %v793
  %3104 = vmatprep.subr.mxu0 %v798
  %3105 = vmatpush1.msra.mxu0 %v797
  %3106 = vmatprep.subr.mxu0 %v802
  %3107 = vmatpush1.msra.mxu0 %v801
  %3108 = vmatprep.subr.mxu0 %v806
  %3109 = vmatpush1.msra.mxu0 %v805
  %3110 = vmatprep.subr.mxu0 %v810
  %3111 = vmatpush1.msra.mxu0 %v809
  %3112 = vmatprep.subr.mxu0 %v814
  %3113 = vmatpush1.msra.mxu0 %v813
  %3114 = vmatprep.subr.mxu0 0.0
  %3115 = vmatpush1.msra.mxu0 0.0
  %3116 = vmatprep.subr.mxu0 0.0
  %3117 = vmatpush1.msra.mxu0 0.0
  %3118 = vmatprep.subr.mxu0 0.0
  %3119 = vmatpush1.msra.mxu0 0.0
  %3120 = vmatprep.subr.mxu0 0.0
  %3121 = vmatpush1.msra.mxu0 0.0
  %3122 = vmatprep.subr.mxu0 0.0
  %3123 = vmatpush1.msra.mxu0 0.0
  %3124 = vmatprep.subr.mxu0 0.0
  %3125 = vmatpush1.msra.mxu0 0.0
  %3126 = vmatprep.subr.mxu0 0.0
  %3127 = vmatpush1.msra.mxu0 0.0
  %3128 = vmatprep.subr.mxu0 0.0
  %3129 = vmatpush1.msra.mxu0 0.0
  %3130 = vmatprep.subr.mxu0 0.0
  %3131 = vmatpush1.msra.mxu0 0.0
  %3132 = vmatprep.subr.mxu0 0.0
  %3133 = vmatpush1.msra.mxu0 0.0
  %3134 = vmatprep.subr.mxu0 0.0
  %3135 = vmatpush1.msra.mxu0 0.0
  %3136 = vmatprep.subr.mxu0 0.0
  %3137 = vmatpush1.msra.mxu0 0.0
  %3138 = vmatprep.subr.mxu0 0.0
  %3139 = vmatpush1.msra.mxu0 0.0
  %3140 = vmatprep.subr.mxu0 0.0
  %3141 = vmatpush1.msra.mxu0 0.0
  %3142 = vmatprep.subr.mxu0 0.0
  %3143 = vmatpush1.msra.mxu0 0.0
  %3144 = vmatprep.subr.mxu0 0.0
  %3145 = vmatpush1.msra.mxu0 0.0
  %3146 = vmatprep.mubr.f32.mxu0 0.0
  %3147 = vmatmul.mubr.f32.gmra.mrb[0].mxu0 %v2826
  %v3148 = vpop.f32.mrb[0].mxu0
  %v3149 = vadd.f32 0.0, %v3148
  %v3150 = vpop.f32.mrb[0].mxu0
  %v3151 = vadd.f32 0.0, %v3150
  %3152 = vdwg.mxu0
  %v3153 = vadd.f32 %v3007, %v3078
  %v3154 = vadd.f32 %v3008, %v3080
  %v3155 = vadd.f32 %v3009, %v3149
  %v3156 = vadd.f32 %v3010, %v3151
  %v3157 = vxor.u32 %v3153, 2147483648
  %v3158 = vmul.f32 %v3157, 1.442695
  %v3159 = vpow.pop %v3158
  %v3160 = vadd.f32 %v3159, 1.0
  %v3161 = vrcp.pop %v3160
  %v3162 = vmul.f32 1.0, %v3161
  %v3163 = vxor.u32 %v3154, 2147483648
  %v3164 = vmul.f32 %v3163, 1.442695
  %v3165 = vpow.pop %v3164
  %v3166 = vadd.f32 %v3165, 1.0
  %v3167 = vrcp.pop %v3166
  %v3168 = vmul.f32 1.0, %v3167
  %v3169 = vtanh.pop %v3155
  %v3170 = vxor.u32 %v3156, 2147483648
  %v3171 = vmul.f32 %v3170, 1.442695
  %v3172 = vpow.pop %v3171
  %v3173 = vadd.f32 %v3172, 1.0
  %v3174 = vrcp.pop %v3173
  %v3175 = vmul.f32 1.0, %v3174
  %v3176 = vmul.f32 %v3168, %v2824
  %v3177 = vmul.f32 %v3162, %v3169
  %v3178 = vadd.f32 %v3176, %v3177
  %v3179 = vtanh.pop %v3178
  %v3180 = vmul.f32 %v3175, %v3179
  %s3181 = scalar_lea.vmem [#allocation3], 32
  %v3182 = vld [vmem:[%s3181] sm:$0xff]
  %v3183 = vld [vmem:[%s3181 + $0x8] sm:$0xff]
  %v3184 = vld [vmem:[%s3181 + $0x10] sm:$0xff]
  %v3185 = vld [vmem:[%s3181 + $0x18] sm:$0xff]
  %3186 = vmatprep.subr.mxu0 %v991
  %3187 = vmatpush1.msra.mxu0 %v990
  %3188 = vmatprep.subr.mxu0 %v995
  %3189 = vmatpush1.msra.mxu0 %v994
  %3190 = vmatprep.subr.mxu0 %v999
  %3191 = vmatpush1.msra.mxu0 %v998
  %3192 = vmatprep.subr.mxu0 %v1003
  %3193 = vmatpush1.msra.mxu0 %v1002
  %3194 = vmatprep.subr.mxu0 %v1007
  %3195 = vmatpush1.msra.mxu0 %v1006
  %3196 = vmatprep.subr.mxu0 %v1011
  %3197 = vmatpush1.msra.mxu0 %v1010
  %3198 = vmatprep.subr.mxu0 %v1015
  %3199 = vmatpush1.msra.mxu0 %v1014
  %3200 = vmatprep.subr.mxu0 %v1019
  %3201 = vmatpush1.msra.mxu0 %v1018
  %3202 = vmatprep.subr.mxu0 %v1023
  %3203 = vmatpush1.msra.mxu0 %v1022
  %3204 = vmatprep.subr.mxu0 %v1027
  %3205 = vmatpush1.msra.mxu0 %v1026
  %3206 = vmatprep.subr.mxu0 %v1031
  %3207 = vmatpush1.msra.mxu0 %v1030
  %3208 = vmatprep.subr.mxu0 %v1035
  %3209 = vmatpush1.msra.mxu0 %v1034
  %3210 = vmatprep.subr.mxu0 %v1039
  %3211 = vmatpush1.msra.mxu0 %v1038
  %3212 = vmatprep.subr.mxu0 %v1043
  %3213 = vmatpush1.msra.mxu0 %v1042
  %3214 = vmatprep.subr.mxu0 %v1047
  %3215 = vmatpush1.msra.mxu0 %v1046
  %3216 = vmatprep.subr.mxu0 %v1051
  %3217 = vmatpush1.msra.mxu0 %v1050
  %3218 = vmatprep.subr.mxu0 0.0
  %3219 = vmatpush1.msra.mxu0 0.0
  %3220 = vmatprep.subr.mxu0 0.0
  %3221 = vmatpush1.msra.mxu0 0.0
  %3222 = vmatprep.subr.mxu0 0.0
  %3223 = vmatpush1.msra.mxu0 0.0
  %3224 = vmatprep.subr.mxu0 0.0
  %3225 = vmatpush1.msra.mxu0 0.0
  %3226 = vmatprep.subr.mxu0 0.0
  %3227 = vmatpush1.msra.mxu0 0.0
  %3228 = vmatprep.subr.mxu0 0.0
  %3229 = vmatpush1.msra.mxu0 0.0
  %3230 = vmatprep.subr.mxu0 0.0
  %3231 = vmatpush1.msra.mxu0 0.0
  %3232 = vmatprep.subr.mxu0 0.0
  %3233 = vmatpush1.msra.mxu0 0.0
  %3234 = vmatprep.subr.mxu0 0.0
  %3235 = vmatpush1.msra.mxu0 0.0
  %3236 = vmatprep.subr.mxu0 0.0
  %3237 = vmatpush1.msra.mxu0 0.0
  %3238 = vmatprep.subr.mxu0 0.0
  %3239 = vmatpush1.msra.mxu0 0.0
  %3240 = vmatprep.subr.mxu0 0.0
  %3241 = vmatpush1.msra.mxu0 0.0
  %3242 = vmatprep.subr.mxu0 0.0
  %3243 = vmatpush1.msra.mxu0 0.0
  %3244 = vmatprep.subr.mxu0 0.0
  %3245 = vmatpush1.msra.mxu0 0.0
  %3246 = vmatprep.subr.mxu0 0.0
  %3247 = vmatpush1.msra.mxu0 0.0
  %3248 = vmatprep.subr.mxu0 0.0
  %3249 = vmatpush1.msra.mxu0 0.0
  %3250 = vmatprep.mubr.f32.mxu0 0.0
  %3251 = vmatmul.mubr.f32.gmra.mrb[0].mxu0 %v3001
  %v3252 = vpop.f32.mrb[0].mxu0
  %v3253 = vadd.f32 0.0, %v3252
  %v3254 = vpop.f32.mrb[0].mxu0
  %v3255 = vadd.f32 0.0, %v3254
  %3256 = vdwg.mxu0
  %3257 = vmatprep.subr.mxu0 %v993
  %3258 = vmatpush1.msra.mxu0 %v992
  %3259 = vmatprep.subr.mxu0 %v997
  %3260 = vmatpush1.msra.mxu0 %v996
  %3261 = vmatprep.subr.mxu0 %v1001
  %3262 = vmatpush1.msra.mxu0 %v1000
  %3263 = vmatprep.subr.mxu0 %v1005
  %3264 = vmatpush1.msra.mxu0 %v1004
  %3265 = vmatprep.subr.mxu0 %v1009
  %3266 = vmatpush1.msra.mxu0 %v1008
  %3267 = vmatprep.subr.mxu0 %v1013
  %3268 = vmatpush1.msra.mxu0 %v1012
  %3269 = vmatprep.subr.mxu0 %v1017
  %3270 = vmatpush1.msra.mxu0 %v1016
  %3271 = vmatprep.subr.mxu0 %v1021
  %3272 = vmatpush1.msra.mxu0 %v1020
  %3273 = vmatprep.subr.mxu0 %v1025
  %3274 = vmatpush1.msra.mxu0 %v1024
  %3275 = vmatprep.subr.mxu0 %v1029
  %3276 = vmatpush1.msra.mxu0 %v1028
  %3277 = vmatprep.subr.mxu0 %v1033
  %3278 = vmatpush1.msra.mxu0 %v1032
  %3279 = vmatprep.subr.mxu0 %v1037
  %3280 = vmatpush1.msra.mxu0 %v1036
  %3281 = vmatprep.subr.mxu0 %v1041
  %3282 = vmatpush1.msra.mxu0 %v1040
  %3283 = vmatprep.subr.mxu0 %v1045
  %3284 = vmatpush1.msra.mxu0 %v1044
  %3285 = vmatprep.subr.mxu0 %v1049
  %3286 = vmatpush1.msra.mxu0 %v1048
  %3287 = vmatprep.subr.mxu0 %v1053
  %3288 = vmatpush1.msra.mxu0 %v1052
  %3289 = vmatprep.subr.mxu0 0.0
  %3290 = vmatpush1.msra.mxu0 0.0
  %3291 = vmatprep.subr.mxu0 0.0
  %3292 = vmatpush1.msra.mxu0 0.0
  %3293 = vmatprep.subr.mxu0 0.0
  %3294 = vmatpush1.msra.mxu0 0.0
  %3295 = vmatprep.subr.mxu0 0.0
  %3296 = vmatpush1.msra.mxu0 0.0
  %3297 = vmatprep.subr.mxu0 0.0
  %3298 = vmatpush1.msra.mxu0 0.0
  %3299 = vmatprep.subr.mxu0 0.0
  %3300 = vmatpush1.msra.mxu0 0.0
  %3301 = vmatprep.subr.mxu0 0.0
  %3302 = vmatpush1.msra.mxu0 0.0
  %3303 = vmatprep.subr.mxu0 0.0
  %3304 = vmatpush1.msra.mxu0 0.0
  %3305 = vmatprep.subr.mxu0 0.0
  %3306 = vmatpush1.msra.mxu0 0.0
  %3307 = vmatprep.subr.mxu0 0.0
  %3308 = vmatpush1.msra.mxu0 0.0
  %3309 = vmatprep.subr.mxu0 0.0
  %3310 = vmatpush1.msra.mxu0 0.0
  %3311 = vmatprep.subr.mxu0 0.0
  %3312 = vmatpush1.msra.mxu0 0.0
  %3313 = vmatprep.subr.mxu0 0.0
  %3314 = vmatpush1.msra.mxu0 0.0
  %3315 = vmatprep.subr.mxu0 0.0
  %3316 = vmatpush1.msra.mxu0 0.0
  %3317 = vmatprep.subr.mxu0 0.0
  %3318 = vmatpush1.msra.mxu0 0.0
  %3319 = vmatprep.subr.mxu0 0.0
  %3320 = vmatpush1.msra.mxu0 0.0
  %3321 = vmatprep.mubr.f32.mxu0 0.0
  %3322 = vmatmul.mubr.f32.gmra.mrb[0].mxu0 %v3001
  %v3323 = vpop.f32.mrb[0].mxu0
  %v3324 = vadd.f32 0.0, %v3323
  %v3325 = vpop.f32.mrb[0].mxu0
  %v3326 = vadd.f32 0.0, %v3325
  %3327 = vdwg.mxu0
  %v3328 = vadd.f32 %v3182, %v3253
  %v3329 = vadd.f32 %v3183, %v3255
  %v3330 = vadd.f32 %v3184, %v3324
  %v3331 = vadd.f32 %v3185, %v3326
  %v3332 = vxor.u32 %v3328, 2147483648
  %v3333 = vmul.f32 %v3332, 1.442695
  %v3334 = vpow.pop %v3333
  %v3335 = vadd.f32 %v3334, 1.0
  %v3336 = vrcp.pop %v3335
  %v3337 = vmul.f32 1.0, %v3336
  %v3338 = vxor.u32 %v3329, 2147483648
  %v3339 = vmul.f32 %v3338, 1.442695
  %v3340 = vpow.pop %v3339
  %v3341 = vadd.f32 %v3340, 1.0
  %v3342 = vrcp.pop %v3341
  %v3343 = vmul.f32 1.0, %v3342
  %v3344 = vtanh.pop %v3330
  %v3345 = vxor.u32 %v3331, 2147483648
  %v3346 = vmul.f32 %v3345, 1.442695
  %v3347 = vpow.pop %v3346
  %v3348 = vadd.f32 %v3347, 1.0
  %v3349 = vrcp.pop %v3348
  %v3350 = vmul.f32 1.0, %v3349
  %v3351 = vmul.f32 %v3343, %v2999
  %v3352 = vmul.f32 %v3337, %v3344
  %v3353 = vadd.f32 %v3351, %v3352
  %v3354 = vtanh.pop %v3353
  %v3355 = vmul.f32 %v3350, %v3354
  %v3356 = vsel %vm1583, %v3180, 0.0
  %v3357 = vadd.f32 %v3003, %v3356
  %v3358 = vsel %vm1580, %v3355, 0.0
  %v3359 = vadd.f32 %v3005, %v3358
  %s3360 = scalar_lea.vmem [#allocation2], 224
  %v3361 = vld [vmem:[%s3360] sm:$0xff]
  %v3362 = vld [vmem:[%s3360 + $0x8] sm:$0xff]
  %v3363 = vld [vmem:[%s3360 + $0x10] sm:$0xff]
  %v3364 = vld [vmem:[%s3360 + $0x18] sm:$0xff]
  %3365 = vmatprep.subr.mxu0 %v752
  %3366 = vmatpush1.msra.mxu0 %v751
  %3367 = vmatprep.subr.mxu0 %v756
  %3368 = vmatpush1.msra.mxu0 %v755
  %3369 = vmatprep.subr.mxu0 %v760
  %3370 = vmatpush1.msra.mxu0 %v759
  %3371 = vmatprep.subr.mxu0 %v764
  %3372 = vmatpush1.msra.mxu0 %v763
  %3373 = vmatprep.subr.mxu0 %v768
  %3374 = vmatpush1.msra.mxu0 %v767
  %3375 = vmatprep.subr.mxu0 %v772
  %3376 = vmatpush1.msra.mxu0 %v771
  %3377 = vmatprep.subr.mxu0 %v776
  %3378 = vmatpush1.msra.mxu0 %v775
  %3379 = vmatprep.subr.mxu0 %v780
  %3380 = vmatpush1.msra.mxu0 %v779
  %3381 = vmatprep.subr.mxu0 %v784
  %3382 = vmatpush1.msra.mxu0 %v783
  %3383 = vmatprep.subr.mxu0 %v788
  %3384 = vmatpush1.msra.mxu0 %v787
  %3385 = vmatprep.subr.mxu0 %v792
  %3386 = vmatpush1.msra.mxu0 %v791
  %3387 = vmatprep.subr.mxu0 %v796
  %3388 = vmatpush1.msra.mxu0 %v795
  %3389 = vmatprep.subr.mxu0 %v800
  %3390 = vmatpush1.msra.mxu0 %v799
  %3391 = vmatprep.subr.mxu0 %v804
  %3392 = vmatpush1.msra.mxu0 %v803
  %3393 = vmatprep.subr.mxu0 %v808
  %3394 = vmatpush1.msra.mxu0 %v807
  %3395 = vmatprep.subr.mxu0 %v812
  %3396 = vmatpush1.msra.mxu0 %v811
  %3397 = vmatprep.subr.mxu0 0.0
  %3398 = vmatpush1.msra.mxu0 0.0
  %3399 = vmatprep.subr.mxu0 0.0
  %3400 = vmatpush1.msra.mxu0 0.0
  %3401 = vmatprep.subr.mxu0 0.0
  %3402 = vmatpush1.msra.mxu0 0.0
  %3403 = vmatprep.subr.mxu0 0.0
  %3404 = vmatpush1.msra.mxu0 0.0
  %3405 = vmatprep.subr.mxu0 0.0
  %3406 = vmatpush1.msra.mxu0 0.0
  %3407 = vmatprep.subr.mxu0 0.0
  %3408 = vmatpush1.msra.mxu0 0.0
  %3409 = vmatprep.subr.mxu0 0.0
  %3410 = vmatpush1.msra.mxu0 0.0
  %3411 = vmatprep.subr.mxu0 0.0
  %3412 = vmatpush1.msra.mxu0 0.0
  %3413 = vmatprep.subr.mxu0 0.0
  %3414 = vmatpush1.msra.mxu0 0.0
  %3415 = vmatprep.subr.mxu0 0.0
  %3416 = vmatpush1.msra.mxu0 0.0
  %3417 = vmatprep.subr.mxu0 0.0
  %3418 = vmatpush1.msra.mxu0 0.0
  %3419 = vmatprep.subr.mxu0 0.0
  %3420 = vmatpush1.msra.mxu0 0.0
  %3421 = vmatprep.subr.mxu0 0.0
  %3422 = vmatpush1.msra.mxu0 0.0
  %3423 = vmatprep.subr.mxu0 0.0
  %3424 = vmatpush1.msra.mxu0 0.0
  %3425 = vmatprep.subr.mxu0 0.0
  %3426 = vmatpush1.msra.mxu0 0.0
  %3427 = vmatprep.subr.mxu0 0.0
  %3428 = vmatpush1.msra.mxu0 0.0
  %3429 = vmatprep.mubr.f32.mxu0 0.0
  %3430 = vmatmul.mubr.f32.gmra.mrb[0].mxu0 %v3180
  %v3431 = vpop.f32.mrb[0].mxu0
  %v3432 = vadd.f32 0.0, %v3431
  %v3433 = vpop.f32.mrb[0].mxu0
  %v3434 = vadd.f32 0.0, %v3433
  %3435 = vdwg.mxu0
  %3436 = vmatprep.subr.mxu0 %v754
  %3437 = vmatpush1.msra.mxu0 %v753
  %3438 = vmatprep.subr.mxu0 %v758
  %3439 = vmatpush1.msra.mxu0 %v757
  %3440 = vmatprep.subr.mxu0 %v762
  %3441 = vmatpush1.msra.mxu0 %v761
  %3442 = vmatprep.subr.mxu0 %v766
  %3443 = vmatpush1.msra.mxu0 %v765
  %3444 = vmatprep.subr.mxu0 %v770
  %3445 = vmatpush1.msra.mxu0 %v769
  %3446 = vmatprep.subr.mxu0 %v774
  %3447 = vmatpush1.msra.mxu0 %v773
  %3448 = vmatprep.subr.mxu0 %v778
  %3449 = vmatpush1.msra.mxu0 %v777
  %3450 = vmatprep.subr.mxu0 %v782
  %3451 = vmatpush1.msra.mxu0 %v781
  %3452 = vmatprep.subr.mxu0 %v786
  %3453 = vmatpush1.msra.mxu0 %v785
  %3454 = vmatprep.subr.mxu0 %v790
  %3455 = vmatpush1.msra.mxu0 %v789
  %3456 = vmatprep.subr.mxu0 %v794
  %3457 = vmatpush1.msra.mxu0 %v793
  %3458 = vmatprep.subr.mxu0 %v798
  %3459 = vmatpush1.msra.mxu0 %v797
  %3460 = vmatprep.subr.mxu0 %v802
  %3461 = vmatpush1.msra.mxu0 %v801
  %3462 = vmatprep.subr.mxu0 %v806
  %3463 = vmatpush1.msra.mxu0 %v805
  %3464 = vmatprep.subr.mxu0 %v810
  %3465 = vmatpush1.msra.mxu0 %v809
  %3466 = vmatprep.subr.mxu0 %v814
  %3467 = vmatpush1.msra.mxu0 %v813
  %3468 = vmatprep.subr.mxu0 0.0
  %3469 = vmatpush1.msra.mxu0 0.0
  %3470 = vmatprep.subr.mxu0 0.0
  %3471 = vmatpush1.msra.mxu0 0.0
  %3472 = vmatprep.subr.mxu0 0.0
  %3473 = vmatpush1.msra.mxu0 0.0
  %3474 = vmatprep.subr.mxu0 0.0
  %3475 = vmatpush1.msra.mxu0 0.0
  %3476 = vmatprep.subr.mxu0 0.0
  %3477 = vmatpush1.msra.mxu0 0.0
  %3478 = vmatprep.subr.mxu0 0.0
  %3479 = vmatpush1.msra.mxu0 0.0
  %3480 = vmatprep.subr.mxu0 0.0
  %3481 = vmatpush1.msra.mxu0 0.0
  %3482 = vmatprep.subr.mxu0 0.0
  %3483 = vmatpush1.msra.mxu0 0.0
  %3484 = vmatprep.subr.mxu0 0.0
  %3485 = vmatpush1.msra.mxu0 0.0
  %3486 = vmatprep.subr.mxu0 0.0
  %3487 = vmatpush1.msra.mxu0 0.0
  %3488 = vmatprep.subr.mxu0 0.0
  %3489 = vmatpush1.msra.mxu0 0.0
  %3490 = vmatprep.subr.mxu0 0.0
  %3491 = vmatpush1.msra.mxu0 0.0
  %3492 = vmatprep.subr.mxu0 0.0
  %3493 = vmatpush1.msra.mxu0 0.0
  %3494 = vmatprep.subr.mxu0 0.0
  %3495 = vmatpush1.msra.mxu0 0.0
  %3496 = vmatprep.subr.mxu0 0.0
  %3497 = vmatpush1.msra.mxu0 0.0
  %3498 = vmatprep.subr.mxu0 0.0
  %3499 = vmatpush1.msra.mxu0 0.0
  %3500 = vmatprep.mubr.f32.mxu0 0.0
  %3501 = vmatmul.mubr.f32.gmra.mrb[0].mxu0 %v3180
  %v3502 = vpop.f32.mrb[0].mxu0
  %v3503 = vadd.f32 0.0, %v3502
  %v3504 = vpop.f32.mrb[0].mxu0
  %v3505 = vadd.f32 0.0, %v3504
  %3506 = vdwg.mxu0
  %v3507 = vadd.f32 %v3361, %v3432
  %v3508 = vadd.f32 %v3362, %v3434
  %v3509 = vadd.f32 %v3363, %v3503
  %v3510 = vadd.f32 %v3364, %v3505
  %v3511 = vxor.u32 %v3507, 2147483648
  %v3512 = vmul.f32 %v3511, 1.442695
  %v3513 = vpow.pop %v3512
  %v3514 = vadd.f32 %v3513, 1.0
  %v3515 = vrcp.pop %v3514
  %v3516 = vmul.f32 1.0, %v3515
  %v3517 = vxor.u32 %v3508, 2147483648
  %v3518 = vmul.f32 %v3517, 1.442695
  %v3519 = vpow.pop %v3518
  %v3520 = vadd.f32 %v3519, 1.0
  %v3521 = vrcp.pop %v3520
  %v3522 = vmul.f32 1.0, %v3521
  %v3523 = vtanh.pop %v3509
  %v3524 = vxor.u32 %v3510, 2147483648
  %v3525 = vmul.f32 %v3524, 1.442695
  %v3526 = vpow.pop %v3525
  %v3527 = vadd.f32 %v3526, 1.0
  %v3528 = vrcp.pop %v3527
  %v3529 = vmul.f32 1.0, %v3528
  %v3530 = vmul.f32 %v3522, %v3178
  %v3531 = vmul.f32 %v3516, %v3523
  %v3532 = vadd.f32 %v3530, %v3531
  %v3533 = vtanh.pop %v3532
  %v3534 = vmul.f32 %v3529, %v3533
  %v3535 = vld [vmem:[#allocation3] sm:$0xff]
  %v3536 = vld [vmem:[#allocation3 + $0x8] sm:$0xff]
  %v3537 = vld [vmem:[#allocation3 + $0x10] sm:$0xff]
  %v3538 = vld [vmem:[#allocation3 + $0x18] sm:$0xff]
  %3539 = vmatprep.subr.mxu0 %v991
  %3540 = vmatpush1.msra.mxu0 %v990
  %3541 = vmatprep.subr.mxu0 %v995
  %3542 = vmatpush1.msra.mxu0 %v994
  %3543 = vmatprep.subr.mxu0 %v999
  %3544 = vmatpush1.msra.mxu0 %v998
  %3545 = vmatprep.subr.mxu0 %v1003
  %3546 = vmatpush1.msra.mxu0 %v1002
  %3547 = vmatprep.subr.mxu0 %v1007
  %3548 = vmatpush1.msra.mxu0 %v1006
  %3549 = vmatprep.subr.mxu0 %v1011
  %3550 = vmatpush1.msra.mxu0 %v1010
  %3551 = vmatprep.subr.mxu0 %v1015
  %3552 = vmatpush1.msra.mxu0 %v1014
  %3553 = vmatprep.subr.mxu0 %v1019
  %3554 = vmatpush1.msra.mxu0 %v1018
  %3555 = vmatprep.subr.mxu0 %v1023
  %3556 = vmatpush1.msra.mxu0 %v1022
  %3557 = vmatprep.subr.mxu0 %v1027
  %3558 = vmatpush1.msra.mxu0 %v1026
  %3559 = vmatprep.subr.mxu0 %v1031
  %3560 = vmatpush1.msra.mxu0 %v1030
  %3561 = vmatprep.subr.mxu0 %v1035
  %3562 = vmatpush1.msra.mxu0 %v1034
  %3563 = vmatprep.subr.mxu0 %v1039
  %3564 = vmatpush1.msra.mxu0 %v1038
  %3565 = vmatprep.subr.mxu0 %v1043
  %3566 = vmatpush1.msra.mxu0 %v1042
  %3567 = vmatprep.subr.mxu0 %v1047
  %3568 = vmatpush1.msra.mxu0 %v1046
  %3569 = vmatprep.subr.mxu0 %v1051
  %3570 = vmatpush1.msra.mxu0 %v1050
  %3571 = vmatprep.subr.mxu0 0.0
  %3572 = vmatpush1.msra.mxu0 0.0
  %3573 = vmatprep.subr.mxu0 0.0
  %3574 = vmatpush1.msra.mxu0 0.0
  %3575 = vmatprep.subr.mxu0 0.0
  %3576 = vmatpush1.msra.mxu0 0.0
  %3577 = vmatprep.subr.mxu0 0.0
  %3578 = vmatpush1.msra.mxu0 0.0
  %3579 = vmatprep.subr.mxu0 0.0
  %3580 = vmatpush1.msra.mxu0 0.0
  %3581 = vmatprep.subr.mxu0 0.0
  %3582 = vmatpush1.msra.mxu0 0.0
  %3583 = vmatprep.subr.mxu0 0.0
  %3584 = vmatpush1.msra.mxu0 0.0
  %3585 = vmatprep.subr.mxu0 0.0
  %3586 = vmatpush1.msra.mxu0 0.0
  %3587 = vmatprep.subr.mxu0 0.0
  %3588 = vmatpush1.msra.mxu0 0.0
  %3589 = vmatprep.subr.mxu0 0.0
  %3590 = vmatpush1.msra.mxu0 0.0
  %3591 = vmatprep.subr.mxu0 0.0
  %3592 = vmatpush1.msra.mxu0 0.0
  %3593 = vmatprep.subr.mxu0 0.0
  %3594 = vmatpush1.msra.mxu0 0.0
  %3595 = vmatprep.subr.mxu0 0.0
  %3596 = vmatpush1.msra.mxu0 0.0
  %3597 = vmatprep.subr.mxu0 0.0
  %3598 = vmatpush1.msra.mxu0 0.0
  %3599 = vmatprep.subr.mxu0 0.0
  %3600 = vmatpush1.msra.mxu0 0.0
  %3601 = vmatprep.subr.mxu0 0.0
  %3602 = vmatpush1.msra.mxu0 0.0
  %3603 = vmatprep.mubr.f32.mxu0 0.0
  %3604 = vmatmul.mubr.f32.gmra.mrb[0].mxu0 %v3355
  %v3605 = vpop.f32.mrb[0].mxu0
  %v3606 = vadd.f32 0.0, %v3605
  %v3607 = vpop.f32.mrb[0].mxu0
  %v3608 = vadd.f32 0.0, %v3607
  %3609 = vdwg.mxu0
  %3610 = vmatprep.subr.mxu0 %v993
  %3611 = vmatpush1.msra.mxu0 %v992
  %3612 = vmatprep.subr.mxu0 %v997
  %3613 = vmatpush1.msra.mxu0 %v996
  %3614 = vmatprep.subr.mxu0 %v1001
  %3615 = vmatpush1.msra.mxu0 %v1000
  %3616 = vmatprep.subr.mxu0 %v1005
  %3617 = vmatpush1.msra.mxu0 %v1004
  %3618 = vmatprep.subr.mxu0 %v1009
  %3619 = vmatpush1.msra.mxu0 %v1008
  %3620 = vmatprep.subr.mxu0 %v1013
  %3621 = vmatpush1.msra.mxu0 %v1012
  %3622 = vmatprep.subr.mxu0 %v1017
  %3623 = vmatpush1.msra.mxu0 %v1016
  %3624 = vmatprep.subr.mxu0 %v1021
  %3625 = vmatpush1.msra.mxu0 %v1020
  %3626 = vmatprep.subr.mxu0 %v1025
  %3627 = vmatpush1.msra.mxu0 %v1024
  %3628 = vmatprep.subr.mxu0 %v1029
  %3629 = vmatpush1.msra.mxu0 %v1028
  %3630 = vmatprep.subr.mxu0 %v1033
  %3631 = vmatpush1.msra.mxu0 %v1032
  %3632 = vmatprep.subr.mxu0 %v1037
  %3633 = vmatpush1.msra.mxu0 %v1036
  %3634 = vmatprep.subr.mxu0 %v1041
  %3635 = vmatpush1.msra.mxu0 %v1040
  %3636 = vmatprep.subr.mxu0 %v1045
  %3637 = vmatpush1.msra.mxu0 %v1044
  %3638 = vmatprep.subr.mxu0 %v1049
  %3639 = vmatpush1.msra.mxu0 %v1048
  %3640 = vmatprep.subr.mxu0 %v1053
  %3641 = vmatpush1.msra.mxu0 %v1052
  %3642 = vmatprep.subr.mxu0 0.0
  %3643 = vmatpush1.msra.mxu0 0.0
  %3644 = vmatprep.subr.mxu0 0.0
  %3645 = vmatpush1.msra.mxu0 0.0
  %3646 = vmatprep.subr.mxu0 0.0
  %3647 = vmatpush1.msra.mxu0 0.0
  %3648 = vmatprep.subr.mxu0 0.0
  %3649 = vmatpush1.msra.mxu0 0.0
  %3650 = vmatprep.subr.mxu0 0.0
  %3651 = vmatpush1.msra.mxu0 0.0
  %3652 = vmatprep.subr.mxu0 0.0
  %3653 = vmatpush1.msra.mxu0 0.0
  %3654 = vmatprep.subr.mxu0 0.0
  %3655 = vmatpush1.msra.mxu0 0.0
  %3656 = vmatprep.subr.mxu0 0.0
  %3657 = vmatpush1.msra.mxu0 0.0
  %3658 = vmatprep.subr.mxu0 0.0
  %3659 = vmatpush1.msra.mxu0 0.0
  %3660 = vmatprep.subr.mxu0 0.0
  %3661 = vmatpush1.msra.mxu0 0.0
  %3662 = vmatprep.subr.mxu0 0.0
  %3663 = vmatpush1.msra.mxu0 0.0
  %3664 = vmatprep.subr.mxu0 0.0
  %3665 = vmatpush1.msra.mxu0 0.0
  %3666 = vmatprep.subr.mxu0 0.0
  %3667 = vmatpush1.msra.mxu0 0.0
  %3668 = vmatprep.subr.mxu0 0.0
  %3669 = vmatpush1.msra.mxu0 0.0
  %3670 = vmatprep.subr.mxu0 0.0
  %3671 = vmatpush1.msra.mxu0 0.0
  %3672 = vmatprep.subr.mxu0 0.0
  %3673 = vmatpush1.msra.mxu0 0.0
  %3674 = vmatprep.mubr.f32.mxu0 0.0
  %3675 = vmatmul.mubr.f32.gmra.mrb[0].mxu0 %v3355
  %v3676 = vpop.f32.mrb[0].mxu0
  %v3677 = vadd.f32 0.0, %v3676
  %v3678 = vpop.f32.mrb[0].mxu0
  %v3679 = vadd.f32 0.0, %v3678
  %3680 = vdwg.mxu0
  %v3681 = vadd.f32 %v3535, %v3606
  %v3682 = vadd.f32 %v3536, %v3608
  %v3683 = vadd.f32 %v3537, %v3677
  %v3684 = vadd.f32 %v3538, %v3679
  %v3685 = vxor.u32 %v3681, 2147483648
  %v3686 = vmul.f32 %v3685, 1.442695
  %v3687 = vpow.pop %v3686
  %v3688 = vadd.f32 %v3687, 1.0
  %v3689 = vrcp.pop %v3688
  %v3690 = vmul.f32 1.0, %v3689
  %v3691 = vxor.u32 %v3682, 2147483648
  %v3692 = vmul.f32 %v3691, 1.442695
  %v3693 = vpow.pop %v3692
  %v3694 = vadd.f32 %v3693, 1.0
  %v3695 = vrcp.pop %v3694
  %v3696 = vmul.f32 1.0, %v3695
  %v3697 = vtanh.pop %v3683
  %v3698 = vxor.u32 %v3684, 2147483648
  %v3699 = vmul.f32 %v3698, 1.442695
  %v3700 = vpow.pop %v3699
  %v3701 = vadd.f32 %v3700, 1.0
  %v3702 = vrcp.pop %v3701
  %v3703 = vmul.f32 1.0, %v3702
  %v3704 = vmul.f32 %v3696, %v3353
  %v3705 = vmul.f32 %v3690, %v3697
  %v3706 = vadd.f32 %v3704, %v3705
  %v3707 = vtanh.pop %v3706
  %v3708 = vmul.f32 %v3703, %v3707
  %v3709 = vsel %vm1227, %v3534, 0.0
  %v3710 = vadd.f32 %v3357, %v3709
  %v3711 = vsel %vm1224, %v3708, 0.0
  %v3712 = vadd.f32 %v3359, %v3711
  %v3713 = vld [vmem:[%s6] sm:$0xff]
  %v3714 = vld [vmem:[%s6 + $0x8] sm:$0xff]
  %v3715 = vld [vmem:[%s6 + $0x10] sm:$0xff]
  %v3716 = vld [vmem:[%s6 + $0x18] sm:$0xff]
  %v3717 = vld [vmem:[%s6 + $0x20] sm:$0xff]
  %v3718 = vld [vmem:[%s6 + $0x28] sm:$0xff]
  %v3719 = vld [vmem:[%s6 + $0x30] sm:$0xff]
  %v3720 = vld [vmem:[%s6 + $0x38] sm:$0xff]
  %v3721 = vld [vmem:[%s6 + $0x40] sm:$0xff]
  %v3722 = vld [vmem:[%s6 + $0x48] sm:$0xff]
  %v3723 = vld [vmem:[%s6 + $0x50] sm:$0xff]
  %v3724 = vld [vmem:[%s6 + $0x58] sm:$0xff]
  %v3725 = vld [vmem:[%s6 + $0x60] sm:$0xff]
  %v3726 = vld [vmem:[%s6 + $0x68] sm:$0xff]
  %v3727 = vld [vmem:[%s6 + $0x70] sm:$0xff]
  %v3728 = vld [vmem:[%s6 + $0x78] sm:$0xff]
  %v3729 = vld [vmem:[%s7] sm:$0xff]
  %v3730 = vld [vmem:[%s7 + $0x8] sm:$0xff]
  %v3731 = vld [vmem:[%s7 + $0x10] sm:$0xff]
  %v3732 = vld [vmem:[%s7 + $0x18] sm:$0xff]
  %v3733 = vld [vmem:[%s7 + $0x20] sm:$0xff]
  %v3734 = vld [vmem:[%s7 + $0x28] sm:$0xff]
  %v3735 = vld [vmem:[%s7 + $0x30] sm:$0xff]
  %v3736 = vld [vmem:[%s7 + $0x38] sm:$0xff]
  %v3737 = vld [vmem:[%s7 + $0x40] sm:$0xff]
  %v3738 = vld [vmem:[%s7 + $0x48] sm:$0xff]
  %v3739 = vld [vmem:[%s7 + $0x50] sm:$0xff]
  %v3740 = vld [vmem:[%s7 + $0x58] sm:$0xff]
  %v3741 = vld [vmem:[%s7 + $0x60] sm:$0xff]
  %v3742 = vld [vmem:[%s7 + $0x68] sm:$0xff]
  %v3743 = vld [vmem:[%s7 + $0x70] sm:$0xff]
  %v3744 = vld [vmem:[%s7 + $0x78] sm:$0xff]
  %3745 = vmatprep.subr.mxu0 0.0
  %3746 = vmatpush1.msra.mxu0 %v3729
  %3747 = vmatprep.subr.mxu0 0.0
  %3748 = vmatpush1.msra.mxu0 %v3730
  %3749 = vmatprep.subr.mxu0 0.0
  %3750 = vmatpush1.msra.mxu0 %v3731
  %3751 = vmatprep.subr.mxu0 0.0
  %3752 = vmatpush1.msra.mxu0 %v3732
  %3753 = vmatprep.subr.mxu0 0.0
  %3754 = vmatpush1.msra.mxu0 %v3733
  %3755 = vmatprep.subr.mxu0 0.0
  %3756 = vmatpush1.msra.mxu0 %v3734
  %3757 = vmatprep.subr.mxu0 0.0
  %3758 = vmatpush1.msra.mxu0 %v3735
  %3759 = vmatprep.subr.mxu0 0.0
  %3760 = vmatpush1.msra.mxu0 %v3736
  %3761 = vmatprep.subr.mxu0 0.0
  %3762 = vmatpush1.msra.mxu0 %v3737
  %3763 = vmatprep.subr.mxu0 0.0
  %3764 = vmatpush1.msra.mxu0 %v3738
  %3765 = vmatprep.subr.mxu0 0.0
  %3766 = vmatpush1.msra.mxu0 %v3739
  %3767 = vmatprep.subr.mxu0 0.0
  %3768 = vmatpush1.msra.mxu0 %v3740
  %3769 = vmatprep.subr.mxu0 0.0
  %3770 = vmatpush1.msra.mxu0 %v3741
  %3771 = vmatprep.subr.mxu0 0.0
  %3772 = vmatpush1.msra.mxu0 %v3742
  %3773 = vmatprep.subr.mxu0 0.0
  %3774 = vmatpush1.msra.mxu0 %v3743
  %3775 = vmatprep.subr.mxu0 0.0
  %3776 = vmatpush1.msra.mxu0 %v3744
  %3777 = vmatprep.subr.mxu0 0.0
  %3778 = vmatpush1.msra.mxu0 0.0
  %3779 = vmatprep.subr.mxu0 0.0
  %3780 = vmatpush1.msra.mxu0 0.0
  %3781 = vmatprep.subr.mxu0 0.0
  %3782 = vmatpush1.msra.mxu0 0.0
  %3783 = vmatprep.subr.mxu0 0.0
  %3784 = vmatpush1.msra.mxu0 0.0
  %3785 = vmatprep.subr.mxu0 0.0
  %3786 = vmatpush1.msra.mxu0 0.0
  %3787 = vmatprep.subr.mxu0 0.0
  %3788 = vmatpush1.msra.mxu0 0.0
  %3789 = vmatprep.subr.mxu0 0.0
  %3790 = vmatpush1.msra.mxu0 0.0
  %3791 = vmatprep.subr.mxu0 0.0
  %3792 = vmatpush1.msra.mxu0 0.0
  %3793 = vmatprep.subr.mxu0 0.0
  %3794 = vmatpush1.msra.mxu0 0.0
  %3795 = vmatprep.subr.mxu0 0.0
  %3796 = vmatpush1.msra.mxu0 0.0
  %3797 = vmatprep.subr.mxu0 0.0
  %3798 = vmatpush1.msra.mxu0 0.0
  %3799 = vmatprep.subr.mxu0 0.0
  %3800 = vmatpush1.msra.mxu0 0.0
  %3801 = vmatprep.subr.mxu0 0.0
  %3802 = vmatpush1.msra.mxu0 0.0
  %3803 = vmatprep.subr.mxu0 0.0
  %3804 = vmatpush1.msra.mxu0 0.0
  %3805 = vmatprep.subr.mxu0 0.0
  %3806 = vmatpush1.msra.mxu0 0.0
  %3807 = vmatprep.subr.mxu0 0.0
  %3808 = vmatpush1.msra.mxu0 0.0
  %3809 = vmatprep.mubr.f32.mxu0 0.0
  %3810 = vmatmul.mubr.f32.gmra.mrb[0].mxu0 %v3712
  %v3811 = vpop.f32.mrb[0].mxu0
  %v3812 = vadd.f32 0.0, %v3811
  %v3813 = vpop.f32.mrb[0].mxu0
  %3814 = vdwg.mxu0
  %3815 = vmatprep.subr.mxu0 0.0
  %3816 = vmatpush1.msra.mxu0 %v3713
  %3817 = vmatprep.subr.mxu0 0.0
  %3818 = vmatpush1.msra.mxu0 %v3714
  %3819 = vmatprep.subr.mxu0 0.0
  %3820 = vmatpush1.msra.mxu0 %v3715
  %3821 = vmatprep.subr.mxu0 0.0
  %3822 = vmatpush1.msra.mxu0 %v3716
  %3823 = vmatprep.subr.mxu0 0.0
  %3824 = vmatpush1.msra.mxu0 %v3717
  %3825 = vmatprep.subr.mxu0 0.0
  %3826 = vmatpush1.msra.mxu0 %v3718
  %3827 = vmatprep.subr.mxu0 0.0
  %3828 = vmatpush1.msra.mxu0 %v3719
  %3829 = vmatprep.subr.mxu0 0.0
  %3830 = vmatpush1.msra.mxu0 %v3720
  %3831 = vmatprep.subr.mxu0 0.0
  %3832 = vmatpush1.msra.mxu0 %v3721
  %3833 = vmatprep.subr.mxu0 0.0
  %3834 = vmatpush1.msra.mxu0 %v3722
  %3835 = vmatprep.subr.mxu0 0.0
  %3836 = vmatpush1.msra.mxu0 %v3723
  %3837 = vmatprep.subr.mxu0 0.0
  %3838 = vmatpush1.msra.mxu0 %v3724
  %3839 = vmatprep.subr.mxu0 0.0
  %3840 = vmatpush1.msra.mxu0 %v3725
  %3841 = vmatprep.subr.mxu0 0.0
  %3842 = vmatpush1.msra.mxu0 %v3726
  %3843 = vmatprep.subr.mxu0 0.0
  %3844 = vmatpush1.msra.mxu0 %v3727
  %3845 = vmatprep.subr.mxu0 0.0
  %3846 = vmatpush1.msra.mxu0 %v3728
  %3847 = vmatprep.subr.mxu0 0.0
  %3848 = vmatpush1.msra.mxu0 0.0
  %3849 = vmatprep.subr.mxu0 0.0
  %3850 = vmatpush1.msra.mxu0 0.0
  %3851 = vmatprep.subr.mxu0 0.0
  %3852 = vmatpush1.msra.mxu0 0.0
  %3853 = vmatprep.subr.mxu0 0.0
  %3854 = vmatpush1.msra.mxu0 0.0
  %3855 = vmatprep.subr.mxu0 0.0
  %3856 = vmatpush1.msra.mxu0 0.0
  %3857 = vmatprep.subr.mxu0 0.0
  %3858 = vmatpush1.msra.mxu0 0.0
  %3859 = vmatprep.subr.mxu0 0.0
  %3860 = vmatpush1.msra.mxu0 0.0
  %3861 = vmatprep.subr.mxu0 0.0
  %3862 = vmatpush1.msra.mxu0 0.0
  %3863 = vmatprep.subr.mxu0 0.0
  %3864 = vmatpush1.msra.mxu0 0.0
  %3865 = vmatprep.subr.mxu0 0.0
  %3866 = vmatpush1.msra.mxu0 0.0
  %3867 = vmatprep.subr.mxu0 0.0
  %3868 = vmatpush1.msra.mxu0 0.0
  %3869 = vmatprep.subr.mxu0 0.0
  %3870 = vmatpush1.msra.mxu0 0.0
  %3871 = vmatprep.subr.mxu0 0.0
  %3872 = vmatpush1.msra.mxu0 0.0
  %3873 = vmatprep.subr.mxu0 0.0
  %3874 = vmatpush1.msra.mxu0 0.0
  %3875 = vmatprep.subr.mxu0 0.0
  %3876 = vmatpush1.msra.mxu0 0.0
  %3877 = vmatprep.subr.mxu0 0.0
  %3878 = vmatpush1.msra.mxu0 0.0
  %3879 = vmatprep.mubr.f32.mxu0 0.0
  %3880 = vmatmul.mubr.f32.gmra.mrb[0].mxu0 %v3710
  %v3881 = vpop.f32.mrb[0].mxu0
  %v3882 = vadd.f32 %v3812, %v3881
  %v3883 = vpop.f32.mrb[0].mxu0
  %3884 = vdwg.mxu0
  %v3885 = vld [vmem:[%s8] sm:$0x1]
  %v3887 = vlaneseq
  %v3888 = vshrl.u32 %v3887, 7
  %v3889 = vsub.s32 0, %v3888
  %v3890 = vrot.slane %v3885, %v3889
  %v3892 = vadd.f32 %v3882, %v3890
  %v3893 = vmax.f32 %v3892, 0.0
  %v3894 = vld [vmem:[%s9] sm:$0x1]
  %v3896 = vlaneseq
  %v3897 = vshrl.u32 %v3896, 7
  %v3898 = vsub.s32 0, %v3897
  %v3899 = vrot.slane %v3894, %v3898
  %v3901 = vmul.f32 %v3893, %v3899
  %v3902 = vld [vmem:[%s10] sm:$0x1]
  %v3904 = vlaneseq
  %v3905 = vshrl.u32 %v3904, 7
  %v3906 = vsub.s32 0, %v3905
  %v3907 = vrot.slane %v3902, %v3906
  %v3909 = vadd.f32 %v3901, %v3907
  %v3910 = vlaneseq
  %v3911 = vand.u32 %v3910, 127
  %vm3912 = vcmp.lt.s32.totalorder %v3911, 32
  %v3913 = vsel %vm3912, 1, 0
  %v3914 = vcvt.s32.f32 %v3913
  %v3915 = vmul.f32 %v3909, %v3914
  %3916 = vadd.xlane.f32.xlu0 %v3915
  %v3917 = vpop.xlane.xlu0 %3916
  %v3918 = vmul.f32 %v3917, 0.03125
  %v3919 = vsub.f32 %v3909, %v3918
  %v3920 = vmul.f32 %v3919, %v3914
  %v3921 = vmul.f32 %v3920, %v3920
  %3922 = vadd.xlane.f32.xlu0 %v3921
  %v3923 = vpop.xlane.xlu0 %3922
  %v3924 = vmul.f32 %v3923, 0.03125
  %v3925 = vadd.f32 %v3924, 1e-05
  %v3926 = vrsqrt.pop %v3925
  %v3927 = vmul.f32 %v3920, %v3926
  %v3928 = vld [vmem:[%s11] sm:$0x1]
  %v3930 = vlaneseq
  %v3931 = vshrl.u32 %v3930, 7
  %v3932 = vsub.s32 0, %v3931
  %v3933 = vrot.slane %v3928, %v3932
  %v3935 = vmul.f32 %v3927, %v3933
  %v3936 = vld [vmem:[%s12] sm:$0x1]
  %v3938 = vlaneseq
  %v3939 = vshrl.u32 %v3938, 7
  %v3940 = vsub.s32 0, %v3939
  %v3941 = vrot.slane %v3936, %v3940
  %v3943 = vadd.f32 %v3935, %v3941
  %v3944 = vld [vmem:[%s13] sm:$0xff]
  %v3945 = vld [vmem:[%s13 + $0x8] sm:$0xff]
  %v3946 = vld [vmem:[%s13 + $0x10] sm:$0xff]
  %v3947 = vld [vmem:[%s13 + $0x18] sm:$0xff]
  %v3948 = vld [vmem:[%s13 + $0x20] sm:$0xff]
  %v3949 = vld [vmem:[%s13 + $0x28] sm:$0xff]
  %v3950 = vld [vmem:[%s13 + $0x30] sm:$0xff]
  %v3951 = vld [vmem:[%s13 + $0x38] sm:$0xff]
  %v3952 = vld [vmem:[%s13 + $0x40] sm:$0xff]
  %v3953 = vld [vmem:[%s13 + $0x48] sm:$0xff]
  %v3954 = vld [vmem:[%s13 + $0x50] sm:$0xff]
  %v3955 = vld [vmem:[%s13 + $0x58] sm:$0xff]
  %v3956 = vld [vmem:[%s13 + $0x60] sm:$0xff]
  %v3957 = vld [vmem:[%s13 + $0x68] sm:$0xff]
  %v3958 = vld [vmem:[%s13 + $0x70] sm:$0xff]
  %v3959 = vld [vmem:[%s13 + $0x78] sm:$0xff]
  %v3960 = vld [vmem:[#allocation4] sm:$0x1]
  %v3962 = vlaneseq
  %v3963 = vshrl.u32 %v3962, 7
  %v3964 = vsub.s32 0, %v3963
  %v3965 = vrot.slane %v3960, %v3964
  %3967 = vmatprep.subr.mxu0 0.0
  %3968 = vmatpush1.msra.mxu0 %v3944
  %3969 = vmatprep.subr.mxu0 0.0
  %3970 = vmatpush1.msra.mxu0 %v3945
  %3971 = vmatprep.subr.mxu0 0.0
  %3972 = vmatpush1.msra.mxu0 %v3946
  %3973 = vmatprep.subr.mxu0 0.0
  %3974 = vmatpush1.msra.mxu0 %v3947
  %3975 = vmatprep.subr.mxu0 0.0
  %3976 = vmatpush1.msra.mxu0 %v3948
  %3977 = vmatprep.subr.mxu0 0.0
  %3978 = vmatpush1.msra.mxu0 %v3949
  %3979 = vmatprep.subr.mxu0 0.0
  %3980 = vmatpush1.msra.mxu0 %v3950
  %3981 = vmatprep.subr.mxu0 0.0
  %3982 = vmatpush1.msra.mxu0 %v3951
  %3983 = vmatprep.subr.mxu0 0.0
  %3984 = vmatpush1.msra.mxu0 %v3952
  %3985 = vmatprep.subr.mxu0 0.0
  %3986 = vmatpush1.msra.mxu0 %v3953
  %3987 = vmatprep.subr.mxu0 0.0
  %3988 = vmatpush1.msra.mxu0 %v3954
  %3989 = vmatprep.subr.mxu0 0.0
  %3990 = vmatpush1.msra.mxu0 %v3955
  %3991 = vmatprep.subr.mxu0 0.0
  %3992 = vmatpush1.msra.mxu0 %v3956
  %3993 = vmatprep.subr.mxu0 0.0
  %3994 = vmatpush1.msra.mxu0 %v3957
  %3995 = vmatprep.subr.mxu0 0.0
  %3996 = vmatpush1.msra.mxu0 %v3958
  %3997 = vmatprep.subr.mxu0 0.0
  %3998 = vmatpush1.msra.mxu0 %v3959
  %3999 = vmatprep.subr.mxu0 0.0
  %4000 = vmatpush1.msra.mxu0 0.0
  %4001 = vmatprep.subr.mxu0 0.0
  %4002 = vmatpush1.msra.mxu0 0.0
  %4003 = vmatprep.subr.mxu0 0.0
  %4004 = vmatpush1.msra.mxu0 0.0
  %4005 = vmatprep.subr.mxu0 0.0
  %4006 = vmatpush1.msra.mxu0 0.0
  %4007 = vmatprep.subr.mxu0 0.0
  %4008 = vmatpush1.msra.mxu0 0.0
  %4009 = vmatprep.subr.mxu0 0.0
  %4010 = vmatpush1.msra.mxu0 0.0
  %4011 = vmatprep.subr.mxu0 0.0
  %4012 = vmatpush1.msra.mxu0 0.0
  %4013 = vmatprep.subr.mxu0 0.0
  %4014 = vmatpush1.msra.mxu0 0.0
  %4015 = vmatprep.subr.mxu0 0.0
  %4016 = vmatpush1.msra.mxu0 0.0
  %4017 = vmatprep.subr.mxu0 0.0
  %4018 = vmatpush1.msra.mxu0 0.0
  %4019 = vmatprep.subr.mxu0 0.0
  %4020 = vmatpush1.msra.mxu0 0.0
  %4021 = vmatprep.subr.mxu0 0.0
  %4022 = vmatpush1.msra.mxu0 0.0
  %4023 = vmatprep.subr.mxu0 0.0
  %4024 = vmatpush1.msra.mxu0 0.0
  %4025 = vmatprep.subr.mxu0 0.0
  %4026 = vmatpush1.msra.mxu0 0.0
  %4027 = vmatprep.subr.mxu0 0.0
  %4028 = vmatpush1.msra.mxu0 0.0
  %4029 = vmatprep.subr.mxu0 0.0
  %4030 = vmatpush1.msra.mxu0 0.0
  %4031 = vmatprep.mubr.f32.mxu0 0.0
  %4032 = vmatmul.mubr.f32.gmra.mrb[0].mxu0 %v3943
  %v4033 = vpop.f32.mrb[0].mxu0
  %v4034 = vadd.f32 %v3965, %v4033
  %v4035 = vpop.f32.mrb[0].mxu0
  %4036 = vdwg.mxu0
  %vm4037 = vcmask 7168
  %4038 = vst.msk [vmem:[%s15] sm:$0xff] %vm4037, %v4034
  // Predicated region
  $region62: #{deepsets_lstm_forward.1} parent=0 // pred_check
    _
  $region63: #{deepsets_lstm_forward.1} parent=0 // pred_check_branch
    %4040 = sbr.rel (0) target = $region65
  $region64: #{deepsets_lstm_forward.1} parent=0 // pred_region
    _
  $region65: #{deepsets_lstm_forward.1} parent=0 // pred_fallthru
    _
  // Predicated region
  $region66: #{deepsets_lstm_forward.1} parent=0 // pred_check
    _
  $region67: #{deepsets_lstm_forward.1} parent=0 // pred_check_branch
    %4042 = sbr.rel (0) target = $region69
  $region68: #{deepsets_lstm_forward.1} parent=0 // pred_region
    _
  $region69: #{deepsets_lstm_forward.1} parent=0 // pred_fallthru
    _

</llo_original>
